<compile_context>
chip_gen: v7x
topology: tpu7x:2x2x1
jax: 0.10.0
libtpu: 0.0.40
codegen_flags: <defaults>
</compile_context>

<pallas_src>
import numpy as np
import jax
import jax.numpy as jnp
from jax.experimental import pallas as pl
from jax.experimental.pallas import tpu as pltpu

EPS = 1e-5
KS = 3  # kernel_size


# ----------------------------- in-kernel helpers -----------------------------

def _zero_border(pad_scr, H, W):
    """Zero only the 1-pixel spatial border of a (NB, H+2, W+2, C) scratch.

    Re-done every grid step (4 thin strips, cheap) so it stays correct when the
    batch grid is sharded across TensorCores (each core owns its own scratch)."""
    NB, _, _, C = pad_scr.shape
    dt = pad_scr.dtype
    pad_scr[:, 0:1, :, :] = jnp.zeros((NB, 1, W + 2, C), dt)
    pad_scr[:, H + 1:H + 2, :, :] = jnp.zeros((NB, 1, W + 2, C), dt)
    pad_scr[:, 1:H + 1, 0:1, :] = jnp.zeros((NB, H, 1, C), dt)
    pad_scr[:, 1:H + 1, W + 1:W + 2, :] = jnp.zeros((NB, H, 1, C), dt)


def _conv3x3_acc(pad_scr, w_ref):
    """3x3 SAME conv as 9 shifted-window (M,C)x(C,C) matmuls, f32 accumulate.

    No (M, 9C) im2col patch is materialized — that patch was the dominant VMEM
    consumer and saturated the store slot while the matmul itself was cheap."""
    NB, HP, WP, C = pad_scr.shape
    H, W = HP - 2, WP - 2
    M = NB * H * W
    acc = jnp.zeros((M, C), jnp.float32)
    for kh in range(KS):
        for kw in range(KS):
            tap = pad_scr[:, kh:kh + H, kw:kw + W, :].reshape(M, C)
            acc = acc + jnp.dot(tap, w_ref[kh * KS + kw],
                                preferred_element_type=jnp.float32)
    return acc                                                    # (M, C) f32


def _stats(acc):
    """Pack per-tile sum / sum-of-squares into one (1, 2, C) f32 output."""
    s = jnp.sum(acc, axis=0, keepdims=True)                       # (1, C)
    ss = jnp.sum(acc * acc, axis=0, keepdims=True)                # (1, C)
    return jnp.concatenate([s, ss], axis=0)[None]                 # (1, 2, C)


# --------------------------------- kernels ------------------------------------

def conv1_kernel(x_ref, w1_ref, y1_ref, stat1_ref, xpad_scr):
    NB, H, W, C = x_ref.shape
    _zero_border(xpad_scr, H, W)
    xpad_scr[:, 1:1 + H, 1:1 + W, :] = x_ref[...].astype(xpad_scr.dtype)
    acc = _conv3x3_acc(xpad_scr, w1_ref)
    y1_ref[...] = acc.reshape(NB, H, W, C).astype(y1_ref.dtype)   # bf16 out
    stat1_ref[...] = _stats(acc)


def bn1_conv2_kernel(y1_ref, sc1_ref, sh1_ref, w2_ref, y2_ref, stat2_ref, apad_scr):
    NB, H, W, C = y1_ref.shape
    M = NB * H * W
    # BN1 (precomputed scale/shift) + ReLU in f32 on a lane-dense (M, C) view.
    y = y1_ref[...].astype(jnp.float32).reshape(M, C)
    a = jnp.maximum(y * sc1_ref[...] + sh1_ref[...], 0.0)
    _zero_border(apad_scr, H, W)
    apad_scr[:, 1:1 + H, 1:1 + W, :] = a.reshape(NB, H, W, C).astype(apad_scr.dtype)
    acc = _conv3x3_acc(apad_scr, w2_ref)
    y2_ref[...] = acc.reshape(NB, H, W, C).astype(y2_ref.dtype)   # bf16 out
    stat2_ref[...] = _stats(acc)


def bn2_residual_kernel(y2_ref, sc2_ref, sh2_ref, x_ref, out_ref):
    NB, H, W, C = y2_ref.shape
    M = NB * H * W
    y = y2_ref[...].astype(jnp.float32).reshape(M, C)
    z = jnp.maximum(y * sc2_ref[...] + sh2_ref[...], 0.0)
    out_ref[...] = (z.reshape(NB, H, W, C)
                    + x_ref[...].astype(jnp.float32)).astype(out_ref.dtype)


# --------------------------------- wrapper -------------------------------------

def _vmem_budget_bytes():
    """~75% of this generation's VMEM (v7x: ~48 MiB, v5e/v6e: ~96 MiB)."""
    cap = 64 << 20  # conservative fallback = v7x per-TensorCore VMEM
    try:
        cap = int(getattr(pltpu.get_tpu_info(), "vmem_capacity_bytes", cap))
    except Exception:
        pass
    return max(16 << 20, (cap * 3) // 4)


def _pick_tile(N, fits, prefer_even_tiles=True):
    """Largest batch tile whose VMEM footprint fits; prefer an even tile count
    so v7x's two TensorCores (the only megacore axis here) stay balanced."""
    divs = [d for d in range(1, N + 1) if N % d == 0 and fits(d)]
    if not divs:
        return 1
    if prefer_even_tiles:
        even = [d for d in divs if (N // d) % 2 == 0]
        if even:
            return max(even)
    return max(divs)


def _bn_affine(stats, gamma, beta, count):
    """Fold train-mode BN (biased var) into per-channel scale/shift, f32."""
    s = jnp.sum(stats[:, 0, :], axis=0)
    ss = jnp.sum(stats[:, 1, :], axis=0)
    mean = s / count
    # TODO(synk): single-pass E[x^2]-E[x]^2 can cancel for large means; clamp >= 0.
    var = jnp.maximum(ss / count - mean * mean, 0.0)
    inv = jax.lax.rsqrt(var + EPS)
    scale = gamma * inv
    shift = beta - mean * scale
    C = s.shape[-1]
    return (scale.reshape(1, C).astype(jnp.float32),
            shift.reshape(1, C).astype(jnp.float32))


def residual_block(x, w1, g1, b1, w2, g2, b2, *, nb=None,
                   compute_dtype=jnp.bfloat16):
    """x: (N, H, W, C) f32; w*: HWIO (3, 3, C, C); g*/b*: (C,).  stride=1, pad=1."""
    N, H, W, C = x.shape
    cdt = np.dtype(compute_dtype).itemsize
    budget = _vmem_budget_bytes()

    # Per-tile VMEM footprints (double-buffered acts, weights, scratch, headroom).
    def conv_bytes(d):
        elems = d * H * W * C
        act_in = 4 * elems                        # f32 x (upper bound; y1 is bf16)
        act_out = cdt * elems                     # bf16 y
        pad = cdt * d * (H + 2) * (W + 2) * C     # padded scratch (compute_dtype)
        acc = 4 * elems                           # f32 accumulator (compiler temp)
        wts = cdt * KS * KS * C * C
        return 2 * (act_in + act_out) + 2 * wts + pad + acc + (4 << 20)

    def ew_bytes(d):                               # pass 3: pure elementwise
        elems = d * H * W * C
        return 2 * (cdt * elems + 4 * elems + 4 * elems) + (2 << 20)

    if nb is None:
        nb = _pick_tile(N, lambda d: conv_bytes(d) <= budget)
    assert N % nb == 0, "batch tile size must divide N"
    nb3 = _pick_tile(N, lambda d: ew_bytes(d) <= budget)

    n_tiles = N // nb
    m_total = float(N * H * W)

    # Weights as (9, Cin, Cout) so each tap is a leading-axis indexed (C, C) tile.
    w1r = w1.reshape(KS * KS, C, C).astype(compute_dtype)
    w2r = w2.reshape(KS * KS, C, C).astype(compute_dtype)

    act_spec = pl.BlockSpec((nb, H, W, C), lambda i: (i, 0, 0, 0))
    w_spec = pl.BlockSpec((KS * KS, C, C), lambda i: (0, 0, 0))
    vec_spec = pl.BlockSpec((1, C), lambda i: (0, 0))
    stat_spec = pl.BlockSpec((1, 2, C), lambda i: (i, 0, 0))

    pad_scratch = [pltpu.VMEM((nb, H + 2, W + 2, C), compute_dtype)]

    conv_params = pltpu.CompilerParams(
        dimension_semantics=("parallel",),            # shard batch tiles (v7x)
        vmem_limit_bytes=int(min(budget, max(32 << 20, conv_bytes(nb)))))

    y_shape = jax.ShapeDtypeStruct((N, H, W, C), compute_dtype)   # bf16 y1/y2
    stat_shape = jax.ShapeDtypeStruct((n_tiles, 2, C), jnp.float32)

    # ---- pass 1: conv1 + partial BN1 stats -----------------------------------
    y1, stat1 = pl.pallas_call(
        conv1_kernel,
        grid=(n_tiles,),
        in_specs=[act_spec, w_spec],
        out_specs=(act_spec, stat_spec),
        out_shape=(y_shape, stat_shape),
        scratch_shapes=pad_scratch,
        compiler_params=conv_params,
    )(x, w1r)

    scale1, shift1 = _bn_affine(stat1, g1, b1, m_total)

    # ---- pass 2: BN1 + ReLU + conv2 + partial BN2 stats -----------------------
    y2, stat2 = pl.pallas_call(
        bn1_conv2_kernel,
        grid=(n_tiles,),
        in_specs=[act_spec, vec_spec, vec_spec, w_spec],
        out_specs=(act_spec, stat_spec),
        out_shape=(y_shape, stat_shape),
        scratch_shapes=pad_scratch,
        compiler_params=conv_params,
    )(y1, scale1, shift1, w2r)

    scale2, shift2 = _bn_affine(stat2, g2, b2, m_total)

    # ---- pass 3: BN2 + ReLU + residual add (own, larger tile; no scratch) -----
    act_spec3 = pl.BlockSpec((nb3, H, W, C), lambda i: (i, 0, 0, 0))
    ew_params = pltpu.CompilerParams(
        dimension_semantics=("parallel",),
        vmem_limit_bytes=int(min(budget, max(32 << 20, ew_bytes(nb3)))))
    out = pl.pallas_call(
        bn2_residual_kernel,
        grid=(N // nb3,),
        in_specs=[act_spec3, vec_spec, vec_spec, act_spec3],
        out_specs=act_spec3,
        out_shape=jax.ShapeDtypeStruct((N, H, W, C), x.dtype),
        compiler_params=ew_params,
    )(y2, scale2, shift2, x)

    return out


# --------------------------------- references -----------------------------------

def _conv_ref(a, w, compute_dtype=None):
    if compute_dtype is not None:
        a = a.astype(compute_dtype)
        w = w.astype(compute_dtype)
    return jax.lax.conv_general_dilated(
        a, w, window_strides=(1, 1), padding=((1, 1), (1, 1)),
        dimension_numbers=('NHWC', 'HWIO', 'NHWC'),
        preferred_element_type=jnp.float32)


def ref_forward_f32(x, w1, g1, b1, w2, g2, b2):
    """Pure-f32 PyTorch-equivalent forward (train-mode BN)."""
    def bn_relu(y, g, b):
        mean = jnp.mean(y, axis=(0, 1, 2), keepdims=True)
        var = jnp.mean(y * y, axis=(0, 1, 2), keepdims=True) - mean * mean
        return jnp.maximum((y - mean) * jax.lax.rsqrt(var + EPS) * g + b, 0.0)
    a = bn_relu(_conv_ref(x, w1), g1, b1)
    z = bn_relu(_conv_ref(a, w2), g2, b2)
    return z + x


def ref_forward_matched(x, w1, g1, b1, w2, g2, b2, compute_dtype=jnp.bfloat16):
    """Reference that mirrors the kernel's precision choices: bf16 conv inputs /
    f32 accumulate, BN stats from the f32 conv output, bf16 inter-pass storage."""
    def bn_relu(y_f32, g, b):
        mean = jnp.mean(y_f32, axis=(0, 1, 2))
        var = jnp.maximum(jnp.mean(y_f32 * y_f32, axis=(0, 1, 2)) - mean * mean, 0.0)
        scale = g * jax.lax.rsqrt(var + EPS)
        shift = b - mean * scale
        y_q = y_f32.astype(compute_dtype).astype(jnp.float32)   # bf16 inter-pass
        return jnp.maximum(y_q * scale + shift, 0.0)
    a = bn_relu(_conv_ref(x, w1, compute_dtype), g1, b1)
    z = bn_relu(_conv_ref(a, w2, compute_dtype), g2, b2)
    return z + x


if __name__ == "__main__":
    N, H, W, C = 2, 16, 16, 4   # batch=2, spatial=16, channels=4 (in==out, stride=1)
    key = jax.random.PRNGKey(0)
    k_x, k_w1, k_w2 = jax.random.split(key, 3)

    x = jax.random.normal(k_x, (N, H, W, C), jnp.float32)
    w1 = jax.random.normal(k_w1, (KS, KS, C, C), jnp.float32) * 0.1
    w2 = jax.random.normal(k_w2, (KS, KS, C, C), jnp.float32) * 0.1
    # PyTorch BatchNorm2d default init: gamma = 1, beta = 0
    g1 = jnp.ones((C,), jnp.float32)
    b1 = jnp.zeros((C,), jnp.float32)
    g2 = jnp.ones((C,), jnp.float32)
    b2 = jnp.zeros((C,), jnp.float32)

    out = residual_block(x, w1, g1, b1, w2, g2, b2)
    out = jax.block_until_ready(out)
    assert out.shape == (N, H, W, C) and out.dtype == jnp.float32

    # Tight check vs. a reference with matching bf16 conv inputs / bf16 y1,y2 storage.
    ref_m = ref_forward_matched(x, w1, g1, b1, w2, g2, b2)
    err_m = float(jnp.max(jnp.abs(out - ref_m)))
    assert jnp.allclose(out, ref_m, rtol=5e-3, atol=5e-3), (
        f"matched ref max abs err = {err_m}")

    # Loose check vs. the full-f32 PyTorch-equivalent forward (bf16 rounding).
    ref_f = ref_forward_f32(x, w1, g1, b1, w2, g2, b2)
    err_f = float(jnp.max(jnp.abs(out - ref_f)))
    assert jnp.allclose(out, ref_f, rtol=1e-1, atol=1e-1), (
        f"f32 ref max abs err = {err_f}")

    print("KERNEL_OK")
</pallas_src>

<mosaic_0001>
module attributes {stable_mosaic.version = 11 : i64} {
  func.func @conv1_kernel(%arg0: i32, %arg1: memref<1x16x16x4xf32, #tpu.memory_space<vmem>>, %arg2: memref<9x4x4xbf16, #tpu.memory_space<vmem>>, %arg3: memref<1x16x16x4xbf16, #tpu.memory_space<vmem>>, %arg4: memref<1x2x4xf32, #tpu.memory_space<vmem>>, %arg5: memref<1x18x18x4xbf16, #tpu.memory_space<vmem>>) attributes {dimension_semantics = [#tpu.dimension_semantics<parallel>], iteration_bounds = array<i64: 2>, scalar_prefetch = 0 : i64, scratch_operands = 1 : i64, tpu.core_type = #tpu.core_type<tc>, window_params = [{transform_indices = @transform_0, window_bounds = array<i64: 1, 16, 16, 4>}, {pipeline_mode = #tpu.pipeline_mode<synchronous>, transform_indices = @transform_1, window_bounds = array<i64: 9, 4, 4>}, {transform_indices = @transform_2, window_bounds = array<i64: 1, 16, 16, 4>}, {transform_indices = @transform_3, window_bounds = array<i64: 1, 2, 4>}]} {
    %cst = arith.constant 0.000000e+00 : bf16
    %0 = vector.broadcast %cst : bf16 to vector<1x1x18x4xbf16>
    %c0 = arith.constant 0 : index
    %c0_0 = arith.constant 0 : index
    %c0_1 = arith.constant 0 : index
    %c0_2 = arith.constant 0 : index
    %1 = vector.load %arg5[%c0, %c0_0, %c0_1, %c0_2] : memref<1x18x18x4xbf16, #tpu.memory_space<vmem>>, vector<1x1x18x4xbf16>
    tpu.vector_store %arg5[%c0, %c0_0, %c0_1, %c0_2], %0 {strides = array<i32>} : memref<1x18x18x4xbf16, #tpu.memory_space<vmem>>, vector<1x1x18x4xbf16>,
    %cst_3 = arith.constant 0.000000e+00 : bf16
    %2 = vector.broadcast %cst_3 : bf16 to vector<1x1x18x4xbf16>
    %c0_4 = arith.constant 0 : index
    %c17 = arith.constant 17 : index
    %c0_5 = arith.constant 0 : index
    %c0_6 = arith.constant 0 : index
    %3 = vector.load %arg5[%c0_4, %c17, %c0_5, %c0_6] : memref<1x18x18x4xbf16, #tpu.memory_space<vmem>>, vector<1x1x18x4xbf16>
    tpu.vector_store %arg5[%c0_4, %c17, %c0_5, %c0_6], %2 {strides = array<i32>} : memref<1x18x18x4xbf16, #tpu.memory_space<vmem>>, vector<1x1x18x4xbf16>,
    %cst_7 = arith.constant 0.000000e+00 : bf16
    %4 = vector.broadcast %cst_7 : bf16 to vector<1x16x1x4xbf16>
    %c0_8 = arith.constant 0 : index
    %c1 = arith.constant 1 : index
    %c0_9 = arith.constant 0 : index
    %c0_10 = arith.constant 0 : index
    %5 = vector.load %arg5[%c0_8, %c1, %c0_9, %c0_10] : memref<1x18x18x4xbf16, #tpu.memory_space<vmem>>, vector<1x16x1x4xbf16>
    tpu.vector_store %arg5[%c0_8, %c1, %c0_9, %c0_10], %4 {strides = array<i32>} : memref<1x18x18x4xbf16, #tpu.memory_space<vmem>>, vector<1x16x1x4xbf16>,
    %cst_11 = arith.constant 0.000000e+00 : bf16
    %6 = vector.broadcast %cst_11 : bf16 to vector<1x16x1x4xbf16>
    %c0_12 = arith.constant 0 : index
    %c1_13 = arith.constant 1 : index
    %c17_14 = arith.constant 17 : index
    %c0_15 = arith.constant 0 : index
    %7 = vector.load %arg5[%c0_12, %c1_13, %c17_14, %c0_15] : memref<1x18x18x4xbf16, #tpu.memory_space<vmem>>, vector<1x16x1x4xbf16>
    tpu.vector_store %arg5[%c0_12, %c1_13, %c17_14, %c0_15], %6 {strides = array<i32>} : memref<1x18x18x4xbf16, #tpu.memory_space<vmem>>, vector<1x16x1x4xbf16>,
    %c0_16 = arith.constant 0 : index
    %c0_17 = arith.constant 0 : index
    %c0_18 = arith.constant 0 : index
    %c0_19 = arith.constant 0 : index
    %8 = vector.load %arg1[%c0_16, %c0_17, %c0_18, %c0_19] : memref<1x16x16x4xf32, #tpu.memory_space<vmem>>, vector<1x16x16x4xf32>
    %9 = arith.truncf %8 : vector<1x16x16x4xf32> to vector<1x16x16x4xbf16>
    %c0_20 = arith.constant 0 : index
    %c1_21 = arith.constant 1 : index
    %c1_22 = arith.constant 1 : index
    %c0_23 = arith.constant 0 : index
    %10 = vector.load %arg5[%c0_20, %c1_21, %c1_22, %c0_23] : memref<1x18x18x4xbf16, #tpu.memory_space<vmem>>, vector<1x16x16x4xbf16>
    tpu.vector_store %arg5[%c0_20, %c1_21, %c1_22, %c0_23], %9 {strides = array<i32>} : memref<1x18x18x4xbf16, #tpu.memory_space<vmem>>, vector<1x16x16x4xbf16>,
    %cst_24 = arith.constant 0.000000e+00 : f32
    %11 = vector.broadcast %cst_24 : f32 to vector<256x4xf32>
    %c0_25 = arith.constant 0 : index
    %c0_26 = arith.constant 0 : index
    %c0_27 = arith.constant 0 : index
    %c0_28 = arith.constant 0 : index
    %12 = vector.load %arg5[%c0_25, %c0_26, %c0_27, %c0_28] : memref<1x18x18x4xbf16, #tpu.memory_space<vmem>>, vector<1x16x16x4xbf16>
    %13 = vector.shape_cast %12 : vector<1x16x16x4xbf16> to vector<256x4xbf16>
    %c0_29 = arith.constant 0 : index
    %c0_30 = arith.constant 0 : index
    %c0_31 = arith.constant 0 : index
    %14 = vector.load %arg2[%c0_29, %c0_30, %c0_31] : memref<9x4x4xbf16, #tpu.memory_space<vmem>>, vector<1x4x4xbf16>
    %15 = vector.shape_cast %14 : vector<1x4x4xbf16> to vector<4x4xbf16>
    %cst_32 = arith.constant dense<0.000000e+00> : vector<256x4xf32>
    %16 = tpu.matmul %13, %15, %cst_32 {dimension_numbers = #tpu.dot_dimension_numbers<[1], [0], [0], [1], [0, 0, 1, 1], [], []>} : vector<256x4xbf16>, vector<4x4xbf16>, vector<256x4xf32> -> vector<256x4xf32>
    %17 = arith.addf %11, %16 : vector<256x4xf32>
    %c0_33 = arith.constant 0 : index
    %c0_34 = arith.constant 0 : index
    %c1_35 = arith.constant 1 : index
    %c0_36 = arith.constant 0 : index
    %18 = vector.load %arg5[%c0_33, %c0_34, %c1_35, %c0_36] : memref<1x18x18x4xbf16, #tpu.memory_space<vmem>>, vector<1x16x16x4xbf16>
    %19 = vector.shape_cast %18 : vector<1x16x16x4xbf16> to vector<256x4xbf16>
    %c1_37 = arith.constant 1 : index
    %c0_38 = arith.constant 0 : index
    %c0_39 = arith.constant 0 : index
    %20 = vector.load %arg2[%c1_37, %c0_38, %c0_39] : memref<9x4x4xbf16, #tpu.memory_space<vmem>>, vector<1x4x4xbf16>
    %21 = vector.shape_cast %20 : vector<1x4x4xbf16> to vector<4x4xbf16>
    %cst_40 = arith.constant dense<0.000000e+00> : vector<256x4xf32>
    %22 = tpu.matmul %19, %21, %cst_40 {dimension_numbers = #tpu.dot_dimension_numbers<[1], [0], [0], [1], [0, 0, 1, 1], [], []>} : vector<256x4xbf16>, vector<4x4xbf16>, vector<256x4xf32> -> vector<256x4xf32>
    %23 = arith.addf %17, %22 : vector<256x4xf32>
    %c0_41 = arith.constant 0 : index
    %c0_42 = arith.constant 0 : index
    %c2 = arith.constant 2 : index
    %c0_43 = arith.constant 0 : index
    %24 = vector.load %arg5[%c0_41, %c0_42, %c2, %c0_43] : memref<1x18x18x4xbf16, #tpu.memory_space<vmem>>, vector<1x16x16x4xbf16>
    %25 = vector.shape_cast %24 : vector<1x16x16x4xbf16> to vector<256x4xbf16>
    %c2_44 = arith.constant 2 : index
    %c0_45 = arith.constant 0 : index
    %c0_46 = arith.constant 0 : index
    %26 = vector.load %arg2[%c2_44, %c0_45, %c0_46] : memref<9x4x4xbf16, #tpu.memory_space<vmem>>, vector<1x4x4xbf16>
    %27 = vector.shape_cast %26 : vector<1x4x4xbf16> to vector<4x4xbf16>
    %cst_47 = arith.constant dense<0.000000e+00> : vector<256x4xf32>
    %28 = tpu.matmul %25, %27, %cst_47 {dimension_numbers = #tpu.dot_dimension_numbers<[1], [0], [0], [1], [0, 0, 1, 1], [], []>} : vector<256x4xbf16>, vector<4x4xbf16>, vector<256x4xf32> -> vector<256x4xf32>
    %29 = arith.addf %23, %28 : vector<256x4xf32>
    %c0_48 = arith.constant 0 : index
    %c1_49 = arith.constant 1 : index
    %c0_50 = arith.constant 0 : index
    %c0_51 = arith.constant 0 : index
    %30 = vector.load %arg5[%c0_48, %c1_49, %c0_50, %c0_51] : memref<1x18x18x4xbf16, #tpu.memory_space<vmem>>, vector<1x16x16x4xbf16>
    %31 = vector.shape_cast %30 : vector<1x16x16x4xbf16> to vector<256x4xbf16>
    %c3 = arith.constant 3 : index
    %c0_52 = arith.constant 0 : index
    %c0_53 = arith.constant 0 : index
    %32 = vector.load %arg2[%c3, %c0_52, %c0_53] : memref<9x4x4xbf16, #tpu.memory_space<vmem>>, vector<1x4x4xbf16>
    %33 = vector.shape_cast %32 : vector<1x4x4xbf16> to vector<4x4xbf16>
    %cst_54 = arith.constant dense<0.000000e+00> : vector<256x4xf32>
    %34 = tpu.matmul %31, %33, %cst_54 {dimension_numbers = #tpu.dot_dimension_numbers<[1], [0], [0], [1], [0, 0, 1, 1], [], []>} : vector<256x4xbf16>, vector<4x4xbf16>, vector<256x4xf32> -> vector<256x4xf32>
    %35 = arith.addf %29, %34 : vector<256x4xf32>
    %c0_55 = arith.constant 0 : index
    %c1_56 = arith.constant 1 : index
    %c1_57 = arith.constant 1 : index
    %c0_58 = arith.constant 0 : index
    %36 = vector.load %arg5[%c0_55, %c1_56, %c1_57, %c0_58] : memref<1x18x18x4xbf16, #tpu.memory_space<vmem>>, vector<1x16x16x4xbf16>
    %37 = vector.shape_cast %36 : vector<1x16x16x4xbf16> to vector<256x4xbf16>
    %c4 = arith.constant 4 : index
    %c0_59 = arith.constant 0 : index
    %c0_60 = arith.constant 0 : index
    %38 = vector.load %arg2[%c4, %c0_59, %c0_60] : memref<9x4x4xbf16, #tpu.memory_space<vmem>>, vector<1x4x4xbf16>
    %39 = vector.shape_cast %38 : vector<1x4x4xbf16> to vector<4x4xbf16>
    %cst_61 = arith.constant dense<0.000000e+00> : vector<256x4xf32>
    %40 = tpu.matmul %37, %39, %cst_61 {dimension_numbers = #tpu.dot_dimension_numbers<[1], [0], [0], [1], [0, 0, 1, 1], [], []>} : vector<256x4xbf16>, vector<4x4xbf16>, vector<256x4xf32> -> vector<256x4xf32>
    %41 = arith.addf %35, %40 : vector<256x4xf32>
    %c0_62 = arith.constant 0 : index
    %c1_63 = arith.constant 1 : index
    %c2_64 = arith.constant 2 : index
    %c0_65 = arith.constant 0 : index
    %42 = vector.load %arg5[%c0_62, %c1_63, %c2_64, %c0_65] : memref<1x18x18x4xbf16, #tpu.memory_space<vmem>>, vector<1x16x16x4xbf16>
    %43 = vector.shape_cast %42 : vector<1x16x16x4xbf16> to vector<256x4xbf16>
    %c5 = arith.constant 5 : index
    %c0_66 = arith.constant 0 : index
    %c0_67 = arith.constant 0 : index
    %44 = vector.load %arg2[%c5, %c0_66, %c0_67] : memref<9x4x4xbf16, #tpu.memory_space<vmem>>, vector<1x4x4xbf16>
    %45 = vector.shape_cast %44 : vector<1x4x4xbf16> to vector<4x4xbf16>
    %cst_68 = arith.constant dense<0.000000e+00> : vector<256x4xf32>
    %46 = tpu.matmul %43, %45, %cst_68 {dimension_numbers = #tpu.dot_dimension_numbers<[1], [0], [0], [1], [0, 0, 1, 1], [], []>} : vector<256x4xbf16>, vector<4x4xbf16>, vector<256x4xf32> -> vector<256x4xf32>
    %47 = arith.addf %41, %46 : vector<256x4xf32>
    %c0_69 = arith.constant 0 : index
    %c2_70 = arith.constant 2 : index
    %c0_71 = arith.constant 0 : index
    %c0_72 = arith.constant 0 : index
    %48 = vector.load %arg5[%c0_69, %c2_70, %c0_71, %c0_72] : memref<1x18x18x4xbf16, #tpu.memory_space<vmem>>, vector<1x16x16x4xbf16>
    %49 = vector.shape_cast %48 : vector<1x16x16x4xbf16> to vector<256x4xbf16>
    %c6 = arith.constant 6 : index
    %c0_73 = arith.constant 0 : index
    %c0_74 = arith.constant 0 : index
    %50 = vector.load %arg2[%c6, %c0_73, %c0_74] : memref<9x4x4xbf16, #tpu.memory_space<vmem>>, vector<1x4x4xbf16>
    %51 = vector.shape_cast %50 : vector<1x4x4xbf16> to vector<4x4xbf16>
    %cst_75 = arith.constant dense<0.000000e+00> : vector<256x4xf32>
    %52 = tpu.matmul %49, %51, %cst_75 {dimension_numbers = #tpu.dot_dimension_numbers<[1], [0], [0], [1], [0, 0, 1, 1], [], []>} : vector<256x4xbf16>, vector<4x4xbf16>, vector<256x4xf32> -> vector<256x4xf32>
    %53 = arith.addf %47, %52 : vector<256x4xf32>
    %c0_76 = arith.constant 0 : index
    %c2_77 = arith.constant 2 : index
    %c1_78 = arith.constant 1 : index
    %c0_79 = arith.constant 0 : index
    %54 = vector.load %arg5[%c0_76, %c2_77, %c1_78, %c0_79] : memref<1x18x18x4xbf16, #tpu.memory_space<vmem>>, vector<1x16x16x4xbf16>
    %55 = vector.shape_cast %54 : vector<1x16x16x4xbf16> to vector<256x4xbf16>
    %c7 = arith.constant 7 : index
    %c0_80 = arith.constant 0 : index
    %c0_81 = arith.constant 0 : index
    %56 = vector.load %arg2[%c7, %c0_80, %c0_81] : memref<9x4x4xbf16, #tpu.memory_space<vmem>>, vector<1x4x4xbf16>
    %57 = vector.shape_cast %56 : vector<1x4x4xbf16> to vector<4x4xbf16>
    %cst_82 = arith.constant dense<0.000000e+00> : vector<256x4xf32>
    %58 = tpu.matmul %55, %57, %cst_82 {dimension_numbers = #tpu.dot_dimension_numbers<[1], [0], [0], [1], [0, 0, 1, 1], [], []>} : vector<256x4xbf16>, vector<4x4xbf16>, vector<256x4xf32> -> vector<256x4xf32>
    %59 = arith.addf %53, %58 : vector<256x4xf32>
    %c0_83 = arith.constant 0 : index
    %c2_84 = arith.constant 2 : index
    %c2_85 = arith.constant 2 : index
    %c0_86 = arith.constant 0 : index
    %60 = vector.load %arg5[%c0_83, %c2_84, %c2_85, %c0_86] : memref<1x18x18x4xbf16, #tpu.memory_space<vmem>>, vector<1x16x16x4xbf16>
    %61 = vector.shape_cast %60 : vector<1x16x16x4xbf16> to vector<256x4xbf16>
    %c8 = arith.constant 8 : index
    %c0_87 = arith.constant 0 : index
    %c0_88 = arith.constant 0 : index
    %62 = vector.load %arg2[%c8, %c0_87, %c0_88] : memref<9x4x4xbf16, #tpu.memory_space<vmem>>, vector<1x4x4xbf16>
    %63 = vector.shape_cast %62 : vector<1x4x4xbf16> to vector<4x4xbf16>
    %cst_89 = arith.constant dense<0.000000e+00> : vector<256x4xf32>
    %64 = tpu.matmul %61, %63, %cst_89 {dimension_numbers = #tpu.dot_dimension_numbers<[1], [0], [0], [1], [0, 0, 1, 1], [], []>} : vector<256x4xbf16>, vector<4x4xbf16>, vector<256x4xf32> -> vector<256x4xf32>
    %65 = arith.addf %59, %64 : vector<256x4xf32>
    %66 = vector.shape_cast %65 : vector<256x4xf32> to vector<1x16x16x4xf32>
    %67 = arith.truncf %66 : vector<1x16x16x4xf32> to vector<1x16x16x4xbf16>
    %c0_90 = arith.constant 0 : index
    %c0_91 = arith.constant 0 : index
    %c0_92 = arith.constant 0 : index
    %c0_93 = arith.constant 0 : index
    %68 = vector.load %arg3[%c0_90, %c0_91, %c0_92, %c0_93] : memref<1x16x16x4xbf16, #tpu.memory_space<vmem>>, vector<1x16x16x4xbf16>
    tpu.vector_store %arg3[%c0_90, %c0_91, %c0_92, %c0_93], %67 {strides = array<i32>} : memref<1x16x16x4xbf16, #tpu.memory_space<vmem>>, vector<1x16x16x4xbf16>,
    %cst_94 = arith.constant dense<0.000000e+00> : vector<4xf32>
    %69 = vector.multi_reduction <add>, %65, %cst_94 [0] : vector<256x4xf32> to vector<4xf32>
    %70 = vector.shape_cast %69 : vector<4xf32> to vector<1x4xf32>
    %71 = arith.mulf %65, %65 : vector<256x4xf32>
    %cst_95 = arith.constant dense<0.000000e+00> : vector<4xf32>
    %72 = vector.multi_reduction <add>, %71, %cst_95 [0] : vector<256x4xf32> to vector<4xf32>
    %73 = vector.shape_cast %72 : vector<4xf32> to vector<1x4xf32>
    %74 = tpu.concatenate %70, %73 in 0 : vector<1x4xf32>, vector<1x4xf32> -> vector<2x4xf32>
    %75 = vector.shape_cast %74 : vector<2x4xf32> to vector<1x2x4xf32>
    %c0_96 = arith.constant 0 : index
    %c0_97 = arith.constant 0 : index
    %c0_98 = arith.constant 0 : index
    %76 = vector.load %arg4[%c0_96, %c0_97, %c0_98] : memref<1x2x4xf32, #tpu.memory_space<vmem>>, vector<1x2x4xf32>
    tpu.vector_store %arg4[%c0_96, %c0_97, %c0_98], %75 {strides = array<i32>} : memref<1x2x4xf32, #tpu.memory_space<vmem>>, vector<1x2x4xf32>,
    return
  }
  func.func @transform_0(%arg0: i32) -> (i32, i32, i32, i32) {
    %c0_i32 = arith.constant 0 : i32
    %c0_i32_0 = arith.constant 0 : i32
    %c0_i32_1 = arith.constant 0 : i32
    %c0_i32_2 = arith.constant 0 : i32
    return %arg0, %c0_i32, %c0_i32_0, %c0_i32_1 : i32, i32, i32, i32
  }
  func.func @transform_1(%arg0: i32) -> (i32, i32, i32) {
    %c0_i32 = arith.constant 0 : i32
    %c0_i32_0 = arith.constant 0 : i32
    %c0_i32_1 = arith.constant 0 : i32
    %c0_i32_2 = arith.constant 0 : i32
    return %c0_i32, %c0_i32_0, %c0_i32_1 : i32, i32, i32
  }
  func.func @transform_2(%arg0: i32) -> (i32, i32, i32, i32) {
    %c0_i32 = arith.constant 0 : i32
    %c0_i32_0 = arith.constant 0 : i32
    %c0_i32_1 = arith.constant 0 : i32
    %c0_i32_2 = arith.constant 0 : i32
    return %arg0, %c0_i32, %c0_i32_0, %c0_i32_1 : i32, i32, i32, i32
  }
  func.func @transform_3(%arg0: i32) -> (i32, i32, i32) {
    %c0_i32 = arith.constant 0 : i32
    %c0_i32_0 = arith.constant 0 : i32
    %c0_i32_1 = arith.constant 0 : i32
    return %arg0, %c0_i32, %c0_i32_0 : i32, i32, i32
  }
}

</mosaic_0001>

<llo_original>
// kernel: tpu_custom_call.1
$region0: #{tpu_custom_call.1}
  #allocation0 [shape = 'u32[]', space=smem, size = 0x4, offset = 0x4, fixed_abs, tag = 'smem constant byte address 0x4 - core index']
  #allocation1 [shape = 'u32[144,128]{1,0:T(1,128)}', space=vmem, size = 0x12000, scoped, tag = 'internal scratch']
  #allocation2 [shape = 'bf16[1,18,18,4]{3,2,1,0:T(8,128)(2,1)}', space=vmem, size = 0x1b000, scoped, tag = 'scratch operand']
  %s0 = inlined_call_operand.vmem [shape: f32[2,16,16,4], index: 0, kind: input, shape index: {}]
  %s1 = inlined_call_operand.vmem [shape: bf16[9,4,4], index: 1, kind: input, shape index: {}]
  %s2 = inlined_call_operand.vmem [shape: bf16[2,16,16,4], index: 2, kind: output, shape index: {0}]
  %s3 = inlined_call_operand.hbm [shape: f32[2,2,4], index: 3, kind: output, shape index: {1}]
  %4 = xla_tuple %s2, %s3
  %s5 = sld [smem:[#allocation0]]
  $region49: #{tpu_custom_call.1} parent=0
    _
  %s7 = ssub.s32 1, %s5
  %s8 = scalar_select 0, %s7, %s5
  $region1: #{tpu_custom_call.1} parent=0
    #allocation3 [shape = 'u8[2048]{0}', space=vmem, size = 0x800, scoped, tag = 'output window, operand 1']
    #allocation4 [shape = 's32[2]{0}', space=sflag, size = 0x8, scoped, tag = 'scoped memory for tpu_custom_call.1']
    %9 = vsyncpa [#allocation4], 0
    %s10 = scalar_lea.sflag [#allocation4], 1
    %11 = vsyncpa %s10, 0
    loop: start=0, step=1, limit=4
    $region2: #{tpu_custom_call.1} parent=1 // loop_pre_header
      _
    $region3: #{tpu_custom_call.1} parent=1 // loop_header
      %s13 = sphi 0, %s17
      %p14 = scmp.ge.s32.totalorder %s13, 4
      %s23 = sphi 0, %s25
      %s26 = sphi 0, %s23
      %s27 = sphi 0, %s26
      %s43 = sphi 0, %s27
      %s47 = sphi 0, %s47
      %s49 = sphi 0, %s47
      %s50 = sphi 0, %s49
      %s64 = sphi 0, %s50
      %s70 = sphi 0, %s72
      %s73 = sphi 0, %s70
      %s74 = sphi 0, %s73
      %s90 = sphi 0, %s74
      %s96 = sphi 0, %s98
      %s99 = sphi 0, %s96
      %s100 = sphi 0, %s99
      %s116 = sphi 0, %s100
    $region4: #{tpu_custom_call.1} parent=1 // loop_header_branch
      %16 = sbr.rel (%p14) target = $region8
    $region5: #{tpu_custom_call.1} parent=1 // loop_body
      %s18 = ssub.s32 %s13, 1
      %s19 = ssub.s32 %s13, 2
      %s20 = sadd.s32 %s13, 1
      %s21 = ssub.s32 %s13, %s20
      %p22 = scmp.eq.s32.totalorder %s21, 0
      %s24 = sadd.s32 %s23, 1
      %s25 = scalar_select %p22, %s23, %s24
      %p28 = pneg %p22
      %p29 = scmp.eq.s32.totalorder %s13, 1
      %p30 = por %p28, %p29
      %p31 = scmp.ne.s32.totalorder %s23, %s26
      %p32 = scmp.eq.s32.totalorder %s13, 0
      %p33 = por %p31, %p32
      %p34 = scmp.ne.s32.totalorder %s23, %s26
      %p35 = scmp.eq.s32.totalorder %s18, 1
      %p36 = por %p34, %p35
      %p37 = scmp.ne.s32.totalorder %s26, %s27
      %p38 = scmp.eq.s32.totalorder %s18, 0
      %p39 = por %p37, %p38
      %p40 = scmp.ne.s32.totalorder %s26, %s27
      %p41 = scmp.eq.s32.totalorder %s19, 1
      %p42 = por %p40, %p41
      %p44 = scmp.ne.s32.totalorder %s27, %s43
      %p45 = scmp.eq.s32.totalorder %s19, 0
      %p46 = por %p44, %p45
      %s48 = sadd.s32 %s47, 1
      %p51 = scmp.eq.s32.totalorder %s13, 1
      %p52 = scmp.ne.s32.totalorder %s47, %s49
      %p53 = scmp.eq.s32.totalorder %s13, 0
      %p54 = por %p52, %p53
      %p55 = scmp.ne.s32.totalorder %s47, %s49
      %p56 = scmp.eq.s32.totalorder %s18, 1
      %p57 = por %p55, %p56
      %p58 = scmp.ne.s32.totalorder %s49, %s50
      %p59 = scmp.eq.s32.totalorder %s18, 0
      %p60 = por %p58, %p59
      %p61 = scmp.ne.s32.totalorder %s49, %s50
      %p62 = scmp.eq.s32.totalorder %s19, 1
      %p63 = por %p61, %p62
      %p65 = scmp.ne.s32.totalorder %s50, %s64
      %p66 = scmp.eq.s32.totalorder %s19, 0
      %p67 = por %p65, %p66
      %s68 = ssub.s32 %s13, %s20
      %p69 = scmp.eq.s32.totalorder %s68, 0
      %s71 = sadd.s32 %s70, 1
      %s72 = scalar_select %p69, %s70, %s71
      %p75 = pneg %p69
      %p76 = scmp.eq.s32.totalorder %s13, 1
      %p77 = por %p75, %p76
      %p78 = scmp.ne.s32.totalorder %s70, %s73
      %p79 = scmp.eq.s32.totalorder %s13, 0
      %p80 = por %p78, %p79
      %p81 = scmp.ne.s32.totalorder %s70, %s73
      %p82 = scmp.eq.s32.totalorder %s18, 1
      %p83 = por %p81, %p82
      %p84 = scmp.ne.s32.totalorder %s73, %s74
      %p85 = scmp.eq.s32.totalorder %s18, 0
      %p86 = por %p84, %p85
      %p87 = scmp.ne.s32.totalorder %s73, %s74
      %p88 = scmp.eq.s32.totalorder %s19, 1
      %p89 = por %p87, %p88
      %p91 = scmp.ne.s32.totalorder %s74, %s90
      %p92 = scmp.eq.s32.totalorder %s19, 0
      %p93 = por %p91, %p92
      %s94 = ssub.s32 %s13, %s20
      %p95 = scmp.eq.s32.totalorder %s94, 0
      %s97 = sadd.s32 %s96, 1
      %s98 = scalar_select %p95, %s96, %s97
      %p101 = pneg %p95
      %p102 = scmp.eq.s32.totalorder %s13, 1
      %p103 = por %p101, %p102
      %p104 = scmp.ne.s32.totalorder %s96, %s99
      %p105 = scmp.eq.s32.totalorder %s13, 0
      %p106 = por %p104, %p105
      %p107 = scmp.ne.s32.totalorder %s96, %s99
      %p108 = scmp.eq.s32.totalorder %s18, 1
      %p109 = por %p107, %p108
      %p110 = scmp.ne.s32.totalorder %s99, %s100
      %p111 = scmp.eq.s32.totalorder %s18, 0
      %p112 = por %p110, %p111
      %p113 = scmp.ne.s32.totalorder %s99, %s100
      %p114 = scmp.eq.s32.totalorder %s19, 1
      %p115 = por %p113, %p114
      %p117 = scmp.ne.s32.totalorder %s100, %s116
      %p118 = scmp.eq.s32.totalorder %s19, 0
      %p119 = por %p117, %p118
      %p120 = scmp.le.s32.totalorder 1, %s13
      %p121 = scmp.lt.s32.totalorder %s13, 3
      %p122 = pnand %p120, %p121
      %p123 = pneg %p122
      // Predicated region
      $region9: #{tpu_custom_call.1} parent=5 // pred_check
        _
      $region10: #{tpu_custom_call.1} parent=5 // pred_check_branch
        %125 = sbr.rel (%p122) target = $region12
      $region11: #{tpu_custom_call.1} parent=5 // pred_region
        %s126 = ssub.s32 %s13, 1
        // Predicated region
        $region13: #{tpu_custom_call.1} parent=11 // pred_check
          %p127 = pneg %p60
        $region14: #{tpu_custom_call.1} parent=11 // pred_check_branch
          %129 = sbr.rel (%p127) target = $region16
        $region15: #{tpu_custom_call.1} parent=11 // pred_region
          _
        $region16: #{tpu_custom_call.1} parent=11 // pred_fallthru
          _
      $region12: #{tpu_custom_call.1} parent=5 // pred_fallthru
        _
      %p130 = scmp.lt.s32.totalorder %s13, 2
      // Predicated region
      $region17: #{tpu_custom_call.1} parent=5 // pred_check
        %p131 = pneg %p130
      $region18: #{tpu_custom_call.1} parent=5 // pred_check_branch
        %133 = sbr.rel (%p131) target = $region20
      $region19: #{tpu_custom_call.1} parent=5 // pred_region
        // Predicated region
        $region21: #{tpu_custom_call.1} parent=19 // pred_check
          %p134 = pneg %p33
        $region22: #{tpu_custom_call.1} parent=19 // pred_check_branch
          %136 = sbr.rel (%p134) target = $region24
        $region23: #{tpu_custom_call.1} parent=19 // pred_region
          %p137 = scmp.lt.s32.totalorder %s13, 1
          %s138 = scalar_select %p137, %s13, 1
          %s139 = smul.addr %s138, 32
          %s140 = smul.addr %s139, 8
          %s141 = scalar_lea.vmem %s0, %s140
        $region24: #{tpu_custom_call.1} parent=19 // pred_fallthru
          _
      $region20: #{tpu_custom_call.1} parent=5 // pred_fallthru
        _
      %p142 = scmp.le.s32.totalorder 1, %s13
      %p143 = scmp.lt.s32.totalorder %s13, 3
      %p144 = pnand %p142, %p143
      %p145 = pneg %p144
      // Predicated region
      $region25: #{tpu_custom_call.1} parent=5 // pred_check
        _
      $region26: #{tpu_custom_call.1} parent=5 // pred_check_branch
        %147 = sbr.rel (%p144) target = $region28
      $region27: #{tpu_custom_call.1} parent=5 // pred_region
        %s148 = ssub.s32 %s13, 1
        %p149 = scmp.lt.s32.totalorder %s18, 1
        %s150 = scalar_select %p149, %s18, 1
        %s151 = smul.addr %s150, 32
        %s152 = smul.addr %s151, 8
        %s153 = scalar_lea.vmem %s0, %s152
        %p154 = pneg %p39
        %p155 = pneg %p36
        %p156 = pneg %p60
        %p157 = pneg %p57
        %p158 = pneg %p86
        %p159 = pneg %p83
        %p160 = scmp.lt.s32.totalorder %s18, 1
        %s161 = scalar_select %p160, %s18, 1
        %s162 = smul.addr %s161, 32
        %s163 = smul.addr %s162, 4
        %s164 = scalar_lea.vmem %s2, %s163
        %p165 = pneg %p112
        %p166 = pneg %p109
        %s167 = sand.u32 %s99, 1
        %s168 = scalar_lea.sflag [#allocation4], %s167
        %s169 = sand.u32 %s99, 1
        %s170 = smul.addr %s169, 2
        %s171 = scalar_lea.vmem [#allocation3], %s170
        %p172 = scmp.lt.s32.totalorder %s18, 1
        %s173 = scalar_select %p172, %s18, 1
        %s174 = smul.addr %s173, 32
        %s175 = smul.addr %s174, 8
        %s176 = scalar_lea.vmem %s0, %s175
        %p177 = scmp.lt.s32.totalorder %s18, 1
        %s178 = scalar_select %p177, %s18, 1
        %s179 = smul.addr %s178, 32
        %s180 = smul.addr %s179, 4
        %s181 = scalar_lea.vmem %s2, %s180
        %vm183 = vcmask 27648
        %184 = vst.msk [vmem:[#allocation2] sm:$0xf] %vm183, 0
        %185 = vst.msk [vmem:[#allocation2 + $0x4] sm:$0xf] %vm183, 0
        %vm186 = vcmask 24576
        %187 = vst.msk [vmem:[#allocation2 + $0x8] sm:$0x1] %vm186, 0
        %s188 = scalar_lea.vmem [#allocation2], 204
        %189 = vst.msk [vmem:[%s188] sm:$0xf] %vm183, 0
        %190 = vst.msk [vmem:[%s188 + $0x4] sm:$0xf] %vm183, 0
        %191 = vst.msk [vmem:[%s188 + $0x8] sm:$0x1] %vm186, 0
        %s192 = scalar_lea.vmem [#allocation2], 12
        %vm193 = vcmask 24576
        %vm194 = vsmask.f32 256
        %vm195 = vmand %vm193, %vm194
        %v196 = vld [vmem:[%s192] sm:$0x1]
        %v197 = vsel %vm195, 0, %v196
        %198 = vst [vmem:[%s192] sm:$0x1] %v197
        %v199 = vld [vmem:[%s192 + $0xc] sm:$0x1]
        %v200 = vsel %vm195, 0, %v199
        %201 = vst [vmem:[%s192 + $0xc] sm:$0x1] %v200
        %v202 = vld [vmem:[%s192 + $0x18] sm:$0x1]
        %v203 = vsel %vm195, 0, %v202
        %204 = vst [vmem:[%s192 + $0x18] sm:$0x1] %v203
        %v205 = vld [vmem:[%s192 + $0x24] sm:$0x1]
        %v206 = vsel %vm195, 0, %v205
        %207 = vst [vmem:[%s192 + $0x24] sm:$0x1] %v206
        %v208 = vld [vmem:[%s192 + $0x30] sm:$0x1]
        %v209 = vsel %vm195, 0, %v208
        %210 = vst [vmem:[%s192 + $0x30] sm:$0x1] %v209
        %v211 = vld [vmem:[%s192 + $0x3c] sm:$0x1]
        %v212 = vsel %vm195, 0, %v211
        %213 = vst [vmem:[%s192 + $0x3c] sm:$0x1] %v212
        %v214 = vld [vmem:[%s192 + $0x48] sm:$0x1]
        %v215 = vsel %vm195, 0, %v214
        %216 = vst [vmem:[%s192 + $0x48] sm:$0x1] %v215
        %v217 = vld [vmem:[%s192 + $0x54] sm:$0x1]
        %v218 = vsel %vm195, 0, %v217
        %219 = vst [vmem:[%s192 + $0x54] sm:$0x1] %v218
        %v220 = vld [vmem:[%s192 + $0x60] sm:$0x1]
        %v221 = vsel %vm195, 0, %v220
        %222 = vst [vmem:[%s192 + $0x60] sm:$0x1] %v221
        %v223 = vld [vmem:[%s192 + $0x6c] sm:$0x1]
        %v224 = vsel %vm195, 0, %v223
        %225 = vst [vmem:[%s192 + $0x6c] sm:$0x1] %v224
        %v226 = vld [vmem:[%s192 + $0x78] sm:$0x1]
        %v227 = vsel %vm195, 0, %v226
        %228 = vst [vmem:[%s192 + $0x78] sm:$0x1] %v227
        %v229 = vld [vmem:[%s192 + $0x84] sm:$0x1]
        %v230 = vsel %vm195, 0, %v229
        %231 = vst [vmem:[%s192 + $0x84] sm:$0x1] %v230
        %v232 = vld [vmem:[%s192 + $0x90] sm:$0x1]
        %v233 = vsel %vm195, 0, %v232
        %234 = vst [vmem:[%s192 + $0x90] sm:$0x1] %v233
        %v235 = vld [vmem:[%s192 + $0x9c] sm:$0x1]
        %v236 = vsel %vm195, 0, %v235
        %237 = vst [vmem:[%s192 + $0x9c] sm:$0x1] %v236
        %v238 = vld [vmem:[%s192 + $0xa8] sm:$0x1]
        %v239 = vsel %vm195, 0, %v238
        %240 = vst [vmem:[%s192 + $0xa8] sm:$0x1] %v239
        %v241 = vld [vmem:[%s192 + $0xb4] sm:$0x1]
        %v242 = vsel %vm195, 0, %v241
        %243 = vst [vmem:[%s192 + $0xb4] sm:$0x1] %v242
        %vm244 = vsmask.f32 7938
        %vm245 = vmand %vm193, %vm244
        %v246 = vld [vmem:[%s192 + $0x8] sm:$0x1]
        %v247 = vsel %vm245, 0, %v246
        %248 = vst [vmem:[%s192 + $0x8] sm:$0x1] %v247
        %v249 = vld [vmem:[%s192 + $0x14] sm:$0x1]
        %v250 = vsel %vm245, 0, %v249
        %251 = vst [vmem:[%s192 + $0x14] sm:$0x1] %v250
        %v252 = vld [vmem:[%s192 + $0x20] sm:$0x1]
        %v253 = vsel %vm245, 0, %v252
        %254 = vst [vmem:[%s192 + $0x20] sm:$0x1] %v253
        %v255 = vld [vmem:[%s192 + $0x2c] sm:$0x1]
        %v256 = vsel %vm245, 0, %v255
        %257 = vst [vmem:[%s192 + $0x2c] sm:$0x1] %v256
        %v258 = vld [vmem:[%s192 + $0x38] sm:$0x1]
        %v259 = vsel %vm245, 0, %v258
        %260 = vst [vmem:[%s192 + $0x38] sm:$0x1] %v259
        %v261 = vld [vmem:[%s192 + $0x44] sm:$0x1]
        %v262 = vsel %vm245, 0, %v261
        %263 = vst [vmem:[%s192 + $0x44] sm:$0x1] %v262
        %v264 = vld [vmem:[%s192 + $0x50] sm:$0x1]
        %v265 = vsel %vm245, 0, %v264
        %266 = vst [vmem:[%s192 + $0x50] sm:$0x1] %v265
        %v267 = vld [vmem:[%s192 + $0x5c] sm:$0x1]
        %v268 = vsel %vm245, 0, %v267
        %269 = vst [vmem:[%s192 + $0x5c] sm:$0x1] %v268
        %v270 = vld [vmem:[%s192 + $0x68] sm:$0x1]
        %v271 = vsel %vm245, 0, %v270
        %272 = vst [vmem:[%s192 + $0x68] sm:$0x1] %v271
        %v273 = vld [vmem:[%s192 + $0x74] sm:$0x1]
        %v274 = vsel %vm245, 0, %v273
        %275 = vst [vmem:[%s192 + $0x74] sm:$0x1] %v274
        %v276 = vld [vmem:[%s192 + $0x80] sm:$0x1]
        %v277 = vsel %vm245, 0, %v276
        %278 = vst [vmem:[%s192 + $0x80] sm:$0x1] %v277
        %v279 = vld [vmem:[%s192 + $0x8c] sm:$0x1]
        %v280 = vsel %vm245, 0, %v279
        %281 = vst [vmem:[%s192 + $0x8c] sm:$0x1] %v280
        %v282 = vld [vmem:[%s192 + $0x98] sm:$0x1]
        %v283 = vsel %vm245, 0, %v282
        %284 = vst [vmem:[%s192 + $0x98] sm:$0x1] %v283
        %v285 = vld [vmem:[%s192 + $0xa4] sm:$0x1]
        %v286 = vsel %vm245, 0, %v285
        %287 = vst [vmem:[%s192 + $0xa4] sm:$0x1] %v286
        %v288 = vld [vmem:[%s192 + $0xb0] sm:$0x1]
        %v289 = vsel %vm245, 0, %v288
        %290 = vst [vmem:[%s192 + $0xb0] sm:$0x1] %v289
        %v291 = vld [vmem:[%s192 + $0xbc] sm:$0x1]
        %v292 = vsel %vm245, 0, %v291
        %293 = vst [vmem:[%s192 + $0xbc] sm:$0x1] %v292
        %v294 = vld [vmem:[%s176] sm:$0xff]
        %v295 = vld [vmem:[%s176 + $0x8] sm:$0xff]
        %v296 = vld [vmem:[%s176 + $0x10] sm:$0xff]
        %v297 = vld [vmem:[%s176 + $0x18] sm:$0xff]
        %v298 = vld [vmem:[%s176 + $0x20] sm:$0xff]
        %v299 = vld [vmem:[%s176 + $0x28] sm:$0xff]
        %v300 = vld [vmem:[%s176 + $0x30] sm:$0xff]
        %v301 = vld [vmem:[%s176 + $0x38] sm:$0xff]
        %v302 = vld [vmem:[%s176 + $0x40] sm:$0xff]
        %v303 = vld [vmem:[%s176 + $0x48] sm:$0xff]
        %v304 = vld [vmem:[%s176 + $0x50] sm:$0xff]
        %v305 = vld [vmem:[%s176 + $0x58] sm:$0xff]
        %v306 = vld [vmem:[%s176 + $0x60] sm:$0xff]
        %v307 = vld [vmem:[%s176 + $0x68] sm:$0xff]
        %v308 = vld [vmem:[%s176 + $0x70] sm:$0xff]
        %v309 = vld [vmem:[%s176 + $0x78] sm:$0xff]
        %v310 = vld [vmem:[%s176 + $0x80] sm:$0xff]
        %v311 = vld [vmem:[%s176 + $0x88] sm:$0xff]
        %v312 = vld [vmem:[%s176 + $0x90] sm:$0xff]
        %v313 = vld [vmem:[%s176 + $0x98] sm:$0xff]
        %v314 = vld [vmem:[%s176 + $0xa0] sm:$0xff]
        %v315 = vld [vmem:[%s176 + $0xa8] sm:$0xff]
        %v316 = vld [vmem:[%s176 + $0xb0] sm:$0xff]
        %v317 = vld [vmem:[%s176 + $0xb8] sm:$0xff]
        %v318 = vld [vmem:[%s176 + $0xc0] sm:$0xff]
        %v319 = vld [vmem:[%s176 + $0xc8] sm:$0xff]
        %v320 = vld [vmem:[%s176 + $0xd0] sm:$0xff]
        %v321 = vld [vmem:[%s176 + $0xd8] sm:$0xff]
        %v322 = vld [vmem:[%s176 + $0xe0] sm:$0xff]
        %v323 = vld [vmem:[%s176 + $0xe8] sm:$0xff]
        %v324 = vld [vmem:[%s176 + $0xf0] sm:$0xff]
        %v325 = vld [vmem:[%s176 + $0xf8] sm:$0xff]
        %v326 = vpack.c.bf16 %v295, %v294
        %v327 = vpack.c.bf16 %v297, %v296
        %v328 = vpack.c.bf16 %v299, %v298
        %v329 = vpack.c.bf16 %v301, %v300
        %v330 = vpack.c.bf16 %v303, %v302
        %v331 = vpack.c.bf16 %v305, %v304
        %v332 = vpack.c.bf16 %v307, %v306
        %v333 = vpack.c.bf16 %v309, %v308
        %v334 = vpack.c.bf16 %v311, %v310
        %v335 = vpack.c.bf16 %v313, %v312
        %v336 = vpack.c.bf16 %v315, %v314
        %v337 = vpack.c.bf16 %v317, %v316
        %v338 = vpack.c.bf16 %v319, %v318
        %v339 = vpack.c.bf16 %v321, %v320
        %v340 = vpack.c.bf16 %v323, %v322
        %v341 = vpack.c.bf16 %v325, %v324
        %v358 = vunpack.c.l.b16 %v326
        %v359 = vunpack.c.h.b16 %v326
        %v360 = vunpack.c.l.b16 %v327
        %v361 = vunpack.c.h.b16 %v327
        %v362 = vunpack.c.l.b16 %v328
        %v363 = vunpack.c.h.b16 %v328
        %v364 = vunpack.c.l.b16 %v329
        %v365 = vunpack.c.h.b16 %v329
        %v366 = vunpack.c.l.b16 %v330
        %v367 = vunpack.c.h.b16 %v330
        %v368 = vunpack.c.l.b16 %v331
        %v369 = vunpack.c.h.b16 %v331
        %v370 = vunpack.c.l.b16 %v332
        %v371 = vunpack.c.h.b16 %v332
        %v372 = vunpack.c.l.b16 %v333
        %v373 = vunpack.c.h.b16 %v333
        %v374 = vunpack.c.l.b16 %v334
        %v375 = vunpack.c.h.b16 %v334
        %v376 = vunpack.c.l.b16 %v335
        %v377 = vunpack.c.h.b16 %v335
        %v378 = vunpack.c.l.b16 %v336
        %v379 = vunpack.c.h.b16 %v336
        %v380 = vunpack.c.l.b16 %v337
        %v381 = vunpack.c.h.b16 %v337
        %v382 = vunpack.c.l.b16 %v338
        %v383 = vunpack.c.h.b16 %v338
        %v384 = vunpack.c.l.b16 %v339
        %v385 = vunpack.c.h.b16 %v339
        %v386 = vunpack.c.l.b16 %v340
        %v387 = vunpack.c.h.b16 %v340
        %v388 = vunpack.c.l.b16 %v341
        %v389 = vunpack.c.h.b16 %v341
        %v390 = vpack.c.b16 %v358, %v358
        %v391 = vpack.c.b16 %v359, %v359
        %v392 = vpack.c.b16 %v360, %v360
        %v393 = vpack.c.b16 %v361, %v361
        %v394 = vpack.c.b16 %v362, %v362
        %v395 = vpack.c.b16 %v363, %v363
        %v396 = vpack.c.b16 %v364, %v364
        %v397 = vpack.c.b16 %v365, %v365
        %v398 = vpack.c.b16 %v366, %v366
        %v399 = vpack.c.b16 %v367, %v367
        %v400 = vpack.c.b16 %v368, %v368
        %v401 = vpack.c.b16 %v369, %v369
        %v402 = vpack.c.b16 %v370, %v370
        %v403 = vpack.c.b16 %v371, %v371
        %v404 = vpack.c.b16 %v372, %v372
        %v405 = vpack.c.b16 %v373, %v373
        %v406 = vpack.c.b16 %v374, %v374
        %v407 = vpack.c.b16 %v375, %v375
        %v408 = vpack.c.b16 %v376, %v376
        %v409 = vpack.c.b16 %v377, %v377
        %v410 = vpack.c.b16 %v378, %v378
        %v411 = vpack.c.b16 %v379, %v379
        %v412 = vpack.c.b16 %v380, %v380
        %v413 = vpack.c.b16 %v381, %v381
        %v414 = vpack.c.b16 %v382, %v382
        %v415 = vpack.c.b16 %v383, %v383
        %v416 = vpack.c.b16 %v384, %v384
        %v417 = vpack.c.b16 %v385, %v385
        %v418 = vpack.c.b16 %v386, %v386
        %v419 = vpack.c.b16 %v387, %v387
        %v420 = vpack.c.b16 %v388, %v388
        %v421 = vpack.c.b16 %v389, %v389
        %vm422 = vsmask.f32 4368
        %vm423 = vmor %vm194, %vm422
        %v425 = vshrl.u32 %v390, 16
        %v427 = vrot.slane %v425, 7
        %v428 = vshll.u32 %v390, 16
        %v430 = vor.u32 %v427, %v428
        %v431 = vrot.slane %v427, 4
        %v433 = vshrl.u32 %v391, 16
        %v435 = vrot.slane %v433, 7
        %v436 = vshll.u32 %v391, 16
        %v438 = vor.u32 %v435, %v436
        %v439 = vsel %vm423, %v431, %v438
        %v440 = vrot.slane %v435, 4
        %v442 = vshrl.u32 %v392, 16
        %v444 = vrot.slane %v442, 7
        %v445 = vshll.u32 %v392, 16
        %v447 = vor.u32 %v444, %v445
        %v448 = vrot.slane %v444, 4
        %v450 = vshrl.u32 %v393, 16
        %v452 = vrot.slane %v450, 7
        %v453 = vshll.u32 %v393, 16
        %v455 = vor.u32 %v452, %v453
        %v456 = vsel %vm423, %v448, %v455
        %v457 = vrot.slane %v452, 4
        %v459 = vshrl.u32 %v394, 16
        %v461 = vrot.slane %v459, 7
        %v462 = vshll.u32 %v394, 16
        %v464 = vor.u32 %v461, %v462
        %v465 = vrot.slane %v461, 4
        %v467 = vshrl.u32 %v395, 16
        %v469 = vrot.slane %v467, 7
        %v470 = vshll.u32 %v395, 16
        %v472 = vor.u32 %v469, %v470
        %v473 = vsel %vm423, %v465, %v472
        %v474 = vrot.slane %v469, 4
        %v476 = vshrl.u32 %v396, 16
        %v478 = vrot.slane %v476, 7
        %v479 = vshll.u32 %v396, 16
        %v481 = vor.u32 %v478, %v479
        %v482 = vrot.slane %v478, 4
        %v484 = vshrl.u32 %v397, 16
        %v486 = vrot.slane %v484, 7
        %v487 = vshll.u32 %v397, 16
        %v489 = vor.u32 %v486, %v487
        %v490 = vsel %vm423, %v482, %v489
        %v491 = vrot.slane %v486, 4
        %v493 = vshrl.u32 %v398, 16
        %v495 = vrot.slane %v493, 7
        %v496 = vshll.u32 %v398, 16
        %v498 = vor.u32 %v495, %v496
        %v499 = vrot.slane %v495, 4
        %v501 = vshrl.u32 %v399, 16
        %v503 = vrot.slane %v501, 7
        %v504 = vshll.u32 %v399, 16
        %v506 = vor.u32 %v503, %v504
        %v507 = vsel %vm423, %v499, %v506
        %v508 = vrot.slane %v503, 4
        %v510 = vshrl.u32 %v400, 16
        %v512 = vrot.slane %v510, 7
        %v513 = vshll.u32 %v400, 16
        %v515 = vor.u32 %v512, %v513
        %v516 = vrot.slane %v512, 4
        %v518 = vshrl.u32 %v401, 16
        %v520 = vrot.slane %v518, 7
        %v521 = vshll.u32 %v401, 16
        %v523 = vor.u32 %v520, %v521
        %v524 = vsel %vm423, %v516, %v523
        %v525 = vrot.slane %v520, 4
        %v527 = vshrl.u32 %v402, 16
        %v529 = vrot.slane %v527, 7
        %v530 = vshll.u32 %v402, 16
        %v532 = vor.u32 %v529, %v530
        %v533 = vrot.slane %v529, 4
        %v535 = vshrl.u32 %v403, 16
        %v537 = vrot.slane %v535, 7
        %v538 = vshll.u32 %v403, 16
        %v540 = vor.u32 %v537, %v538
        %v541 = vsel %vm423, %v533, %v540
        %v542 = vrot.slane %v537, 4
        %v544 = vshrl.u32 %v404, 16
        %v546 = vrot.slane %v544, 7
        %v547 = vshll.u32 %v404, 16
        %v549 = vor.u32 %v546, %v547
        %v550 = vrot.slane %v546, 4
        %v552 = vshrl.u32 %v405, 16
        %v554 = vrot.slane %v552, 7
        %v555 = vshll.u32 %v405, 16
        %v557 = vor.u32 %v554, %v555
        %v558 = vsel %vm423, %v550, %v557
        %v559 = vrot.slane %v554, 4
        %v561 = vshrl.u32 %v406, 16
        %v563 = vrot.slane %v561, 7
        %v564 = vshll.u32 %v406, 16
        %v566 = vor.u32 %v563, %v564
        %v567 = vrot.slane %v563, 4
        %v569 = vshrl.u32 %v407, 16
        %v571 = vrot.slane %v569, 7
        %v572 = vshll.u32 %v407, 16
        %v574 = vor.u32 %v571, %v572
        %v575 = vsel %vm423, %v567, %v574
        %v576 = vrot.slane %v571, 4
        %v578 = vshrl.u32 %v408, 16
        %v580 = vrot.slane %v578, 7
        %v581 = vshll.u32 %v408, 16
        %v583 = vor.u32 %v580, %v581
        %v584 = vrot.slane %v580, 4
        %v586 = vshrl.u32 %v409, 16
        %v588 = vrot.slane %v586, 7
        %v589 = vshll.u32 %v409, 16
        %v591 = vor.u32 %v588, %v589
        %v592 = vsel %vm423, %v584, %v591
        %v593 = vrot.slane %v588, 4
        %v595 = vshrl.u32 %v410, 16
        %v597 = vrot.slane %v595, 7
        %v598 = vshll.u32 %v410, 16
        %v600 = vor.u32 %v597, %v598
        %v601 = vrot.slane %v597, 4
        %v603 = vshrl.u32 %v411, 16
        %v605 = vrot.slane %v603, 7
        %v606 = vshll.u32 %v411, 16
        %v608 = vor.u32 %v605, %v606
        %v609 = vsel %vm423, %v601, %v608
        %v610 = vrot.slane %v605, 4
        %v612 = vshrl.u32 %v412, 16
        %v614 = vrot.slane %v612, 7
        %v615 = vshll.u32 %v412, 16
        %v617 = vor.u32 %v614, %v615
        %v618 = vrot.slane %v614, 4
        %v620 = vshrl.u32 %v413, 16
        %v622 = vrot.slane %v620, 7
        %v623 = vshll.u32 %v413, 16
        %v625 = vor.u32 %v622, %v623
        %v626 = vsel %vm423, %v618, %v625
        %v627 = vrot.slane %v622, 4
        %v629 = vshrl.u32 %v414, 16
        %v631 = vrot.slane %v629, 7
        %v632 = vshll.u32 %v414, 16
        %v634 = vor.u32 %v631, %v632
        %v635 = vrot.slane %v631, 4
        %v637 = vshrl.u32 %v415, 16
        %v639 = vrot.slane %v637, 7
        %v640 = vshll.u32 %v415, 16
        %v642 = vor.u32 %v639, %v640
        %v643 = vsel %vm423, %v635, %v642
        %v644 = vrot.slane %v639, 4
        %v646 = vshrl.u32 %v416, 16
        %v648 = vrot.slane %v646, 7
        %v649 = vshll.u32 %v416, 16
        %v651 = vor.u32 %v648, %v649
        %v652 = vrot.slane %v648, 4
        %v654 = vshrl.u32 %v417, 16
        %v656 = vrot.slane %v654, 7
        %v657 = vshll.u32 %v417, 16
        %v659 = vor.u32 %v656, %v657
        %v660 = vsel %vm423, %v652, %v659
        %v661 = vrot.slane %v656, 4
        %v663 = vshrl.u32 %v418, 16
        %v665 = vrot.slane %v663, 7
        %v666 = vshll.u32 %v418, 16
        %v668 = vor.u32 %v665, %v666
        %v669 = vrot.slane %v665, 4
        %v671 = vshrl.u32 %v419, 16
        %v673 = vrot.slane %v671, 7
        %v674 = vshll.u32 %v419, 16
        %v676 = vor.u32 %v673, %v674
        %v677 = vsel %vm423, %v669, %v676
        %v678 = vrot.slane %v673, 4
        %v680 = vshrl.u32 %v420, 16
        %v682 = vrot.slane %v680, 7
        %v683 = vshll.u32 %v420, 16
        %v685 = vor.u32 %v682, %v683
        %v686 = vrot.slane %v682, 4
        %v688 = vshrl.u32 %v421, 16
        %v690 = vrot.slane %v688, 7
        %v691 = vshll.u32 %v421, 16
        %v693 = vor.u32 %v690, %v691
        %v694 = vsel %vm423, %v686, %v693
        %v695 = vrot.slane %v690, 4
        %vm744 = vcmask 27648
        %vm745 = vmand %vm744, %vm244
        %v746 = vld [vmem:[%s192] sm:$0xf]
        %v747 = vsel %vm745, %v430, %v746
        %748 = vst [vmem:[%s192] sm:$0xf] %v747
        %749 = vst.msk [vmem:[%s192 + $0x4] sm:$0xf] %vm183, %v439
        %v750 = vld [vmem:[%s192 + $0x8] sm:$0x1]
        %v751 = vsel %vm195, %v440, %v750
        %752 = vst [vmem:[%s192 + $0x8] sm:$0x1] %v751
        %v753 = vld [vmem:[%s192 + $0xc] sm:$0xf]
        %v754 = vsel %vm745, %v447, %v753
        %755 = vst [vmem:[%s192 + $0xc] sm:$0xf] %v754
        %756 = vst.msk [vmem:[%s192 + $0x10] sm:$0xf] %vm183, %v456
        %v757 = vld [vmem:[%s192 + $0x14] sm:$0x1]
        %v758 = vsel %vm195, %v457, %v757
        %759 = vst [vmem:[%s192 + $0x14] sm:$0x1] %v758
        %v760 = vld [vmem:[%s192 + $0x18] sm:$0xf]
        %v761 = vsel %vm745, %v464, %v760
        %762 = vst [vmem:[%s192 + $0x18] sm:$0xf] %v761
        %763 = vst.msk [vmem:[%s192 + $0x1c] sm:$0xf] %vm183, %v473
        %v764 = vld [vmem:[%s192 + $0x20] sm:$0x1]
        %v765 = vsel %vm195, %v474, %v764
        %766 = vst [vmem:[%s192 + $0x20] sm:$0x1] %v765
        %v767 = vld [vmem:[%s192 + $0x24] sm:$0xf]
        %v768 = vsel %vm745, %v481, %v767
        %769 = vst [vmem:[%s192 + $0x24] sm:$0xf] %v768
        %770 = vst.msk [vmem:[%s192 + $0x28] sm:$0xf] %vm183, %v490
        %v771 = vld [vmem:[%s192 + $0x2c] sm:$0x1]
        %v772 = vsel %vm195, %v491, %v771
        %773 = vst [vmem:[%s192 + $0x2c] sm:$0x1] %v772
        %v774 = vld [vmem:[%s192 + $0x30] sm:$0xf]
        %v775 = vsel %vm745, %v498, %v774
        %776 = vst [vmem:[%s192 + $0x30] sm:$0xf] %v775
        %777 = vst.msk [vmem:[%s192 + $0x34] sm:$0xf] %vm183, %v507
        %v778 = vld [vmem:[%s192 + $0x38] sm:$0x1]
        %v779 = vsel %vm195, %v508, %v778
        %780 = vst [vmem:[%s192 + $0x38] sm:$0x1] %v779
        %v781 = vld [vmem:[%s192 + $0x3c] sm:$0xf]
        %v782 = vsel %vm745, %v515, %v781
        %783 = vst [vmem:[%s192 + $0x3c] sm:$0xf] %v782
        %784 = vst.msk [vmem:[%s192 + $0x40] sm:$0xf] %vm183, %v524
        %v785 = vld [vmem:[%s192 + $0x44] sm:$0x1]
        %v786 = vsel %vm195, %v525, %v785
        %787 = vst [vmem:[%s192 + $0x44] sm:$0x1] %v786
        %v788 = vld [vmem:[%s192 + $0x48] sm:$0xf]
        %v789 = vsel %vm745, %v532, %v788
        %790 = vst [vmem:[%s192 + $0x48] sm:$0xf] %v789
        %791 = vst.msk [vmem:[%s192 + $0x4c] sm:$0xf] %vm183, %v541
        %v792 = vld [vmem:[%s192 + $0x50] sm:$0x1]
        %v793 = vsel %vm195, %v542, %v792
        %794 = vst [vmem:[%s192 + $0x50] sm:$0x1] %v793
        %v795 = vld [vmem:[%s192 + $0x54] sm:$0xf]
        %v796 = vsel %vm745, %v549, %v795
        %797 = vst [vmem:[%s192 + $0x54] sm:$0xf] %v796
        %798 = vst.msk [vmem:[%s192 + $0x58] sm:$0xf] %vm183, %v558
        %v799 = vld [vmem:[%s192 + $0x5c] sm:$0x1]
        %v800 = vsel %vm195, %v559, %v799
        %801 = vst [vmem:[%s192 + $0x5c] sm:$0x1] %v800
        %v802 = vld [vmem:[%s192 + $0x60] sm:$0xf]
        %v803 = vsel %vm745, %v566, %v802
        %804 = vst [vmem:[%s192 + $0x60] sm:$0xf] %v803
        %805 = vst.msk [vmem:[%s192 + $0x64] sm:$0xf] %vm183, %v575
        %v806 = vld [vmem:[%s192 + $0x68] sm:$0x1]
        %v807 = vsel %vm195, %v576, %v806
        %808 = vst [vmem:[%s192 + $0x68] sm:$0x1] %v807
        %v809 = vld [vmem:[%s192 + $0x6c] sm:$0xf]
        %v810 = vsel %vm745, %v583, %v809
        %811 = vst [vmem:[%s192 + $0x6c] sm:$0xf] %v810
        %812 = vst.msk [vmem:[%s192 + $0x70] sm:$0xf] %vm183, %v592
        %v813 = vld [vmem:[%s192 + $0x74] sm:$0x1]
        %v814 = vsel %vm195, %v593, %v813
        %815 = vst [vmem:[%s192 + $0x74] sm:$0x1] %v814
        %v816 = vld [vmem:[%s192 + $0x78] sm:$0xf]
        %v817 = vsel %vm745, %v600, %v816
        %818 = vst [vmem:[%s192 + $0x78] sm:$0xf] %v817
        %819 = vst.msk [vmem:[%s192 + $0x7c] sm:$0xf] %vm183, %v609
        %v820 = vld [vmem:[%s192 + $0x80] sm:$0x1]
        %v821 = vsel %vm195, %v610, %v820
        %822 = vst [vmem:[%s192 + $0x80] sm:$0x1] %v821
        %v823 = vld [vmem:[%s192 + $0x84] sm:$0xf]
        %v824 = vsel %vm745, %v617, %v823
        %825 = vst [vmem:[%s192 + $0x84] sm:$0xf] %v824
        %826 = vst.msk [vmem:[%s192 + $0x88] sm:$0xf] %vm183, %v626
        %v827 = vld [vmem:[%s192 + $0x8c] sm:$0x1]
        %v828 = vsel %vm195, %v627, %v827
        %829 = vst [vmem:[%s192 + $0x8c] sm:$0x1] %v828
        %v830 = vld [vmem:[%s192 + $0x90] sm:$0xf]
        %v831 = vsel %vm745, %v634, %v830
        %832 = vst [vmem:[%s192 + $0x90] sm:$0xf] %v831
        %833 = vst.msk [vmem:[%s192 + $0x94] sm:$0xf] %vm183, %v643
        %v834 = vld [vmem:[%s192 + $0x98] sm:$0x1]
        %v835 = vsel %vm195, %v644, %v834
        %836 = vst [vmem:[%s192 + $0x98] sm:$0x1] %v835
        %v837 = vld [vmem:[%s192 + $0x9c] sm:$0xf]
        %v838 = vsel %vm745, %v651, %v837
        %839 = vst [vmem:[%s192 + $0x9c] sm:$0xf] %v838
        %840 = vst.msk [vmem:[%s192 + $0xa0] sm:$0xf] %vm183, %v660
        %v841 = vld [vmem:[%s192 + $0xa4] sm:$0x1]
        %v842 = vsel %vm195, %v661, %v841
        %843 = vst [vmem:[%s192 + $0xa4] sm:$0x1] %v842
        %v844 = vld [vmem:[%s192 + $0xa8] sm:$0xf]
        %v845 = vsel %vm745, %v668, %v844
        %846 = vst [vmem:[%s192 + $0xa8] sm:$0xf] %v845
        %847 = vst.msk [vmem:[%s192 + $0xac] sm:$0xf] %vm183, %v677
        %v848 = vld [vmem:[%s192 + $0xb0] sm:$0x1]
        %v849 = vsel %vm195, %v678, %v848
        %850 = vst [vmem:[%s192 + $0xb0] sm:$0x1] %v849
        %v851 = vld [vmem:[%s192 + $0xb4] sm:$0xf]
        %v852 = vsel %vm745, %v685, %v851
        %853 = vst [vmem:[%s192 + $0xb4] sm:$0xf] %v852
        %854 = vst.msk [vmem:[%s192 + $0xb8] sm:$0xf] %vm183, %v694
        %v855 = vld [vmem:[%s192 + $0xbc] sm:$0x1]
        %v856 = vsel %vm195, %v695, %v855
        %857 = vst [vmem:[%s192 + $0xbc] sm:$0x1] %v856
        %v858 = vld [vmem:[#allocation2] sm:$0xf]
        %v859 = vld [vmem:[#allocation2 + $0x4] sm:$0xf]
        %v860 = vld [vmem:[#allocation2 + $0xc] sm:$0xf]
        %v861 = vld [vmem:[#allocation2 + $0x10] sm:$0xf]
        %v862 = vld [vmem:[#allocation2 + $0x18] sm:$0xf]
        %v863 = vld [vmem:[#allocation2 + $0x1c] sm:$0xf]
        %v864 = vld [vmem:[#allocation2 + $0x24] sm:$0xf]
        %v865 = vld [vmem:[#allocation2 + $0x28] sm:$0xf]
        %v866 = vld [vmem:[#allocation2 + $0x30] sm:$0xf]
        %v867 = vld [vmem:[#allocation2 + $0x34] sm:$0xf]
        %v868 = vld [vmem:[#allocation2 + $0x3c] sm:$0xf]
        %v869 = vld [vmem:[#allocation2 + $0x40] sm:$0xf]
        %v870 = vld [vmem:[#allocation2 + $0x48] sm:$0xf]
        %v871 = vld [vmem:[#allocation2 + $0x4c] sm:$0xf]
        %v872 = vld [vmem:[#allocation2 + $0x54] sm:$0xf]
        %v873 = vld [vmem:[#allocation2 + $0x58] sm:$0xf]
        %v874 = vld [vmem:[#allocation2 + $0x60] sm:$0xf]
        %v875 = vld [vmem:[#allocation2 + $0x64] sm:$0xf]
        %v876 = vld [vmem:[#allocation2 + $0x6c] sm:$0xf]
        %v877 = vld [vmem:[#allocation2 + $0x70] sm:$0xf]
        %v878 = vld [vmem:[#allocation2 + $0x78] sm:$0xf]
        %v879 = vld [vmem:[#allocation2 + $0x7c] sm:$0xf]
        %v880 = vld [vmem:[#allocation2 + $0x84] sm:$0xf]
        %v881 = vld [vmem:[#allocation2 + $0x88] sm:$0xf]
        %v882 = vld [vmem:[#allocation2 + $0x90] sm:$0xf]
        %v883 = vld [vmem:[#allocation2 + $0x94] sm:$0xf]
        %v884 = vld [vmem:[#allocation2 + $0x9c] sm:$0xf]
        %v885 = vld [vmem:[#allocation2 + $0xa0] sm:$0xf]
        %v886 = vld [vmem:[#allocation2 + $0xa8] sm:$0xf]
        %v887 = vld [vmem:[#allocation2 + $0xac] sm:$0xf]
        %v888 = vld [vmem:[#allocation2 + $0xb4] sm:$0xf]
        %v889 = vld [vmem:[#allocation2 + $0xb8] sm:$0xf]
        %v890 = vld [vmem:[%s1] sm:$0x3]
        %v891 = vld [vmem:[#allocation2 + $0x8] sm:$0x1]
        %v892 = vld [vmem:[#allocation2 + $0x14] sm:$0x1]
        %v893 = vld [vmem:[#allocation2 + $0x20] sm:$0x1]
        %v894 = vld [vmem:[#allocation2 + $0x2c] sm:$0x1]
        %v895 = vld [vmem:[#allocation2 + $0x38] sm:$0x1]
        %v896 = vld [vmem:[#allocation2 + $0x44] sm:$0x1]
        %v897 = vld [vmem:[#allocation2 + $0x50] sm:$0x1]
        %v898 = vld [vmem:[#allocation2 + $0x5c] sm:$0x1]
        %v899 = vld [vmem:[#allocation2 + $0x68] sm:$0x1]
        %v900 = vld [vmem:[#allocation2 + $0x74] sm:$0x1]
        %v901 = vld [vmem:[#allocation2 + $0x80] sm:$0x1]
        %v902 = vld [vmem:[#allocation2 + $0x8c] sm:$0x1]
        %v903 = vld [vmem:[#allocation2 + $0x98] sm:$0x1]
        %v904 = vld [vmem:[#allocation2 + $0xa4] sm:$0x1]
        %v905 = vld [vmem:[#allocation2 + $0xb0] sm:$0x1]
        %v906 = vld [vmem:[#allocation2 + $0xbc] sm:$0x1]
        %vm907 = vsmask.f32 3328
        %vm908 = vsmask.f32 7440
        %vm909 = vmor %vm907, %vm908
        %v911 = vshrl.u32 %v858, 16
        %v913 = vrot.slane %v911, 4
        %v914 = vshll.u32 %v858, 16
        %v916 = vrot.slane %v914, 5
        %v917 = vor.u32 %v913, %v916
        %v918 = vrot.slane %v917, 4
        %v920 = vshll.u32 %v859, 16
        %v922 = vrot.slane %v920, 5
        %v923 = vsel %vm909, %v918, %v922
        %v924 = vshrl.u32 %v859, 16
        %v926 = vrot.slane %v924, 4
        %v927 = vor.u32 %v926, %v922
        %v928 = vrot.slane %v927, 4
        %v930 = vshll.u32 %v891, 16
        %v932 = vrot.slane %v930, 5
        %v933 = vsel %vm909, %v928, %v932
        %v935 = vshrl.u32 %v860, 16
        %v937 = vrot.slane %v935, 4
        %v938 = vshll.u32 %v860, 16
        %v940 = vrot.slane %v938, 5
        %v941 = vor.u32 %v937, %v940
        %v942 = vrot.slane %v941, 4
        %v944 = vshll.u32 %v861, 16
        %v946 = vrot.slane %v944, 5
        %v947 = vsel %vm909, %v942, %v946
        %v948 = vshrl.u32 %v861, 16
        %v950 = vrot.slane %v948, 4
        %v951 = vor.u32 %v950, %v946
        %v952 = vrot.slane %v951, 4
        %v954 = vshll.u32 %v892, 16
        %v956 = vrot.slane %v954, 5
        %v957 = vsel %vm909, %v952, %v956
        %v959 = vshrl.u32 %v862, 16
        %v961 = vrot.slane %v959, 4
        %v962 = vshll.u32 %v862, 16
        %v964 = vrot.slane %v962, 5
        %v965 = vor.u32 %v961, %v964
        %v966 = vrot.slane %v965, 4
        %v968 = vshll.u32 %v863, 16
        %v970 = vrot.slane %v968, 5
        %v971 = vsel %vm909, %v966, %v970
        %v972 = vshrl.u32 %v863, 16
        %v974 = vrot.slane %v972, 4
        %v975 = vor.u32 %v974, %v970
        %v976 = vrot.slane %v975, 4
        %v978 = vshll.u32 %v893, 16
        %v980 = vrot.slane %v978, 5
        %v981 = vsel %vm909, %v976, %v980
        %v983 = vshrl.u32 %v864, 16
        %v985 = vrot.slane %v983, 4
        %v986 = vshll.u32 %v864, 16
        %v988 = vrot.slane %v986, 5
        %v989 = vor.u32 %v985, %v988
        %v990 = vrot.slane %v989, 4
        %v992 = vshll.u32 %v865, 16
        %v994 = vrot.slane %v992, 5
        %v995 = vsel %vm909, %v990, %v994
        %v996 = vshrl.u32 %v865, 16
        %v998 = vrot.slane %v996, 4
        %v999 = vor.u32 %v998, %v994
        %v1000 = vrot.slane %v999, 4
        %v1002 = vshll.u32 %v894, 16
        %v1004 = vrot.slane %v1002, 5
        %v1005 = vsel %vm909, %v1000, %v1004
        %v1007 = vshrl.u32 %v866, 16
        %v1009 = vrot.slane %v1007, 4
        %v1010 = vshll.u32 %v866, 16
        %v1012 = vrot.slane %v1010, 5
        %v1013 = vor.u32 %v1009, %v1012
        %v1014 = vrot.slane %v1013, 4
        %v1016 = vshll.u32 %v867, 16
        %v1018 = vrot.slane %v1016, 5
        %v1019 = vsel %vm909, %v1014, %v1018
        %v1020 = vshrl.u32 %v867, 16
        %v1022 = vrot.slane %v1020, 4
        %v1023 = vor.u32 %v1022, %v1018
        %v1024 = vrot.slane %v1023, 4
        %v1026 = vshll.u32 %v895, 16
        %v1028 = vrot.slane %v1026, 5
        %v1029 = vsel %vm909, %v1024, %v1028
        %v1031 = vshrl.u32 %v868, 16
        %v1033 = vrot.slane %v1031, 4
        %v1034 = vshll.u32 %v868, 16
        %v1036 = vrot.slane %v1034, 5
        %v1037 = vor.u32 %v1033, %v1036
        %v1038 = vrot.slane %v1037, 4
        %v1040 = vshll.u32 %v869, 16
        %v1042 = vrot.slane %v1040, 5
        %v1043 = vsel %vm909, %v1038, %v1042
        %v1044 = vshrl.u32 %v869, 16
        %v1046 = vrot.slane %v1044, 4
        %v1047 = vor.u32 %v1046, %v1042
        %v1048 = vrot.slane %v1047, 4
        %v1050 = vshll.u32 %v896, 16
        %v1052 = vrot.slane %v1050, 5
        %v1053 = vsel %vm909, %v1048, %v1052
        %v1055 = vshrl.u32 %v870, 16
        %v1057 = vrot.slane %v1055, 4
        %v1058 = vshll.u32 %v870, 16
        %v1060 = vrot.slane %v1058, 5
        %v1061 = vor.u32 %v1057, %v1060
        %v1062 = vrot.slane %v1061, 4
        %v1064 = vshll.u32 %v871, 16
        %v1066 = vrot.slane %v1064, 5
        %v1067 = vsel %vm909, %v1062, %v1066
        %v1068 = vshrl.u32 %v871, 16
        %v1070 = vrot.slane %v1068, 4
        %v1071 = vor.u32 %v1070, %v1066
        %v1072 = vrot.slane %v1071, 4
        %v1074 = vshll.u32 %v897, 16
        %v1076 = vrot.slane %v1074, 5
        %v1077 = vsel %vm909, %v1072, %v1076
        %v1079 = vshrl.u32 %v872, 16
        %v1081 = vrot.slane %v1079, 4
        %v1082 = vshll.u32 %v872, 16
        %v1084 = vrot.slane %v1082, 5
        %v1085 = vor.u32 %v1081, %v1084
        %v1086 = vrot.slane %v1085, 4
        %v1088 = vshll.u32 %v873, 16
        %v1090 = vrot.slane %v1088, 5
        %v1091 = vsel %vm909, %v1086, %v1090
        %v1092 = vshrl.u32 %v873, 16
        %v1094 = vrot.slane %v1092, 4
        %v1095 = vor.u32 %v1094, %v1090
        %v1096 = vrot.slane %v1095, 4
        %v1098 = vshll.u32 %v898, 16
        %v1100 = vrot.slane %v1098, 5
        %v1101 = vsel %vm909, %v1096, %v1100
        %v1103 = vshrl.u32 %v874, 16
        %v1105 = vrot.slane %v1103, 4
        %v1106 = vshll.u32 %v874, 16
        %v1108 = vrot.slane %v1106, 5
        %v1109 = vor.u32 %v1105, %v1108
        %v1110 = vrot.slane %v1109, 4
        %v1112 = vshll.u32 %v875, 16
        %v1114 = vrot.slane %v1112, 5
        %v1115 = vsel %vm909, %v1110, %v1114
        %v1116 = vshrl.u32 %v875, 16
        %v1118 = vrot.slane %v1116, 4
        %v1119 = vor.u32 %v1118, %v1114
        %v1120 = vrot.slane %v1119, 4
        %v1122 = vshll.u32 %v899, 16
        %v1124 = vrot.slane %v1122, 5
        %v1125 = vsel %vm909, %v1120, %v1124
        %v1127 = vshrl.u32 %v876, 16
        %v1129 = vrot.slane %v1127, 4
        %v1130 = vshll.u32 %v876, 16
        %v1132 = vrot.slane %v1130, 5
        %v1133 = vor.u32 %v1129, %v1132
        %v1134 = vrot.slane %v1133, 4
        %v1136 = vshll.u32 %v877, 16
        %v1138 = vrot.slane %v1136, 5
        %v1139 = vsel %vm909, %v1134, %v1138
        %v1140 = vshrl.u32 %v877, 16
        %v1142 = vrot.slane %v1140, 4
        %v1143 = vor.u32 %v1142, %v1138
        %v1144 = vrot.slane %v1143, 4
        %v1146 = vshll.u32 %v900, 16
        %v1148 = vrot.slane %v1146, 5
        %v1149 = vsel %vm909, %v1144, %v1148
        %v1151 = vshrl.u32 %v878, 16
        %v1153 = vrot.slane %v1151, 4
        %v1154 = vshll.u32 %v878, 16
        %v1156 = vrot.slane %v1154, 5
        %v1157 = vor.u32 %v1153, %v1156
        %v1158 = vrot.slane %v1157, 4
        %v1160 = vshll.u32 %v879, 16
        %v1162 = vrot.slane %v1160, 5
        %v1163 = vsel %vm909, %v1158, %v1162
        %v1164 = vshrl.u32 %v879, 16
        %v1166 = vrot.slane %v1164, 4
        %v1167 = vor.u32 %v1166, %v1162
        %v1168 = vrot.slane %v1167, 4
        %v1170 = vshll.u32 %v901, 16
        %v1172 = vrot.slane %v1170, 5
        %v1173 = vsel %vm909, %v1168, %v1172
        %v1175 = vshrl.u32 %v880, 16
        %v1177 = vrot.slane %v1175, 4
        %v1178 = vshll.u32 %v880, 16
        %v1180 = vrot.slane %v1178, 5
        %v1181 = vor.u32 %v1177, %v1180
        %v1182 = vrot.slane %v1181, 4
        %v1184 = vshll.u32 %v881, 16
        %v1186 = vrot.slane %v1184, 5
        %v1187 = vsel %vm909, %v1182, %v1186
        %v1188 = vshrl.u32 %v881, 16
        %v1190 = vrot.slane %v1188, 4
        %v1191 = vor.u32 %v1190, %v1186
        %v1192 = vrot.slane %v1191, 4
        %v1194 = vshll.u32 %v902, 16
        %v1196 = vrot.slane %v1194, 5
        %v1197 = vsel %vm909, %v1192, %v1196
        %v1199 = vshrl.u32 %v882, 16
        %v1201 = vrot.slane %v1199, 4
        %v1202 = vshll.u32 %v882, 16
        %v1204 = vrot.slane %v1202, 5
        %v1205 = vor.u32 %v1201, %v1204
        %v1206 = vrot.slane %v1205, 4
        %v1208 = vshll.u32 %v883, 16
        %v1210 = vrot.slane %v1208, 5
        %v1211 = vsel %vm909, %v1206, %v1210
        %v1212 = vshrl.u32 %v883, 16
        %v1214 = vrot.slane %v1212, 4
        %v1215 = vor.u32 %v1214, %v1210
        %v1216 = vrot.slane %v1215, 4
        %v1218 = vshll.u32 %v903, 16
        %v1220 = vrot.slane %v1218, 5
        %v1221 = vsel %vm909, %v1216, %v1220
        %v1223 = vshrl.u32 %v884, 16
        %v1225 = vrot.slane %v1223, 4
        %v1226 = vshll.u32 %v884, 16
        %v1228 = vrot.slane %v1226, 5
        %v1229 = vor.u32 %v1225, %v1228
        %v1230 = vrot.slane %v1229, 4
        %v1232 = vshll.u32 %v885, 16
        %v1234 = vrot.slane %v1232, 5
        %v1235 = vsel %vm909, %v1230, %v1234
        %v1236 = vshrl.u32 %v885, 16
        %v1238 = vrot.slane %v1236, 4
        %v1239 = vor.u32 %v1238, %v1234
        %v1240 = vrot.slane %v1239, 4
        %v1242 = vshll.u32 %v904, 16
        %v1244 = vrot.slane %v1242, 5
        %v1245 = vsel %vm909, %v1240, %v1244
        %v1247 = vshrl.u32 %v886, 16
        %v1249 = vrot.slane %v1247, 4
        %v1250 = vshll.u32 %v886, 16
        %v1252 = vrot.slane %v1250, 5
        %v1253 = vor.u32 %v1249, %v1252
        %v1254 = vrot.slane %v1253, 4
        %v1256 = vshll.u32 %v887, 16
        %v1258 = vrot.slane %v1256, 5
        %v1259 = vsel %vm909, %v1254, %v1258
        %v1260 = vshrl.u32 %v887, 16
        %v1262 = vrot.slane %v1260, 4
        %v1263 = vor.u32 %v1262, %v1258
        %v1264 = vrot.slane %v1263, 4
        %v1266 = vshll.u32 %v905, 16
        %v1268 = vrot.slane %v1266, 5
        %v1269 = vsel %vm909, %v1264, %v1268
        %v1271 = vshrl.u32 %v888, 16
        %v1273 = vrot.slane %v1271, 4
        %v1274 = vshll.u32 %v888, 16
        %v1276 = vrot.slane %v1274, 5
        %v1277 = vor.u32 %v1273, %v1276
        %v1278 = vrot.slane %v1277, 4
        %v1280 = vshll.u32 %v889, 16
        %v1282 = vrot.slane %v1280, 5
        %v1283 = vsel %vm909, %v1278, %v1282
        %v1284 = vshrl.u32 %v889, 16
        %v1286 = vrot.slane %v1284, 4
        %v1287 = vor.u32 %v1286, %v1282
        %v1288 = vrot.slane %v1287, 4
        %v1290 = vshll.u32 %v906, 16
        %v1292 = vrot.slane %v1290, 5
        %v1293 = vsel %vm909, %v1288, %v1292
        %s1294 = scalar_lea.vmem %s1, 2
        %v1295 = vld [vmem:[%s1294] sm:$0x3]
        %v1296 = vunpack.c.l.b16 %v923
        %v1297 = vunpack.c.l.b16 %v933
        %v1298 = vunpack.c.l.b16 %v947
        %v1299 = vunpack.c.l.b16 %v957
        %v1300 = vunpack.c.l.b16 %v971
        %v1301 = vunpack.c.l.b16 %v981
        %v1302 = vunpack.c.l.b16 %v995
        %v1303 = vunpack.c.l.b16 %v1005
        %v1304 = vunpack.c.l.b16 %v1019
        %v1305 = vunpack.c.l.b16 %v1029
        %v1306 = vunpack.c.l.b16 %v1043
        %v1307 = vunpack.c.l.b16 %v1053
        %v1308 = vunpack.c.l.b16 %v1067
        %v1309 = vunpack.c.l.b16 %v1077
        %v1310 = vunpack.c.l.b16 %v1091
        %v1311 = vunpack.c.l.b16 %v1101
        %v1312 = vunpack.c.l.b16 %v1115
        %v1313 = vunpack.c.l.b16 %v1125
        %v1314 = vunpack.c.l.b16 %v1139
        %v1315 = vunpack.c.l.b16 %v1149
        %v1316 = vunpack.c.l.b16 %v1163
        %v1317 = vunpack.c.l.b16 %v1173
        %v1318 = vunpack.c.l.b16 %v1187
        %v1319 = vunpack.c.l.b16 %v1197
        %v1320 = vunpack.c.l.b16 %v1211
        %v1321 = vunpack.c.l.b16 %v1221
        %v1322 = vunpack.c.l.b16 %v1235
        %v1323 = vunpack.c.l.b16 %v1245
        %v1324 = vunpack.c.l.b16 %v1259
        %v1325 = vunpack.c.l.b16 %v1269
        %v1326 = vunpack.c.l.b16 %v1283
        %v1327 = vunpack.c.l.b16 %v1293
        %v1328 = vpack.c.b16 %v1297, %v1296
        %v1329 = vpack.c.b16 %v1299, %v1298
        %v1330 = vpack.c.b16 %v1301, %v1300
        %v1331 = vpack.c.b16 %v1303, %v1302
        %v1332 = vpack.c.b16 %v1305, %v1304
        %v1333 = vpack.c.b16 %v1307, %v1306
        %v1334 = vpack.c.b16 %v1309, %v1308
        %v1335 = vpack.c.b16 %v1311, %v1310
        %v1336 = vpack.c.b16 %v1313, %v1312
        %v1337 = vpack.c.b16 %v1315, %v1314
        %v1338 = vpack.c.b16 %v1317, %v1316
        %v1339 = vpack.c.b16 %v1319, %v1318
        %v1340 = vpack.c.b16 %v1321, %v1320
        %v1341 = vpack.c.b16 %v1323, %v1322
        %v1342 = vpack.c.b16 %v1325, %v1324
        %v1343 = vpack.c.b16 %v1327, %v1326
        %vm1344 = vcmask 31744
        %v1346 = vsel %vm1344, %v1328, 0
        %v1349 = vsel %vm1344, %v1329, 0
        %v1352 = vsel %vm1344, %v1330, 0
        %v1355 = vsel %vm1344, %v1331, 0
        %v1358 = vsel %vm1344, %v1332, 0
        %v1361 = vsel %vm1344, %v1333, 0
        %v1364 = vsel %vm1344, %v1334, 0
        %v1367 = vsel %vm1344, %v1335, 0
        %v1370 = vsel %vm1344, %v1336, 0
        %v1373 = vsel %vm1344, %v1337, 0
        %v1376 = vsel %vm1344, %v1338, 0
        %v1379 = vsel %vm1344, %v1339, 0
        %v1382 = vsel %vm1344, %v1340, 0
        %v1385 = vsel %vm1344, %v1341, 0
        %v1388 = vsel %vm1344, %v1342, 0
        %v1391 = vsel %vm1344, %v1343, 0
        %vm1393 = vcmask 1041408
        %v1395 = vsel %vm1393, %v1295, 0
        %1397 = vmatprep.subr.bf16.mxu0 0
        %1398 = vmatpush1.bf16.msra.mxu0 %v1395
        %1399 = vmatprep.subr.bf16.mxu0 0
        %1400 = vmatpush1.bf16.msra.mxu0 0
        %1401 = vmatprep.subr.bf16.mxu0 0
        %1402 = vmatpush1.bf16.msra.mxu0 0
        %1403 = vmatprep.subr.bf16.mxu0 0
        %1404 = vmatpush1.bf16.msra.mxu0 0
        %1405 = vmatprep.subr.bf16.mxu0 0
        %1406 = vmatpush1.bf16.msra.mxu0 0
        %1407 = vmatprep.subr.bf16.mxu0 0
        %1408 = vmatpush1.bf16.msra.mxu0 0
        %1409 = vmatprep.subr.bf16.mxu0 0
        %1410 = vmatpush1.bf16.msra.mxu0 0
        %1411 = vmatprep.subr.bf16.mxu0 0
        %1412 = vmatpush1.bf16.msra.mxu0 0
        %1413 = vmatprep.subr.bf16.mxu0 0
        %1414 = vmatpush1.bf16.msra.mxu0 0
        %1415 = vmatprep.subr.bf16.mxu0 0
        %1416 = vmatpush1.bf16.msra.mxu0 0
        %1417 = vmatprep.subr.bf16.mxu0 0
        %1418 = vmatpush1.bf16.msra.mxu0 0
        %1419 = vmatprep.subr.bf16.mxu0 0
        %1420 = vmatpush1.bf16.msra.mxu0 0
        %1421 = vmatprep.subr.bf16.mxu0 0
        %1422 = vmatpush1.bf16.msra.mxu0 0
        %1423 = vmatprep.subr.bf16.mxu0 0
        %1424 = vmatpush1.bf16.msra.mxu0 0
        %1425 = vmatprep.subr.bf16.mxu0 0
        %1426 = vmatpush1.bf16.msra.mxu0 0
        %1427 = vmatprep.subr.bf16.mxu0 0
        %1428 = vmatpush1.bf16.msra.mxu0 0
        %1429 = vmatprep.mubr.bf16.mxu0 0
        %1430 = vmatmul.mubr.bf16.gmra.mrb[0].mxu0 %v1346
        %v1431 = vpop.f32.mrb[0].mxu0
        %v1432 = vadd.f32 0.0, %v1431
        %v1433 = vpop.f32.mrb[0].mxu0
        %v1434 = vpop.f32.mrb[0].mxu0
        %v1435 = vadd.f32 0.0, %v1434
        %v1436 = vpop.f32.mrb[0].mxu0
        %1437 = vmatprep.mubr.bf16.mxu0 0
        %1438 = vmatmul.mubr.bf16.gmra.mrb[0].mxu0 %v1349
        %v1439 = vpop.f32.mrb[0].mxu0
        %v1440 = vadd.f32 0.0, %v1439
        %v1441 = vpop.f32.mrb[0].mxu0
        %v1442 = vpop.f32.mrb[0].mxu0
        %v1443 = vadd.f32 0.0, %v1442
        %v1444 = vpop.f32.mrb[0].mxu0
        %1445 = vmatprep.mubr.bf16.mxu0 0
        %1446 = vmatmul.mubr.bf16.gmra.mrb[0].mxu0 %v1352
        %v1447 = vpop.f32.mrb[0].mxu0
        %v1448 = vadd.f32 0.0, %v1447
        %v1449 = vpop.f32.mrb[0].mxu0
        %v1450 = vpop.f32.mrb[0].mxu0
        %v1451 = vadd.f32 0.0, %v1450
        %v1452 = vpop.f32.mrb[0].mxu0
        %1453 = vmatprep.mubr.bf16.mxu0 0
        %1454 = vmatmul.mubr.bf16.gmra.mrb[0].mxu0 %v1355
        %v1455 = vpop.f32.mrb[0].mxu0
        %v1456 = vadd.f32 0.0, %v1455
        %v1457 = vpop.f32.mrb[0].mxu0
        %v1458 = vpop.f32.mrb[0].mxu0
        %v1459 = vadd.f32 0.0, %v1458
        %v1460 = vpop.f32.mrb[0].mxu0
        %1461 = vmatprep.mubr.bf16.mxu0 0
        %1462 = vmatmul.mubr.bf16.gmra.mrb[0].mxu0 %v1358
        %v1463 = vpop.f32.mrb[0].mxu0
        %v1464 = vadd.f32 0.0, %v1463
        %v1465 = vpop.f32.mrb[0].mxu0
        %v1466 = vpop.f32.mrb[0].mxu0
        %v1467 = vadd.f32 0.0, %v1466
        %v1468 = vpop.f32.mrb[0].mxu0
        %1469 = vmatprep.mubr.bf16.mxu0 0
        %1470 = vmatmul.mubr.bf16.gmra.mrb[0].mxu0 %v1361
        %v1471 = vpop.f32.mrb[0].mxu0
        %v1472 = vadd.f32 0.0, %v1471
        %v1473 = vpop.f32.mrb[0].mxu0
        %v1474 = vpop.f32.mrb[0].mxu0
        %v1475 = vadd.f32 0.0, %v1474
        %v1476 = vpop.f32.mrb[0].mxu0
        %1477 = vmatprep.mubr.bf16.mxu0 0
        %1478 = vmatmul.mubr.bf16.gmra.mrb[0].mxu0 %v1364
        %v1479 = vpop.f32.mrb[0].mxu0
        %v1480 = vadd.f32 0.0, %v1479
        %v1481 = vpop.f32.mrb[0].mxu0
        %v1482 = vpop.f32.mrb[0].mxu0
        %v1483 = vadd.f32 0.0, %v1482
        %v1484 = vpop.f32.mrb[0].mxu0
        %1485 = vmatprep.mubr.bf16.mxu0 0
        %1486 = vmatmul.mubr.bf16.gmra.mrb[0].mxu0 %v1367
        %v1487 = vpop.f32.mrb[0].mxu0
        %v1488 = vadd.f32 0.0, %v1487
        %v1489 = vpop.f32.mrb[0].mxu0
        %v1490 = vpop.f32.mrb[0].mxu0
        %v1491 = vadd.f32 0.0, %v1490
        %v1492 = vpop.f32.mrb[0].mxu0
        %1493 = vmatprep.mubr.bf16.mxu0 0
        %1494 = vmatmul.mubr.bf16.gmra.mrb[0].mxu0 %v1370
        %v1495 = vpop.f32.mrb[0].mxu0
        %v1496 = vadd.f32 0.0, %v1495
        %v1497 = vpop.f32.mrb[0].mxu0
        %v1498 = vpop.f32.mrb[0].mxu0
        %v1499 = vadd.f32 0.0, %v1498
        %v1500 = vpop.f32.mrb[0].mxu0
        %1501 = vmatprep.mubr.bf16.mxu0 0
        %1502 = vmatmul.mubr.bf16.gmra.mrb[0].mxu0 %v1373
        %v1503 = vpop.f32.mrb[0].mxu0
        %v1504 = vadd.f32 0.0, %v1503
        %v1505 = vpop.f32.mrb[0].mxu0
        %v1506 = vpop.f32.mrb[0].mxu0
        %v1507 = vadd.f32 0.0, %v1506
        %v1508 = vpop.f32.mrb[0].mxu0
        %1509 = vmatprep.mubr.bf16.mxu0 0
        %1510 = vmatmul.mubr.bf16.gmra.mrb[0].mxu0 %v1376
        %v1511 = vpop.f32.mrb[0].mxu0
        %v1512 = vadd.f32 0.0, %v1511
        %v1513 = vpop.f32.mrb[0].mxu0
        %v1514 = vpop.f32.mrb[0].mxu0
        %v1515 = vadd.f32 0.0, %v1514
        %v1516 = vpop.f32.mrb[0].mxu0
        %1517 = vmatprep.mubr.bf16.mxu0 0
        %1518 = vmatmul.mubr.bf16.gmra.mrb[0].mxu0 %v1379
        %v1519 = vpop.f32.mrb[0].mxu0
        %v1520 = vadd.f32 0.0, %v1519
        %v1521 = vpop.f32.mrb[0].mxu0
        %v1522 = vpop.f32.mrb[0].mxu0
        %v1523 = vadd.f32 0.0, %v1522
        %v1524 = vpop.f32.mrb[0].mxu0
        %1525 = vmatprep.mubr.bf16.mxu0 0
        %1526 = vmatmul.mubr.bf16.gmra.mrb[0].mxu0 %v1382
        %v1527 = vpop.f32.mrb[0].mxu0
        %v1528 = vadd.f32 0.0, %v1527
        %v1529 = vpop.f32.mrb[0].mxu0
        %v1530 = vpop.f32.mrb[0].mxu0
        %v1531 = vadd.f32 0.0, %v1530
        %v1532 = vpop.f32.mrb[0].mxu0
        %1533 = vmatprep.mubr.bf16.mxu0 0
        %1534 = vmatmul.mubr.bf16.gmra.mrb[0].mxu0 %v1385
        %v1535 = vpop.f32.mrb[0].mxu0
        %v1536 = vadd.f32 0.0, %v1535
        %v1537 = vpop.f32.mrb[0].mxu0
        %v1538 = vpop.f32.mrb[0].mxu0
        %v1539 = vadd.f32 0.0, %v1538
        %v1540 = vpop.f32.mrb[0].mxu0
        %1541 = vmatprep.mubr.bf16.mxu0 0
        %1542 = vmatmul.mubr.bf16.gmra.mrb[0].mxu0 %v1388
        %v1543 = vpop.f32.mrb[0].mxu0
        %v1544 = vadd.f32 0.0, %v1543
        %v1545 = vpop.f32.mrb[0].mxu0
        %v1546 = vpop.f32.mrb[0].mxu0
        %v1547 = vadd.f32 0.0, %v1546
        %v1548 = vpop.f32.mrb[0].mxu0
        %1549 = vmatprep.mubr.bf16.mxu0 0
        %1550 = vmatmul.mubr.bf16.gmra.mrb[0].mxu0 %v1391
        %v1551 = vpop.f32.mrb[0].mxu0
        %v1552 = vadd.f32 0.0, %v1551
        %v1553 = vpop.f32.mrb[0].mxu0
        %v1554 = vpop.f32.mrb[0].mxu0
        %v1555 = vadd.f32 0.0, %v1554
        %v1556 = vpop.f32.mrb[0].mxu0
        %1557 = vdwg.mxu0
        %v1590 = vunpack.c.l.b16 %v858
        %v1591 = vunpack.c.l.b16 %v859
        %v1592 = vunpack.c.l.b16 %v860
        %v1593 = vunpack.c.l.b16 %v861
        %v1594 = vunpack.c.l.b16 %v862
        %v1595 = vunpack.c.l.b16 %v863
        %v1596 = vunpack.c.l.b16 %v864
        %v1597 = vunpack.c.l.b16 %v865
        %v1598 = vunpack.c.l.b16 %v866
        %v1599 = vunpack.c.l.b16 %v867
        %v1600 = vunpack.c.l.b16 %v868
        %v1601 = vunpack.c.l.b16 %v869
        %v1602 = vunpack.c.l.b16 %v870
        %v1603 = vunpack.c.l.b16 %v871
        %v1604 = vunpack.c.l.b16 %v872
        %v1605 = vunpack.c.l.b16 %v873
        %v1606 = vunpack.c.l.b16 %v874
        %v1607 = vunpack.c.l.b16 %v875
        %v1608 = vunpack.c.l.b16 %v876
        %v1609 = vunpack.c.l.b16 %v877
        %v1610 = vunpack.c.l.b16 %v878
        %v1611 = vunpack.c.l.b16 %v879
        %v1612 = vunpack.c.l.b16 %v880
        %v1613 = vunpack.c.l.b16 %v881
        %v1614 = vunpack.c.l.b16 %v882
        %v1615 = vunpack.c.l.b16 %v883
        %v1616 = vunpack.c.l.b16 %v884
        %v1617 = vunpack.c.l.b16 %v885
        %v1618 = vunpack.c.l.b16 %v886
        %v1619 = vunpack.c.l.b16 %v887
        %v1620 = vunpack.c.l.b16 %v888
        %v1621 = vunpack.c.l.b16 %v889
        %v1622 = vpack.c.b16 %v1591, %v1590
        %v1623 = vpack.c.b16 %v1593, %v1592
        %v1624 = vpack.c.b16 %v1595, %v1594
        %v1625 = vpack.c.b16 %v1597, %v1596
        %v1626 = vpack.c.b16 %v1599, %v1598
        %v1627 = vpack.c.b16 %v1601, %v1600
        %v1628 = vpack.c.b16 %v1603, %v1602
        %v1629 = vpack.c.b16 %v1605, %v1604
        %v1630 = vpack.c.b16 %v1607, %v1606
        %v1631 = vpack.c.b16 %v1609, %v1608
        %v1632 = vpack.c.b16 %v1611, %v1610
        %v1633 = vpack.c.b16 %v1613, %v1612
        %v1634 = vpack.c.b16 %v1615, %v1614
        %v1635 = vpack.c.b16 %v1617, %v1616
        %v1636 = vpack.c.b16 %v1619, %v1618
        %v1637 = vpack.c.b16 %v1621, %v1620
        %v1639 = vsel %vm1344, %v1622, 0
        %v1642 = vsel %vm1344, %v1623, 0
        %v1645 = vsel %vm1344, %v1624, 0
        %v1648 = vsel %vm1344, %v1625, 0
        %v1651 = vsel %vm1344, %v1626, 0
        %v1654 = vsel %vm1344, %v1627, 0
        %v1657 = vsel %vm1344, %v1628, 0
        %v1660 = vsel %vm1344, %v1629, 0
        %v1663 = vsel %vm1344, %v1630, 0
        %v1666 = vsel %vm1344, %v1631, 0
        %v1669 = vsel %vm1344, %v1632, 0
        %v1672 = vsel %vm1344, %v1633, 0
        %v1675 = vsel %vm1344, %v1634, 0
        %v1678 = vsel %vm1344, %v1635, 0
        %v1681 = vsel %vm1344, %v1636, 0
        %v1684 = vsel %vm1344, %v1637, 0
        %v1687 = vsel %vm1393, %v890, 0
        %1689 = vmatprep.subr.bf16.mxu0 0
        %1690 = vmatpush1.bf16.msra.mxu0 %v1687
        %1691 = vmatprep.subr.bf16.mxu0 0
        %1692 = vmatpush1.bf16.msra.mxu0 0
        %1693 = vmatprep.subr.bf16.mxu0 0
        %1694 = vmatpush1.bf16.msra.mxu0 0
        %1695 = vmatprep.subr.bf16.mxu0 0
        %1696 = vmatpush1.bf16.msra.mxu0 0
        %1697 = vmatprep.subr.bf16.mxu0 0
        %1698 = vmatpush1.bf16.msra.mxu0 0
        %1699 = vmatprep.subr.bf16.mxu0 0
        %1700 = vmatpush1.bf16.msra.mxu0 0
        %1701 = vmatprep.subr.bf16.mxu0 0
        %1702 = vmatpush1.bf16.msra.mxu0 0
        %1703 = vmatprep.subr.bf16.mxu0 0
        %1704 = vmatpush1.bf16.msra.mxu0 0
        %1705 = vmatprep.subr.bf16.mxu0 0
        %1706 = vmatpush1.bf16.msra.mxu0 0
        %1707 = vmatprep.subr.bf16.mxu0 0
        %1708 = vmatpush1.bf16.msra.mxu0 0
        %1709 = vmatprep.subr.bf16.mxu0 0
        %1710 = vmatpush1.bf16.msra.mxu0 0
        %1711 = vmatprep.subr.bf16.mxu0 0
        %1712 = vmatpush1.bf16.msra.mxu0 0
        %1713 = vmatprep.subr.bf16.mxu0 0
        %1714 = vmatpush1.bf16.msra.mxu0 0
        %1715 = vmatprep.subr.bf16.mxu0 0
        %1716 = vmatpush1.bf16.msra.mxu0 0
        %1717 = vmatprep.subr.bf16.mxu0 0
        %1718 = vmatpush1.bf16.msra.mxu0 0
        %1719 = vmatprep.subr.bf16.mxu0 0
        %1720 = vmatpush1.bf16.msra.mxu0 0
        %1721 = vmatprep.mubr.bf16.mxu0 0
        %1722 = vmatmul.mubr.bf16.gmra.mrb[0].mxu0 %v1639
        %v1723 = vpop.f32.mrb[0].mxu0
        %v1724 = vadd.f32 %v1432, %v1723
        %v1725 = vpop.f32.mrb[0].mxu0
        %v1726 = vpop.f32.mrb[0].mxu0
        %v1727 = vadd.f32 %v1435, %v1726
        %v1728 = vpop.f32.mrb[0].mxu0
        %1729 = vmatprep.mubr.bf16.mxu0 0
        %1730 = vmatmul.mubr.bf16.gmra.mrb[0].mxu0 %v1642
        %v1731 = vpop.f32.mrb[0].mxu0
        %v1732 = vadd.f32 %v1440, %v1731
        %v1733 = vpop.f32.mrb[0].mxu0
        %v1734 = vpop.f32.mrb[0].mxu0
        %v1735 = vadd.f32 %v1443, %v1734
        %v1736 = vpop.f32.mrb[0].mxu0
        %1737 = vmatprep.mubr.bf16.mxu0 0
        %1738 = vmatmul.mubr.bf16.gmra.mrb[0].mxu0 %v1645
        %v1739 = vpop.f32.mrb[0].mxu0
        %v1740 = vadd.f32 %v1448, %v1739
        %v1741 = vpop.f32.mrb[0].mxu0
        %v1742 = vpop.f32.mrb[0].mxu0
        %v1743 = vadd.f32 %v1451, %v1742
        %v1744 = vpop.f32.mrb[0].mxu0
        %1745 = vmatprep.mubr.bf16.mxu0 0
        %1746 = vmatmul.mubr.bf16.gmra.mrb[0].mxu0 %v1648
        %v1747 = vpop.f32.mrb[0].mxu0
        %v1748 = vadd.f32 %v1456, %v1747
        %v1749 = vpop.f32.mrb[0].mxu0
        %v1750 = vpop.f32.mrb[0].mxu0
        %v1751 = vadd.f32 %v1459, %v1750
        %v1752 = vpop.f32.mrb[0].mxu0
        %1753 = vmatprep.mubr.bf16.mxu0 0
        %1754 = vmatmul.mubr.bf16.gmra.mrb[0].mxu0 %v1651
        %v1755 = vpop.f32.mrb[0].mxu0
        %v1756 = vadd.f32 %v1464, %v1755
        %v1757 = vpop.f32.mrb[0].mxu0
        %v1758 = vpop.f32.mrb[0].mxu0
        %v1759 = vadd.f32 %v1467, %v1758
        %v1760 = vpop.f32.mrb[0].mxu0
        %1761 = vmatprep.mubr.bf16.mxu0 0
        %1762 = vmatmul.mubr.bf16.gmra.mrb[0].mxu0 %v1654
        %v1763 = vpop.f32.mrb[0].mxu0
        %v1764 = vadd.f32 %v1472, %v1763
        %v1765 = vpop.f32.mrb[0].mxu0
        %v1766 = vpop.f32.mrb[0].mxu0
        %v1767 = vadd.f32 %v1475, %v1766
        %v1768 = vpop.f32.mrb[0].mxu0
        %1769 = vmatprep.mubr.bf16.mxu0 0
        %1770 = vmatmul.mubr.bf16.gmra.mrb[0].mxu0 %v1657
        %v1771 = vpop.f32.mrb[0].mxu0
        %v1772 = vadd.f32 %v1480, %v1771
        %v1773 = vpop.f32.mrb[0].mxu0
        %v1774 = vpop.f32.mrb[0].mxu0
        %v1775 = vadd.f32 %v1483, %v1774
        %v1776 = vpop.f32.mrb[0].mxu0
        %1777 = vmatprep.mubr.bf16.mxu0 0
        %1778 = vmatmul.mubr.bf16.gmra.mrb[0].mxu0 %v1660
        %v1779 = vpop.f32.mrb[0].mxu0
        %v1780 = vadd.f32 %v1488, %v1779
        %v1781 = vpop.f32.mrb[0].mxu0
        %v1782 = vpop.f32.mrb[0].mxu0
        %v1783 = vadd.f32 %v1491, %v1782
        %v1784 = vpop.f32.mrb[0].mxu0
        %1785 = vmatprep.mubr.bf16.mxu0 0
        %1786 = vmatmul.mubr.bf16.gmra.mrb[0].mxu0 %v1663
        %v1787 = vpop.f32.mrb[0].mxu0
        %v1788 = vadd.f32 %v1496, %v1787
        %v1789 = vpop.f32.mrb[0].mxu0
        %v1790 = vpop.f32.mrb[0].mxu0
        %v1791 = vadd.f32 %v1499, %v1790
        %v1792 = vpop.f32.mrb[0].mxu0
        %1793 = vmatprep.mubr.bf16.mxu0 0
        %1794 = vmatmul.mubr.bf16.gmra.mrb[0].mxu0 %v1666
        %v1795 = vpop.f32.mrb[0].mxu0
        %v1796 = vadd.f32 %v1504, %v1795
        %v1797 = vpop.f32.mrb[0].mxu0
        %v1798 = vpop.f32.mrb[0].mxu0
        %v1799 = vadd.f32 %v1507, %v1798
        %v1800 = vpop.f32.mrb[0].mxu0
        %1801 = vmatprep.mubr.bf16.mxu0 0
        %1802 = vmatmul.mubr.bf16.gmra.mrb[0].mxu0 %v1669
        %v1803 = vpop.f32.mrb[0].mxu0
        %v1804 = vadd.f32 %v1512, %v1803
        %v1805 = vpop.f32.mrb[0].mxu0
        %v1806 = vpop.f32.mrb[0].mxu0
        %v1807 = vadd.f32 %v1515, %v1806
        %v1808 = vpop.f32.mrb[0].mxu0
        %1809 = vmatprep.mubr.bf16.mxu0 0
        %1810 = vmatmul.mubr.bf16.gmra.mrb[0].mxu0 %v1672
        %v1811 = vpop.f32.mrb[0].mxu0
        %v1812 = vadd.f32 %v1520, %v1811
        %v1813 = vpop.f32.mrb[0].mxu0
        %v1814 = vpop.f32.mrb[0].mxu0
        %v1815 = vadd.f32 %v1523, %v1814
        %v1816 = vpop.f32.mrb[0].mxu0
        %1817 = vmatprep.mubr.bf16.mxu0 0
        %1818 = vmatmul.mubr.bf16.gmra.mrb[0].mxu0 %v1675
        %v1819 = vpop.f32.mrb[0].mxu0
        %v1820 = vadd.f32 %v1528, %v1819
        %v1821 = vpop.f32.mrb[0].mxu0
        %v1822 = vpop.f32.mrb[0].mxu0
        %v1823 = vadd.f32 %v1531, %v1822
        %v1824 = vpop.f32.mrb[0].mxu0
        %1825 = vmatprep.mubr.bf16.mxu0 0
        %1826 = vmatmul.mubr.bf16.gmra.mrb[0].mxu0 %v1678
        %v1827 = vpop.f32.mrb[0].mxu0
        %v1828 = vadd.f32 %v1536, %v1827
        %v1829 = vpop.f32.mrb[0].mxu0
        %v1830 = vpop.f32.mrb[0].mxu0
        %v1831 = vadd.f32 %v1539, %v1830
        %v1832 = vpop.f32.mrb[0].mxu0
        %1833 = vmatprep.mubr.bf16.mxu0 0
        %1834 = vmatmul.mubr.bf16.gmra.mrb[0].mxu0 %v1681
        %v1835 = vpop.f32.mrb[0].mxu0
        %v1836 = vadd.f32 %v1544, %v1835
        %v1837 = vpop.f32.mrb[0].mxu0
        %v1838 = vpop.f32.mrb[0].mxu0
        %v1839 = vadd.f32 %v1547, %v1838
        %v1840 = vpop.f32.mrb[0].mxu0
        %1841 = vmatprep.mubr.bf16.mxu0 0
        %1842 = vmatmul.mubr.bf16.gmra.mrb[0].mxu0 %v1684
        %v1843 = vpop.f32.mrb[0].mxu0
        %v1844 = vadd.f32 %v1552, %v1843
        %v1845 = vpop.f32.mrb[0].mxu0
        %v1846 = vpop.f32.mrb[0].mxu0
        %v1847 = vadd.f32 %v1555, %v1846
        %v1848 = vpop.f32.mrb[0].mxu0
        %1849 = vdwg.mxu0
        %v1850 = vld [vmem:[#allocation2] sm:$0xe]
        %v1851 = vld [vmem:[#allocation2 + $0xc] sm:$0xe]
        %v1852 = vld [vmem:[#allocation2 + $0x18] sm:$0xe]
        %v1853 = vld [vmem:[#allocation2 + $0x24] sm:$0xe]
        %v1854 = vld [vmem:[#allocation2 + $0x30] sm:$0xe]
        %v1855 = vld [vmem:[#allocation2 + $0x3c] sm:$0xe]
        %v1856 = vld [vmem:[#allocation2 + $0x48] sm:$0xe]
        %v1857 = vld [vmem:[#allocation2 + $0x54] sm:$0xe]
        %v1858 = vld [vmem:[#allocation2 + $0x60] sm:$0xe]
        %v1859 = vld [vmem:[#allocation2 + $0x6c] sm:$0xe]
        %v1860 = vld [vmem:[#allocation2 + $0x78] sm:$0xe]
        %v1861 = vld [vmem:[#allocation2 + $0x84] sm:$0xe]
        %v1862 = vld [vmem:[#allocation2 + $0x90] sm:$0xe]
        %v1863 = vld [vmem:[#allocation2 + $0x9c] sm:$0xe]
        %v1864 = vld [vmem:[#allocation2 + $0xa8] sm:$0xe]
        %v1865 = vld [vmem:[#allocation2 + $0xb4] sm:$0xe]
        %vm1898 = vcmask 1042432
        %vm1899 = vcmask 1046532
        %vm1900 = vmor %vm1898, %vm1899
        %v1901 = vrot.slane %v1850, 5
        %v1902 = vrot.slane %v1901, 4
        %v1903 = vrot.slane %v859, 5
        %v1904 = vsel %vm1900, %v1902, %v1903
        %v1905 = vrot.slane %v1903, 4
        %v1906 = vrot.slane %v891, 5
        %v1907 = vsel %vm1900, %v1905, %v1906
        %v1908 = vrot.slane %v1851, 5
        %v1909 = vrot.slane %v1908, 4
        %v1910 = vrot.slane %v861, 5
        %v1911 = vsel %vm1900, %v1909, %v1910
        %v1912 = vrot.slane %v1910, 4
        %v1913 = vrot.slane %v892, 5
        %v1914 = vsel %vm1900, %v1912, %v1913
        %v1915 = vrot.slane %v1852, 5
        %v1916 = vrot.slane %v1915, 4
        %v1917 = vrot.slane %v863, 5
        %v1918 = vsel %vm1900, %v1916, %v1917
        %v1919 = vrot.slane %v1917, 4
        %v1920 = vrot.slane %v893, 5
        %v1921 = vsel %vm1900, %v1919, %v1920
        %v1922 = vrot.slane %v1853, 5
        %v1923 = vrot.slane %v1922, 4
        %v1924 = vrot.slane %v865, 5
        %v1925 = vsel %vm1900, %v1923, %v1924
        %v1926 = vrot.slane %v1924, 4
        %v1927 = vrot.slane %v894, 5
        %v1928 = vsel %vm1900, %v1926, %v1927
        %v1929 = vrot.slane %v1854, 5
        %v1930 = vrot.slane %v1929, 4
        %v1931 = vrot.slane %v867, 5
        %v1932 = vsel %vm1900, %v1930, %v1931
        %v1933 = vrot.slane %v1931, 4
        %v1934 = vrot.slane %v895, 5
        %v1935 = vsel %vm1900, %v1933, %v1934
        %v1936 = vrot.slane %v1855, 5
        %v1937 = vrot.slane %v1936, 4
        %v1938 = vrot.slane %v869, 5
        %v1939 = vsel %vm1900, %v1937, %v1938
        %v1940 = vrot.slane %v1938, 4
        %v1941 = vrot.slane %v896, 5
        %v1942 = vsel %vm1900, %v1940, %v1941
        %v1943 = vrot.slane %v1856, 5
        %v1944 = vrot.slane %v1943, 4
        %v1945 = vrot.slane %v871, 5
        %v1946 = vsel %vm1900, %v1944, %v1945
        %v1947 = vrot.slane %v1945, 4
        %v1948 = vrot.slane %v897, 5
        %v1949 = vsel %vm1900, %v1947, %v1948
        %v1950 = vrot.slane %v1857, 5
        %v1951 = vrot.slane %v1950, 4
        %v1952 = vrot.slane %v873, 5
        %v1953 = vsel %vm1900, %v1951, %v1952
        %v1954 = vrot.slane %v1952, 4
        %v1955 = vrot.slane %v898, 5
        %v1956 = vsel %vm1900, %v1954, %v1955
        %v1957 = vrot.slane %v1858, 5
        %v1958 = vrot.slane %v1957, 4
        %v1959 = vrot.slane %v875, 5
        %v1960 = vsel %vm1900, %v1958, %v1959
        %v1961 = vrot.slane %v1959, 4
        %v1962 = vrot.slane %v899, 5
        %v1963 = vsel %vm1900, %v1961, %v1962
        %v1964 = vrot.slane %v1859, 5
        %v1965 = vrot.slane %v1964, 4
        %v1966 = vrot.slane %v877, 5
        %v1967 = vsel %vm1900, %v1965, %v1966
        %v1968 = vrot.slane %v1966, 4
        %v1969 = vrot.slane %v900, 5
        %v1970 = vsel %vm1900, %v1968, %v1969
        %v1971 = vrot.slane %v1860, 5
        %v1972 = vrot.slane %v1971, 4
        %v1973 = vrot.slane %v879, 5
        %v1974 = vsel %vm1900, %v1972, %v1973
        %v1975 = vrot.slane %v1973, 4
        %v1976 = vrot.slane %v901, 5
        %v1977 = vsel %vm1900, %v1975, %v1976
        %v1978 = vrot.slane %v1861, 5
        %v1979 = vrot.slane %v1978, 4
        %v1980 = vrot.slane %v881, 5
        %v1981 = vsel %vm1900, %v1979, %v1980
        %v1982 = vrot.slane %v1980, 4
        %v1983 = vrot.slane %v902, 5
        %v1984 = vsel %vm1900, %v1982, %v1983
        %v1985 = vrot.slane %v1862, 5
        %v1986 = vrot.slane %v1985, 4
        %v1987 = vrot.slane %v883, 5
        %v1988 = vsel %vm1900, %v1986, %v1987
        %v1989 = vrot.slane %v1987, 4
        %v1990 = vrot.slane %v903, 5
        %v1991 = vsel %vm1900, %v1989, %v1990
        %v1992 = vrot.slane %v1863, 5
        %v1993 = vrot.slane %v1992, 4
        %v1994 = vrot.slane %v885, 5
        %v1995 = vsel %vm1900, %v1993, %v1994
        %v1996 = vrot.slane %v1994, 4
        %v1997 = vrot.slane %v904, 5
        %v1998 = vsel %vm1900, %v1996, %v1997
        %v1999 = vrot.slane %v1864, 5
        %v2000 = vrot.slane %v1999, 4
        %v2001 = vrot.slane %v887, 5
        %v2002 = vsel %vm1900, %v2000, %v2001
        %v2003 = vrot.slane %v2001, 4
        %v2004 = vrot.slane %v905, 5
        %v2005 = vsel %vm1900, %v2003, %v2004
        %v2006 = vrot.slane %v1865, 5
        %v2007 = vrot.slane %v2006, 4
        %v2008 = vrot.slane %v889, 5
        %v2009 = vsel %vm1900, %v2007, %v2008
        %v2010 = vrot.slane %v2008, 4
        %v2011 = vrot.slane %v906, 5
        %v2012 = vsel %vm1900, %v2010, %v2011
        %s2013 = scalar_lea.vmem %s1, 4
        %v2014 = vld [vmem:[%s2013] sm:$0x3]
        %v2015 = vunpack.c.l.b16 %v1904
        %v2016 = vunpack.c.l.b16 %v1907
        %v2017 = vunpack.c.l.b16 %v1911
        %v2018 = vunpack.c.l.b16 %v1914
        %v2019 = vunpack.c.l.b16 %v1918
        %v2020 = vunpack.c.l.b16 %v1921
        %v2021 = vunpack.c.l.b16 %v1925
        %v2022 = vunpack.c.l.b16 %v1928
        %v2023 = vunpack.c.l.b16 %v1932
        %v2024 = vunpack.c.l.b16 %v1935
        %v2025 = vunpack.c.l.b16 %v1939
        %v2026 = vunpack.c.l.b16 %v1942
        %v2027 = vunpack.c.l.b16 %v1946
        %v2028 = vunpack.c.l.b16 %v1949
        %v2029 = vunpack.c.l.b16 %v1953
        %v2030 = vunpack.c.l.b16 %v1956
        %v2031 = vunpack.c.l.b16 %v1960
        %v2032 = vunpack.c.l.b16 %v1963
        %v2033 = vunpack.c.l.b16 %v1967
        %v2034 = vunpack.c.l.b16 %v1970
        %v2035 = vunpack.c.l.b16 %v1974
        %v2036 = vunpack.c.l.b16 %v1977
        %v2037 = vunpack.c.l.b16 %v1981
        %v2038 = vunpack.c.l.b16 %v1984
        %v2039 = vunpack.c.l.b16 %v1988
        %v2040 = vunpack.c.l.b16 %v1991
        %v2041 = vunpack.c.l.b16 %v1995
        %v2042 = vunpack.c.l.b16 %v1998
        %v2043 = vunpack.c.l.b16 %v2002
        %v2044 = vunpack.c.l.b16 %v2005
        %v2045 = vunpack.c.l.b16 %v2009
        %v2046 = vunpack.c.l.b16 %v2012
        %v2047 = vpack.c.b16 %v2016, %v2015
        %v2048 = vpack.c.b16 %v2018, %v2017
        %v2049 = vpack.c.b16 %v2020, %v2019
        %v2050 = vpack.c.b16 %v2022, %v2021
        %v2051 = vpack.c.b16 %v2024, %v2023
        %v2052 = vpack.c.b16 %v2026, %v2025
        %v2053 = vpack.c.b16 %v2028, %v2027
        %v2054 = vpack.c.b16 %v2030, %v2029
        %v2055 = vpack.c.b16 %v2032, %v2031
        %v2056 = vpack.c.b16 %v2034, %v2033
        %v2057 = vpack.c.b16 %v2036, %v2035
        %v2058 = vpack.c.b16 %v2038, %v2037
        %v2059 = vpack.c.b16 %v2040, %v2039
        %v2060 = vpack.c.b16 %v2042, %v2041
        %v2061 = vpack.c.b16 %v2044, %v2043
        %v2062 = vpack.c.b16 %v2046, %v2045
        %v2064 = vsel %vm1344, %v2047, 0
        %v2067 = vsel %vm1344, %v2048, 0
        %v2070 = vsel %vm1344, %v2049, 0
        %v2073 = vsel %vm1344, %v2050, 0
        %v2076 = vsel %vm1344, %v2051, 0
        %v2079 = vsel %vm1344, %v2052, 0
        %v2082 = vsel %vm1344, %v2053, 0
        %v2085 = vsel %vm1344, %v2054, 0
        %v2088 = vsel %vm1344, %v2055, 0
        %v2091 = vsel %vm1344, %v2056, 0
        %v2094 = vsel %vm1344, %v2057, 0
        %v2097 = vsel %vm1344, %v2058, 0
        %v2100 = vsel %vm1344, %v2059, 0
        %v2103 = vsel %vm1344, %v2060, 0
        %v2106 = vsel %vm1344, %v2061, 0
        %v2109 = vsel %vm1344, %v2062, 0
        %v2112 = vsel %vm1393, %v2014, 0
        %2114 = vmatprep.subr.bf16.mxu0 0
        %2115 = vmatpush1.bf16.msra.mxu0 %v2112
        %2116 = vmatprep.subr.bf16.mxu0 0
        %2117 = vmatpush1.bf16.msra.mxu0 0
        %2118 = vmatprep.subr.bf16.mxu0 0
        %2119 = vmatpush1.bf16.msra.mxu0 0
        %2120 = vmatprep.subr.bf16.mxu0 0
        %2121 = vmatpush1.bf16.msra.mxu0 0
        %2122 = vmatprep.subr.bf16.mxu0 0
        %2123 = vmatpush1.bf16.msra.mxu0 0
        %2124 = vmatprep.subr.bf16.mxu0 0
        %2125 = vmatpush1.bf16.msra.mxu0 0
        %2126 = vmatprep.subr.bf16.mxu0 0
        %2127 = vmatpush1.bf16.msra.mxu0 0
        %2128 = vmatprep.subr.bf16.mxu0 0
        %2129 = vmatpush1.bf16.msra.mxu0 0
        %2130 = vmatprep.subr.bf16.mxu0 0
        %2131 = vmatpush1.bf16.msra.mxu0 0
        %2132 = vmatprep.subr.bf16.mxu0 0
        %2133 = vmatpush1.bf16.msra.mxu0 0
        %2134 = vmatprep.subr.bf16.mxu0 0
        %2135 = vmatpush1.bf16.msra.mxu0 0
        %2136 = vmatprep.subr.bf16.mxu0 0
        %2137 = vmatpush1.bf16.msra.mxu0 0
        %2138 = vmatprep.subr.bf16.mxu0 0
        %2139 = vmatpush1.bf16.msra.mxu0 0
        %2140 = vmatprep.subr.bf16.mxu0 0
        %2141 = vmatpush1.bf16.msra.mxu0 0
        %2142 = vmatprep.subr.bf16.mxu0 0
        %2143 = vmatpush1.bf16.msra.mxu0 0
        %2144 = vmatprep.subr.bf16.mxu0 0
        %2145 = vmatpush1.bf16.msra.mxu0 0
        %2146 = vmatprep.mubr.bf16.mxu0 0
        %2147 = vmatmul.mubr.bf16.gmra.mrb[0].mxu0 %v2064
        %v2148 = vpop.f32.mrb[0].mxu0
        %v2149 = vadd.f32 0.0, %v2148
        %v2150 = vpop.f32.mrb[0].mxu0
        %v2151 = vpop.f32.mrb[0].mxu0
        %v2152 = vadd.f32 0.0, %v2151
        %v2153 = vpop.f32.mrb[0].mxu0
        %2154 = vmatprep.mubr.bf16.mxu0 0
        %2155 = vmatmul.mubr.bf16.gmra.mrb[0].mxu0 %v2067
        %v2156 = vpop.f32.mrb[0].mxu0
        %v2157 = vadd.f32 0.0, %v2156
        %v2158 = vpop.f32.mrb[0].mxu0
        %v2159 = vpop.f32.mrb[0].mxu0
        %v2160 = vadd.f32 0.0, %v2159
        %v2161 = vpop.f32.mrb[0].mxu0
        %2162 = vmatprep.mubr.bf16.mxu0 0
        %2163 = vmatmul.mubr.bf16.gmra.mrb[0].mxu0 %v2070
        %v2164 = vpop.f32.mrb[0].mxu0
        %v2165 = vadd.f32 0.0, %v2164
        %v2166 = vpop.f32.mrb[0].mxu0
        %v2167 = vpop.f32.mrb[0].mxu0
        %v2168 = vadd.f32 0.0, %v2167
        %v2169 = vpop.f32.mrb[0].mxu0
        %2170 = vmatprep.mubr.bf16.mxu0 0
        %2171 = vmatmul.mubr.bf16.gmra.mrb[0].mxu0 %v2073
        %v2172 = vpop.f32.mrb[0].mxu0
        %v2173 = vadd.f32 0.0, %v2172
        %v2174 = vpop.f32.mrb[0].mxu0
        %v2175 = vpop.f32.mrb[0].mxu0
        %v2176 = vadd.f32 0.0, %v2175
        %v2177 = vpop.f32.mrb[0].mxu0
        %2178 = vmatprep.mubr.bf16.mxu0 0
        %2179 = vmatmul.mubr.bf16.gmra.mrb[0].mxu0 %v2076
        %v2180 = vpop.f32.mrb[0].mxu0
        %v2181 = vadd.f32 0.0, %v2180
        %v2182 = vpop.f32.mrb[0].mxu0
        %v2183 = vpop.f32.mrb[0].mxu0
        %v2184 = vadd.f32 0.0, %v2183
        %v2185 = vpop.f32.mrb[0].mxu0
        %2186 = vmatprep.mubr.bf16.mxu0 0
        %2187 = vmatmul.mubr.bf16.gmra.mrb[0].mxu0 %v2079
        %v2188 = vpop.f32.mrb[0].mxu0
        %v2189 = vadd.f32 0.0, %v2188
        %v2190 = vpop.f32.mrb[0].mxu0
        %v2191 = vpop.f32.mrb[0].mxu0
        %v2192 = vadd.f32 0.0, %v2191
        %v2193 = vpop.f32.mrb[0].mxu0
        %2194 = vmatprep.mubr.bf16.mxu0 0
        %2195 = vmatmul.mubr.bf16.gmra.mrb[0].mxu0 %v2082
        %v2196 = vpop.f32.mrb[0].mxu0
        %v2197 = vadd.f32 0.0, %v2196
        %v2198 = vpop.f32.mrb[0].mxu0
        %v2199 = vpop.f32.mrb[0].mxu0
        %v2200 = vadd.f32 0.0, %v2199
        %v2201 = vpop.f32.mrb[0].mxu0
        %2202 = vmatprep.mubr.bf16.mxu0 0
        %2203 = vmatmul.mubr.bf16.gmra.mrb[0].mxu0 %v2085
        %v2204 = vpop.f32.mrb[0].mxu0
        %v2205 = vadd.f32 0.0, %v2204
        %v2206 = vpop.f32.mrb[0].mxu0
        %v2207 = vpop.f32.mrb[0].mxu0
        %v2208 = vadd.f32 0.0, %v2207
        %v2209 = vpop.f32.mrb[0].mxu0
        %2210 = vmatprep.mubr.bf16.mxu0 0
        %2211 = vmatmul.mubr.bf16.gmra.mrb[0].mxu0 %v2088
        %v2212 = vpop.f32.mrb[0].mxu0
        %v2213 = vadd.f32 0.0, %v2212
        %v2214 = vpop.f32.mrb[0].mxu0
        %v2215 = vpop.f32.mrb[0].mxu0
        %v2216 = vadd.f32 0.0, %v2215
        %v2217 = vpop.f32.mrb[0].mxu0
        %2218 = vmatprep.mubr.bf16.mxu0 0
        %2219 = vmatmul.mubr.bf16.gmra.mrb[0].mxu0 %v2091
        %v2220 = vpop.f32.mrb[0].mxu0
        %v2221 = vadd.f32 0.0, %v2220
        %v2222 = vpop.f32.mrb[0].mxu0
        %v2223 = vpop.f32.mrb[0].mxu0
        %v2224 = vadd.f32 0.0, %v2223
        %v2225 = vpop.f32.mrb[0].mxu0
        %2226 = vmatprep.mubr.bf16.mxu0 0
        %2227 = vmatmul.mubr.bf16.gmra.mrb[0].mxu0 %v2094
        %v2228 = vpop.f32.mrb[0].mxu0
        %v2229 = vadd.f32 0.0, %v2228
        %v2230 = vpop.f32.mrb[0].mxu0
        %v2231 = vpop.f32.mrb[0].mxu0
        %v2232 = vadd.f32 0.0, %v2231
        %v2233 = vpop.f32.mrb[0].mxu0
        %2234 = vmatprep.mubr.bf16.mxu0 0
        %2235 = vmatmul.mubr.bf16.gmra.mrb[0].mxu0 %v2097
        %v2236 = vpop.f32.mrb[0].mxu0
        %v2237 = vadd.f32 0.0, %v2236
        %v2238 = vpop.f32.mrb[0].mxu0
        %v2239 = vpop.f32.mrb[0].mxu0
        %v2240 = vadd.f32 0.0, %v2239
        %v2241 = vpop.f32.mrb[0].mxu0
        %2242 = vmatprep.mubr.bf16.mxu0 0
        %2243 = vmatmul.mubr.bf16.gmra.mrb[0].mxu0 %v2100
        %v2244 = vpop.f32.mrb[0].mxu0
        %v2245 = vadd.f32 0.0, %v2244
        %v2246 = vpop.f32.mrb[0].mxu0
        %v2247 = vpop.f32.mrb[0].mxu0
        %v2248 = vadd.f32 0.0, %v2247
        %v2249 = vpop.f32.mrb[0].mxu0
        %2250 = vmatprep.mubr.bf16.mxu0 0
        %2251 = vmatmul.mubr.bf16.gmra.mrb[0].mxu0 %v2103
        %v2252 = vpop.f32.mrb[0].mxu0
        %v2253 = vadd.f32 0.0, %v2252
        %v2254 = vpop.f32.mrb[0].mxu0
        %v2255 = vpop.f32.mrb[0].mxu0
        %v2256 = vadd.f32 0.0, %v2255
        %v2257 = vpop.f32.mrb[0].mxu0
        %2258 = vmatprep.mubr.bf16.mxu0 0
        %2259 = vmatmul.mubr.bf16.gmra.mrb[0].mxu0 %v2106
        %v2260 = vpop.f32.mrb[0].mxu0
        %v2261 = vadd.f32 0.0, %v2260
        %v2262 = vpop.f32.mrb[0].mxu0
        %v2263 = vpop.f32.mrb[0].mxu0
        %v2264 = vadd.f32 0.0, %v2263
        %v2265 = vpop.f32.mrb[0].mxu0
        %2266 = vmatprep.mubr.bf16.mxu0 0
        %2267 = vmatmul.mubr.bf16.gmra.mrb[0].mxu0 %v2109
        %v2268 = vpop.f32.mrb[0].mxu0
        %v2269 = vadd.f32 0.0, %v2268
        %v2270 = vpop.f32.mrb[0].mxu0
        %v2271 = vpop.f32.mrb[0].mxu0
        %v2272 = vadd.f32 0.0, %v2271
        %v2273 = vpop.f32.mrb[0].mxu0
        %2274 = vdwg.mxu0
        %v2275 = vadd.f32 %v1724, %v2149
        %v2276 = vadd.f32 %v1727, %v2152
        %v2277 = vadd.f32 %v1732, %v2157
        %v2278 = vadd.f32 %v1735, %v2160
        %v2279 = vadd.f32 %v1740, %v2165
        %v2280 = vadd.f32 %v1743, %v2168
        %v2281 = vadd.f32 %v1748, %v2173
        %v2282 = vadd.f32 %v1751, %v2176
        %v2283 = vadd.f32 %v1756, %v2181
        %v2284 = vadd.f32 %v1759, %v2184
        %v2285 = vadd.f32 %v1764, %v2189
        %v2286 = vadd.f32 %v1767, %v2192
        %v2287 = vadd.f32 %v1772, %v2197
        %v2288 = vadd.f32 %v1775, %v2200
        %v2289 = vadd.f32 %v1780, %v2205
        %v2290 = vadd.f32 %v1783, %v2208
        %v2291 = vadd.f32 %v1788, %v2213
        %v2292 = vadd.f32 %v1791, %v2216
        %v2293 = vadd.f32 %v1796, %v2221
        %v2294 = vadd.f32 %v1799, %v2224
        %v2295 = vadd.f32 %v1804, %v2229
        %v2296 = vadd.f32 %v1807, %v2232
        %v2297 = vadd.f32 %v1812, %v2237
        %v2298 = vadd.f32 %v1815, %v2240
        %v2299 = vadd.f32 %v1820, %v2245
        %v2300 = vadd.f32 %v1823, %v2248
        %v2301 = vadd.f32 %v1828, %v2253
        %v2302 = vadd.f32 %v1831, %v2256
        %v2303 = vadd.f32 %v1836, %v2261
        %v2304 = vadd.f32 %v1839, %v2264
        %v2305 = vadd.f32 %v1844, %v2269
        %v2306 = vadd.f32 %v1847, %v2272
        %v2307 = vld [vmem:[%s192] sm:$0xf]
        %v2308 = vld [vmem:[%s192 + $0x4] sm:$0xf]
        %v2309 = vld [vmem:[%s192 + $0xc] sm:$0xf]
        %v2310 = vld [vmem:[%s192 + $0x10] sm:$0xf]
        %v2311 = vld [vmem:[%s192 + $0x18] sm:$0xf]
        %v2312 = vld [vmem:[%s192 + $0x1c] sm:$0xf]
        %v2313 = vld [vmem:[%s192 + $0x24] sm:$0xf]
        %v2314 = vld [vmem:[%s192 + $0x28] sm:$0xf]
        %v2315 = vld [vmem:[%s192 + $0x30] sm:$0xf]
        %v2316 = vld [vmem:[%s192 + $0x34] sm:$0xf]
        %v2317 = vld [vmem:[%s192 + $0x3c] sm:$0xf]
        %v2318 = vld [vmem:[%s192 + $0x40] sm:$0xf]
        %v2319 = vld [vmem:[%s192 + $0x48] sm:$0xf]
        %v2320 = vld [vmem:[%s192 + $0x4c] sm:$0xf]
        %v2321 = vld [vmem:[%s192 + $0x54] sm:$0xf]
        %v2322 = vld [vmem:[%s192 + $0x58] sm:$0xf]
        %v2323 = vld [vmem:[%s192 + $0x60] sm:$0xf]
        %v2324 = vld [vmem:[%s192 + $0x64] sm:$0xf]
        %v2325 = vld [vmem:[%s192 + $0x6c] sm:$0xf]
        %v2326 = vld [vmem:[%s192 + $0x70] sm:$0xf]
        %v2327 = vld [vmem:[%s192 + $0x78] sm:$0xf]
        %v2328 = vld [vmem:[%s192 + $0x7c] sm:$0xf]
        %v2329 = vld [vmem:[%s192 + $0x84] sm:$0xf]
        %v2330 = vld [vmem:[%s192 + $0x88] sm:$0xf]
        %v2331 = vld [vmem:[%s192 + $0x90] sm:$0xf]
        %v2332 = vld [vmem:[%s192 + $0x94] sm:$0xf]
        %v2333 = vld [vmem:[%s192 + $0x9c] sm:$0xf]
        %v2334 = vld [vmem:[%s192 + $0xa0] sm:$0xf]
        %v2335 = vld [vmem:[%s192 + $0xa8] sm:$0xf]
        %v2336 = vld [vmem:[%s192 + $0xac] sm:$0xf]
        %v2337 = vld [vmem:[%s192 + $0xb4] sm:$0xf]
        %v2338 = vld [vmem:[%s192 + $0xb8] sm:$0xf]
        %s2339 = scalar_lea.vmem %s1, 6
        %v2340 = vld [vmem:[%s2339] sm:$0x3]
        %v2373 = vunpack.c.l.b16 %v2307
        %v2374 = vunpack.c.l.b16 %v2308
        %v2375 = vunpack.c.l.b16 %v2309
        %v2376 = vunpack.c.l.b16 %v2310
        %v2377 = vunpack.c.l.b16 %v2311
        %v2378 = vunpack.c.l.b16 %v2312
        %v2379 = vunpack.c.l.b16 %v2313
        %v2380 = vunpack.c.l.b16 %v2314
        %v2381 = vunpack.c.l.b16 %v2315
        %v2382 = vunpack.c.l.b16 %v2316
        %v2383 = vunpack.c.l.b16 %v2317
        %v2384 = vunpack.c.l.b16 %v2318
        %v2385 = vunpack.c.l.b16 %v2319
        %v2386 = vunpack.c.l.b16 %v2320
        %v2387 = vunpack.c.l.b16 %v2321
        %v2388 = vunpack.c.l.b16 %v2322
        %v2389 = vunpack.c.l.b16 %v2323
        %v2390 = vunpack.c.l.b16 %v2324
        %v2391 = vunpack.c.l.b16 %v2325
        %v2392 = vunpack.c.l.b16 %v2326
        %v2393 = vunpack.c.l.b16 %v2327
        %v2394 = vunpack.c.l.b16 %v2328
        %v2395 = vunpack.c.l.b16 %v2329
        %v2396 = vunpack.c.l.b16 %v2330
        %v2397 = vunpack.c.l.b16 %v2331
        %v2398 = vunpack.c.l.b16 %v2332
        %v2399 = vunpack.c.l.b16 %v2333
        %v2400 = vunpack.c.l.b16 %v2334
        %v2401 = vunpack.c.l.b16 %v2335
        %v2402 = vunpack.c.l.b16 %v2336
        %v2403 = vunpack.c.l.b16 %v2337
        %v2404 = vunpack.c.l.b16 %v2338
        %v2405 = vpack.c.b16 %v2374, %v2373
        %v2406 = vpack.c.b16 %v2376, %v2375
        %v2407 = vpack.c.b16 %v2378, %v2377
        %v2408 = vpack.c.b16 %v2380, %v2379
        %v2409 = vpack.c.b16 %v2382, %v2381
        %v2410 = vpack.c.b16 %v2384, %v2383
        %v2411 = vpack.c.b16 %v2386, %v2385
        %v2412 = vpack.c.b16 %v2388, %v2387
        %v2413 = vpack.c.b16 %v2390, %v2389
        %v2414 = vpack.c.b16 %v2392, %v2391
        %v2415 = vpack.c.b16 %v2394, %v2393
        %v2416 = vpack.c.b16 %v2396, %v2395
        %v2417 = vpack.c.b16 %v2398, %v2397
        %v2418 = vpack.c.b16 %v2400, %v2399
        %v2419 = vpack.c.b16 %v2402, %v2401
        %v2420 = vpack.c.b16 %v2404, %v2403
        %v2422 = vsel %vm1344, %v2405, 0
        %v2425 = vsel %vm1344, %v2406, 0
        %v2428 = vsel %vm1344, %v2407, 0
        %v2431 = vsel %vm1344, %v2408, 0
        %v2434 = vsel %vm1344, %v2409, 0
        %v2437 = vsel %vm1344, %v2410, 0
        %v2440 = vsel %vm1344, %v2411, 0
        %v2443 = vsel %vm1344, %v2412, 0
        %v2446 = vsel %vm1344, %v2413, 0
        %v2449 = vsel %vm1344, %v2414, 0
        %v2452 = vsel %vm1344, %v2415, 0
        %v2455 = vsel %vm1344, %v2416, 0
        %v2458 = vsel %vm1344, %v2417, 0
        %v2461 = vsel %vm1344, %v2418, 0
        %v2464 = vsel %vm1344, %v2419, 0
        %v2467 = vsel %vm1344, %v2420, 0
        %v2470 = vsel %vm1393, %v2340, 0
        %2472 = vmatprep.subr.bf16.mxu0 0
        %2473 = vmatpush1.bf16.msra.mxu0 %v2470
        %2474 = vmatprep.subr.bf16.mxu0 0
        %2475 = vmatpush1.bf16.msra.mxu0 0
        %2476 = vmatprep.subr.bf16.mxu0 0
        %2477 = vmatpush1.bf16.msra.mxu0 0
        %2478 = vmatprep.subr.bf16.mxu0 0
        %2479 = vmatpush1.bf16.msra.mxu0 0
        %2480 = vmatprep.subr.bf16.mxu0 0
        %2481 = vmatpush1.bf16.msra.mxu0 0
        %2482 = vmatprep.subr.bf16.mxu0 0
        %2483 = vmatpush1.bf16.msra.mxu0 0
        %2484 = vmatprep.subr.bf16.mxu0 0
        %2485 = vmatpush1.bf16.msra.mxu0 0
        %2486 = vmatprep.subr.bf16.mxu0 0
        %2487 = vmatpush1.bf16.msra.mxu0 0
        %2488 = vmatprep.subr.bf16.mxu0 0
        %2489 = vmatpush1.bf16.msra.mxu0 0
        %2490 = vmatprep.subr.bf16.mxu0 0
        %2491 = vmatpush1.bf16.msra.mxu0 0
        %2492 = vmatprep.subr.bf16.mxu0 0
        %2493 = vmatpush1.bf16.msra.mxu0 0
        %2494 = vmatprep.subr.bf16.mxu0 0
        %2495 = vmatpush1.bf16.msra.mxu0 0
        %2496 = vmatprep.subr.bf16.mxu0 0
        %2497 = vmatpush1.bf16.msra.mxu0 0
        %2498 = vmatprep.subr.bf16.mxu0 0
        %2499 = vmatpush1.bf16.msra.mxu0 0
        %2500 = vmatprep.subr.bf16.mxu0 0
        %2501 = vmatpush1.bf16.msra.mxu0 0
        %2502 = vmatprep.subr.bf16.mxu0 0
        %2503 = vmatpush1.bf16.msra.mxu0 0
        %2504 = vmatprep.mubr.bf16.mxu0 0
        %2505 = vmatmul.mubr.bf16.gmra.mrb[0].mxu0 %v2422
        %v2506 = vpop.f32.mrb[0].mxu0
        %v2507 = vadd.f32 0.0, %v2506
        %v2508 = vpop.f32.mrb[0].mxu0
        %v2509 = vpop.f32.mrb[0].mxu0
        %v2510 = vadd.f32 0.0, %v2509
        %v2511 = vpop.f32.mrb[0].mxu0
        %2512 = vmatprep.mubr.bf16.mxu0 0
        %2513 = vmatmul.mubr.bf16.gmra.mrb[0].mxu0 %v2425
        %v2514 = vpop.f32.mrb[0].mxu0
        %v2515 = vadd.f32 0.0, %v2514
        %v2516 = vpop.f32.mrb[0].mxu0
        %v2517 = vpop.f32.mrb[0].mxu0
        %v2518 = vadd.f32 0.0, %v2517
        %v2519 = vpop.f32.mrb[0].mxu0
        %2520 = vmatprep.mubr.bf16.mxu0 0
        %2521 = vmatmul.mubr.bf16.gmra.mrb[0].mxu0 %v2428
        %v2522 = vpop.f32.mrb[0].mxu0
        %v2523 = vadd.f32 0.0, %v2522
        %v2524 = vpop.f32.mrb[0].mxu0
        %v2525 = vpop.f32.mrb[0].mxu0
        %v2526 = vadd.f32 0.0, %v2525
        %v2527 = vpop.f32.mrb[0].mxu0
        %2528 = vmatprep.mubr.bf16.mxu0 0
        %2529 = vmatmul.mubr.bf16.gmra.mrb[0].mxu0 %v2431
        %v2530 = vpop.f32.mrb[0].mxu0
        %v2531 = vadd.f32 0.0, %v2530
        %v2532 = vpop.f32.mrb[0].mxu0
        %v2533 = vpop.f32.mrb[0].mxu0
        %v2534 = vadd.f32 0.0, %v2533
        %v2535 = vpop.f32.mrb[0].mxu0
        %2536 = vmatprep.mubr.bf16.mxu0 0
        %2537 = vmatmul.mubr.bf16.gmra.mrb[0].mxu0 %v2434
        %v2538 = vpop.f32.mrb[0].mxu0
        %v2539 = vadd.f32 0.0, %v2538
        %v2540 = vpop.f32.mrb[0].mxu0
        %v2541 = vpop.f32.mrb[0].mxu0
        %v2542 = vadd.f32 0.0, %v2541
        %v2543 = vpop.f32.mrb[0].mxu0
        %2544 = vmatprep.mubr.bf16.mxu0 0
        %2545 = vmatmul.mubr.bf16.gmra.mrb[0].mxu0 %v2437
        %v2546 = vpop.f32.mrb[0].mxu0
        %v2547 = vadd.f32 0.0, %v2546
        %v2548 = vpop.f32.mrb[0].mxu0
        %v2549 = vpop.f32.mrb[0].mxu0
        %v2550 = vadd.f32 0.0, %v2549
        %v2551 = vpop.f32.mrb[0].mxu0
        %2552 = vmatprep.mubr.bf16.mxu0 0
        %2553 = vmatmul.mubr.bf16.gmra.mrb[0].mxu0 %v2440
        %v2554 = vpop.f32.mrb[0].mxu0
        %v2555 = vadd.f32 0.0, %v2554
        %v2556 = vpop.f32.mrb[0].mxu0
        %v2557 = vpop.f32.mrb[0].mxu0
        %v2558 = vadd.f32 0.0, %v2557
        %v2559 = vpop.f32.mrb[0].mxu0
        %2560 = vmatprep.mubr.bf16.mxu0 0
        %2561 = vmatmul.mubr.bf16.gmra.mrb[0].mxu0 %v2443
        %v2562 = vpop.f32.mrb[0].mxu0
        %v2563 = vadd.f32 0.0, %v2562
        %v2564 = vpop.f32.mrb[0].mxu0
        %v2565 = vpop.f32.mrb[0].mxu0
        %v2566 = vadd.f32 0.0, %v2565
        %v2567 = vpop.f32.mrb[0].mxu0
        %2568 = vmatprep.mubr.bf16.mxu0 0
        %2569 = vmatmul.mubr.bf16.gmra.mrb[0].mxu0 %v2446
        %v2570 = vpop.f32.mrb[0].mxu0
        %v2571 = vadd.f32 0.0, %v2570
        %v2572 = vpop.f32.mrb[0].mxu0
        %v2573 = vpop.f32.mrb[0].mxu0
        %v2574 = vadd.f32 0.0, %v2573
        %v2575 = vpop.f32.mrb[0].mxu0
        %2576 = vmatprep.mubr.bf16.mxu0 0
        %2577 = vmatmul.mubr.bf16.gmra.mrb[0].mxu0 %v2449
        %v2578 = vpop.f32.mrb[0].mxu0
        %v2579 = vadd.f32 0.0, %v2578
        %v2580 = vpop.f32.mrb[0].mxu0
        %v2581 = vpop.f32.mrb[0].mxu0
        %v2582 = vadd.f32 0.0, %v2581
        %v2583 = vpop.f32.mrb[0].mxu0
        %2584 = vmatprep.mubr.bf16.mxu0 0
        %2585 = vmatmul.mubr.bf16.gmra.mrb[0].mxu0 %v2452
        %v2586 = vpop.f32.mrb[0].mxu0
        %v2587 = vadd.f32 0.0, %v2586
        %v2588 = vpop.f32.mrb[0].mxu0
        %v2589 = vpop.f32.mrb[0].mxu0
        %v2590 = vadd.f32 0.0, %v2589
        %v2591 = vpop.f32.mrb[0].mxu0
        %2592 = vmatprep.mubr.bf16.mxu0 0
        %2593 = vmatmul.mubr.bf16.gmra.mrb[0].mxu0 %v2455
        %v2594 = vpop.f32.mrb[0].mxu0
        %v2595 = vadd.f32 0.0, %v2594
        %v2596 = vpop.f32.mrb[0].mxu0
        %v2597 = vpop.f32.mrb[0].mxu0
        %v2598 = vadd.f32 0.0, %v2597
        %v2599 = vpop.f32.mrb[0].mxu0
        %2600 = vmatprep.mubr.bf16.mxu0 0
        %2601 = vmatmul.mubr.bf16.gmra.mrb[0].mxu0 %v2458
        %v2602 = vpop.f32.mrb[0].mxu0
        %v2603 = vadd.f32 0.0, %v2602
        %v2604 = vpop.f32.mrb[0].mxu0
        %v2605 = vpop.f32.mrb[0].mxu0
        %v2606 = vadd.f32 0.0, %v2605
        %v2607 = vpop.f32.mrb[0].mxu0
        %2608 = vmatprep.mubr.bf16.mxu0 0
        %2609 = vmatmul.mubr.bf16.gmra.mrb[0].mxu0 %v2461
        %v2610 = vpop.f32.mrb[0].mxu0
        %v2611 = vadd.f32 0.0, %v2610
        %v2612 = vpop.f32.mrb[0].mxu0
        %v2613 = vpop.f32.mrb[0].mxu0
        %v2614 = vadd.f32 0.0, %v2613
        %v2615 = vpop.f32.mrb[0].mxu0
        %2616 = vmatprep.mubr.bf16.mxu0 0
        %2617 = vmatmul.mubr.bf16.gmra.mrb[0].mxu0 %v2464
        %v2618 = vpop.f32.mrb[0].mxu0
        %v2619 = vadd.f32 0.0, %v2618
        %v2620 = vpop.f32.mrb[0].mxu0
        %v2621 = vpop.f32.mrb[0].mxu0
        %v2622 = vadd.f32 0.0, %v2621
        %v2623 = vpop.f32.mrb[0].mxu0
        %2624 = vmatprep.mubr.bf16.mxu0 0
        %2625 = vmatmul.mubr.bf16.gmra.mrb[0].mxu0 %v2467
        %v2626 = vpop.f32.mrb[0].mxu0
        %v2627 = vadd.f32 0.0, %v2626
        %v2628 = vpop.f32.mrb[0].mxu0
        %v2629 = vpop.f32.mrb[0].mxu0
        %v2630 = vadd.f32 0.0, %v2629
        %v2631 = vpop.f32.mrb[0].mxu0
        %2632 = vdwg.mxu0
        %v2633 = vadd.f32 %v2275, %v2507
        %v2634 = vadd.f32 %v2276, %v2510
        %v2635 = vadd.f32 %v2277, %v2515
        %v2636 = vadd.f32 %v2278, %v2518
        %v2637 = vadd.f32 %v2279, %v2523
        %v2638 = vadd.f32 %v2280, %v2526
        %v2639 = vadd.f32 %v2281, %v2531
        %v2640 = vadd.f32 %v2282, %v2534
        %v2641 = vadd.f32 %v2283, %v2539
        %v2642 = vadd.f32 %v2284, %v2542
        %v2643 = vadd.f32 %v2285, %v2547
        %v2644 = vadd.f32 %v2286, %v2550
        %v2645 = vadd.f32 %v2287, %v2555
        %v2646 = vadd.f32 %v2288, %v2558
        %v2647 = vadd.f32 %v2289, %v2563
        %v2648 = vadd.f32 %v2290, %v2566
        %v2649 = vadd.f32 %v2291, %v2571
        %v2650 = vadd.f32 %v2292, %v2574
        %v2651 = vadd.f32 %v2293, %v2579
        %v2652 = vadd.f32 %v2294, %v2582
        %v2653 = vadd.f32 %v2295, %v2587
        %v2654 = vadd.f32 %v2296, %v2590
        %v2655 = vadd.f32 %v2297, %v2595
        %v2656 = vadd.f32 %v2298, %v2598
        %v2657 = vadd.f32 %v2299, %v2603
        %v2658 = vadd.f32 %v2300, %v2606
        %v2659 = vadd.f32 %v2301, %v2611
        %v2660 = vadd.f32 %v2302, %v2614
        %v2661 = vadd.f32 %v2303, %v2619
        %v2662 = vadd.f32 %v2304, %v2622
        %v2663 = vadd.f32 %v2305, %v2627
        %v2664 = vadd.f32 %v2306, %v2630
        %v2665 = vld [vmem:[%s192] sm:$0xf]
        %v2666 = vld [vmem:[%s192 + $0x4] sm:$0xf]
        %v2667 = vld [vmem:[%s192 + $0x8] sm:$0x1]
        %v2668 = vld [vmem:[%s192 + $0xc] sm:$0xf]
        %v2669 = vld [vmem:[%s192 + $0x10] sm:$0xf]
        %v2670 = vld [vmem:[%s192 + $0x14] sm:$0x1]
        %v2671 = vld [vmem:[%s192 + $0x18] sm:$0xf]
        %v2672 = vld [vmem:[%s192 + $0x1c] sm:$0xf]
        %v2673 = vld [vmem:[%s192 + $0x20] sm:$0x1]
        %v2674 = vld [vmem:[%s192 + $0x24] sm:$0xf]
        %v2675 = vld [vmem:[%s192 + $0x28] sm:$0xf]
        %v2676 = vld [vmem:[%s192 + $0x2c] sm:$0x1]
        %v2677 = vld [vmem:[%s192 + $0x30] sm:$0xf]
        %v2678 = vld [vmem:[%s192 + $0x34] sm:$0xf]
        %v2679 = vld [vmem:[%s192 + $0x38] sm:$0x1]
        %v2680 = vld [vmem:[%s192 + $0x3c] sm:$0xf]
        %v2681 = vld [vmem:[%s192 + $0x40] sm:$0xf]
        %v2682 = vld [vmem:[%s192 + $0x44] sm:$0x1]
        %v2683 = vld [vmem:[%s192 + $0x48] sm:$0xf]
        %v2684 = vld [vmem:[%s192 + $0x4c] sm:$0xf]
        %v2685 = vld [vmem:[%s192 + $0x50] sm:$0x1]
        %v2686 = vld [vmem:[%s192 + $0x54] sm:$0xf]
        %v2687 = vld [vmem:[%s192 + $0x58] sm:$0xf]
        %v2688 = vld [vmem:[%s192 + $0x5c] sm:$0x1]
        %v2689 = vld [vmem:[%s192 + $0x60] sm:$0xf]
        %v2690 = vld [vmem:[%s192 + $0x64] sm:$0xf]
        %v2691 = vld [vmem:[%s192 + $0x68] sm:$0x1]
        %v2692 = vld [vmem:[%s192 + $0x6c] sm:$0xf]
        %v2693 = vld [vmem:[%s192 + $0x70] sm:$0xf]
        %v2694 = vld [vmem:[%s192 + $0x74] sm:$0x1]
        %v2695 = vld [vmem:[%s192 + $0x78] sm:$0xf]
        %v2696 = vld [vmem:[%s192 + $0x7c] sm:$0xf]
        %v2697 = vld [vmem:[%s192 + $0x80] sm:$0x1]
        %v2698 = vld [vmem:[%s192 + $0x84] sm:$0xf]
        %v2699 = vld [vmem:[%s192 + $0x88] sm:$0xf]
        %v2700 = vld [vmem:[%s192 + $0x8c] sm:$0x1]
        %v2701 = vld [vmem:[%s192 + $0x90] sm:$0xf]
        %v2702 = vld [vmem:[%s192 + $0x94] sm:$0xf]
        %v2703 = vld [vmem:[%s192 + $0x98] sm:$0x1]
        %v2704 = vld [vmem:[%s192 + $0x9c] sm:$0xf]
        %v2705 = vld [vmem:[%s192 + $0xa0] sm:$0xf]
        %v2706 = vld [vmem:[%s192 + $0xa4] sm:$0x1]
        %v2707 = vld [vmem:[%s192 + $0xa8] sm:$0xf]
        %v2708 = vld [vmem:[%s192 + $0xac] sm:$0xf]
        %v2709 = vld [vmem:[%s192 + $0xb0] sm:$0x1]
        %v2710 = vld [vmem:[%s192 + $0xb4] sm:$0xf]
        %v2711 = vld [vmem:[%s192 + $0xb8] sm:$0xf]
        %v2712 = vld [vmem:[%s192 + $0xbc] sm:$0x1]
        %v2714 = vshrl.u32 %v2665, 16
        %v2716 = vrot.slane %v2714, 4
        %v2717 = vshll.u32 %v2665, 16
        %v2719 = vrot.slane %v2717, 5
        %v2720 = vor.u32 %v2716, %v2719
        %v2721 = vrot.slane %v2720, 4
        %v2723 = vshll.u32 %v2666, 16
        %v2725 = vrot.slane %v2723, 5
        %v2726 = vsel %vm909, %v2721, %v2725
        %v2727 = vshrl.u32 %v2666, 16
        %v2729 = vrot.slane %v2727, 4
        %v2730 = vor.u32 %v2729, %v2725
        %v2731 = vrot.slane %v2730, 4
        %v2733 = vshll.u32 %v2667, 16
        %v2735 = vrot.slane %v2733, 5
        %v2736 = vsel %vm909, %v2731, %v2735
        %v2738 = vshrl.u32 %v2668, 16
        %v2740 = vrot.slane %v2738, 4
        %v2741 = vshll.u32 %v2668, 16
        %v2743 = vrot.slane %v2741, 5
        %v2744 = vor.u32 %v2740, %v2743
        %v2745 = vrot.slane %v2744, 4
        %v2747 = vshll.u32 %v2669, 16
        %v2749 = vrot.slane %v2747, 5
        %v2750 = vsel %vm909, %v2745, %v2749
        %v2751 = vshrl.u32 %v2669, 16
        %v2753 = vrot.slane %v2751, 4
        %v2754 = vor.u32 %v2753, %v2749
        %v2755 = vrot.slane %v2754, 4
        %v2757 = vshll.u32 %v2670, 16
        %v2759 = vrot.slane %v2757, 5
        %v2760 = vsel %vm909, %v2755, %v2759
        %v2762 = vshrl.u32 %v2671, 16
        %v2764 = vrot.slane %v2762, 4
        %v2765 = vshll.u32 %v2671, 16
        %v2767 = vrot.slane %v2765, 5
        %v2768 = vor.u32 %v2764, %v2767
        %v2769 = vrot.slane %v2768, 4
        %v2771 = vshll.u32 %v2672, 16
        %v2773 = vrot.slane %v2771, 5
        %v2774 = vsel %vm909, %v2769, %v2773
        %v2775 = vshrl.u32 %v2672, 16
        %v2777 = vrot.slane %v2775, 4
        %v2778 = vor.u32 %v2777, %v2773
        %v2779 = vrot.slane %v2778, 4
        %v2781 = vshll.u32 %v2673, 16
        %v2783 = vrot.slane %v2781, 5
        %v2784 = vsel %vm909, %v2779, %v2783
        %v2786 = vshrl.u32 %v2674, 16
        %v2788 = vrot.slane %v2786, 4
        %v2789 = vshll.u32 %v2674, 16
        %v2791 = vrot.slane %v2789, 5
        %v2792 = vor.u32 %v2788, %v2791
        %v2793 = vrot.slane %v2792, 4
        %v2795 = vshll.u32 %v2675, 16
        %v2797 = vrot.slane %v2795, 5
        %v2798 = vsel %vm909, %v2793, %v2797
        %v2799 = vshrl.u32 %v2675, 16
        %v2801 = vrot.slane %v2799, 4
        %v2802 = vor.u32 %v2801, %v2797
        %v2803 = vrot.slane %v2802, 4
        %v2805 = vshll.u32 %v2676, 16
        %v2807 = vrot.slane %v2805, 5
        %v2808 = vsel %vm909, %v2803, %v2807
        %v2810 = vshrl.u32 %v2677, 16
        %v2812 = vrot.slane %v2810, 4
        %v2813 = vshll.u32 %v2677, 16
        %v2815 = vrot.slane %v2813, 5
        %v2816 = vor.u32 %v2812, %v2815
        %v2817 = vrot.slane %v2816, 4
        %v2819 = vshll.u32 %v2678, 16
        %v2821 = vrot.slane %v2819, 5
        %v2822 = vsel %vm909, %v2817, %v2821
        %v2823 = vshrl.u32 %v2678, 16
        %v2825 = vrot.slane %v2823, 4
        %v2826 = vor.u32 %v2825, %v2821
        %v2827 = vrot.slane %v2826, 4
        %v2829 = vshll.u32 %v2679, 16
        %v2831 = vrot.slane %v2829, 5
        %v2832 = vsel %vm909, %v2827, %v2831
        %v2834 = vshrl.u32 %v2680, 16
        %v2836 = vrot.slane %v2834, 4
        %v2837 = vshll.u32 %v2680, 16
        %v2839 = vrot.slane %v2837, 5
        %v2840 = vor.u32 %v2836, %v2839
        %v2841 = vrot.slane %v2840, 4
        %v2843 = vshll.u32 %v2681, 16
        %v2845 = vrot.slane %v2843, 5
        %v2846 = vsel %vm909, %v2841, %v2845
        %v2847 = vshrl.u32 %v2681, 16
        %v2849 = vrot.slane %v2847, 4
        %v2850 = vor.u32 %v2849, %v2845
        %v2851 = vrot.slane %v2850, 4
        %v2853 = vshll.u32 %v2682, 16
        %v2855 = vrot.slane %v2853, 5
        %v2856 = vsel %vm909, %v2851, %v2855
        %v2858 = vshrl.u32 %v2683, 16
        %v2860 = vrot.slane %v2858, 4
        %v2861 = vshll.u32 %v2683, 16
        %v2863 = vrot.slane %v2861, 5
        %v2864 = vor.u32 %v2860, %v2863
        %v2865 = vrot.slane %v2864, 4
        %v2867 = vshll.u32 %v2684, 16
        %v2869 = vrot.slane %v2867, 5
        %v2870 = vsel %vm909, %v2865, %v2869
        %v2871 = vshrl.u32 %v2684, 16
        %v2873 = vrot.slane %v2871, 4
        %v2874 = vor.u32 %v2873, %v2869
        %v2875 = vrot.slane %v2874, 4
        %v2877 = vshll.u32 %v2685, 16
        %v2879 = vrot.slane %v2877, 5
        %v2880 = vsel %vm909, %v2875, %v2879
        %v2882 = vshrl.u32 %v2686, 16
        %v2884 = vrot.slane %v2882, 4
        %v2885 = vshll.u32 %v2686, 16
        %v2887 = vrot.slane %v2885, 5
        %v2888 = vor.u32 %v2884, %v2887
        %v2889 = vrot.slane %v2888, 4
        %v2891 = vshll.u32 %v2687, 16
        %v2893 = vrot.slane %v2891, 5
        %v2894 = vsel %vm909, %v2889, %v2893
        %v2895 = vshrl.u32 %v2687, 16
        %v2897 = vrot.slane %v2895, 4
        %v2898 = vor.u32 %v2897, %v2893
        %v2899 = vrot.slane %v2898, 4
        %v2901 = vshll.u32 %v2688, 16
        %v2903 = vrot.slane %v2901, 5
        %v2904 = vsel %vm909, %v2899, %v2903
        %v2906 = vshrl.u32 %v2689, 16
        %v2908 = vrot.slane %v2906, 4
        %v2909 = vshll.u32 %v2689, 16
        %v2911 = vrot.slane %v2909, 5
        %v2912 = vor.u32 %v2908, %v2911
        %v2913 = vrot.slane %v2912, 4
        %v2915 = vshll.u32 %v2690, 16
        %v2917 = vrot.slane %v2915, 5
        %v2918 = vsel %vm909, %v2913, %v2917
        %v2919 = vshrl.u32 %v2690, 16
        %v2921 = vrot.slane %v2919, 4
        %v2922 = vor.u32 %v2921, %v2917
        %v2923 = vrot.slane %v2922, 4
        %v2925 = vshll.u32 %v2691, 16
        %v2927 = vrot.slane %v2925, 5
        %v2928 = vsel %vm909, %v2923, %v2927
        %v2930 = vshrl.u32 %v2692, 16
        %v2932 = vrot.slane %v2930, 4
        %v2933 = vshll.u32 %v2692, 16
        %v2935 = vrot.slane %v2933, 5
        %v2936 = vor.u32 %v2932, %v2935
        %v2937 = vrot.slane %v2936, 4
        %v2939 = vshll.u32 %v2693, 16
        %v2941 = vrot.slane %v2939, 5
        %v2942 = vsel %vm909, %v2937, %v2941
        %v2943 = vshrl.u32 %v2693, 16
        %v2945 = vrot.slane %v2943, 4
        %v2946 = vor.u32 %v2945, %v2941
        %v2947 = vrot.slane %v2946, 4
        %v2949 = vshll.u32 %v2694, 16
        %v2951 = vrot.slane %v2949, 5
        %v2952 = vsel %vm909, %v2947, %v2951
        %v2954 = vshrl.u32 %v2695, 16
        %v2956 = vrot.slane %v2954, 4
        %v2957 = vshll.u32 %v2695, 16
        %v2959 = vrot.slane %v2957, 5
        %v2960 = vor.u32 %v2956, %v2959
        %v2961 = vrot.slane %v2960, 4
        %v2963 = vshll.u32 %v2696, 16
        %v2965 = vrot.slane %v2963, 5
        %v2966 = vsel %vm909, %v2961, %v2965
        %v2967 = vshrl.u32 %v2696, 16
        %v2969 = vrot.slane %v2967, 4
        %v2970 = vor.u32 %v2969, %v2965
        %v2971 = vrot.slane %v2970, 4
        %v2973 = vshll.u32 %v2697, 16
        %v2975 = vrot.slane %v2973, 5
        %v2976 = vsel %vm909, %v2971, %v2975
        %v2978 = vshrl.u32 %v2698, 16
        %v2980 = vrot.slane %v2978, 4
        %v2981 = vshll.u32 %v2698, 16
        %v2983 = vrot.slane %v2981, 5
        %v2984 = vor.u32 %v2980, %v2983
        %v2985 = vrot.slane %v2984, 4
        %v2987 = vshll.u32 %v2699, 16
        %v2989 = vrot.slane %v2987, 5
        %v2990 = vsel %vm909, %v2985, %v2989
        %v2991 = vshrl.u32 %v2699, 16
        %v2993 = vrot.slane %v2991, 4
        %v2994 = vor.u32 %v2993, %v2989
        %v2995 = vrot.slane %v2994, 4
        %v2997 = vshll.u32 %v2700, 16
        %v2999 = vrot.slane %v2997, 5
        %v3000 = vsel %vm909, %v2995, %v2999
        %v3002 = vshrl.u32 %v2701, 16
        %v3004 = vrot.slane %v3002, 4
        %v3005 = vshll.u32 %v2701, 16
        %v3007 = vrot.slane %v3005, 5
        %v3008 = vor.u32 %v3004, %v3007
        %v3009 = vrot.slane %v3008, 4
        %v3011 = vshll.u32 %v2702, 16
        %v3013 = vrot.slane %v3011, 5
        %v3014 = vsel %vm909, %v3009, %v3013
        %v3015 = vshrl.u32 %v2702, 16
        %v3017 = vrot.slane %v3015, 4
        %v3018 = vor.u32 %v3017, %v3013
        %v3019 = vrot.slane %v3018, 4
        %v3021 = vshll.u32 %v2703, 16
        %v3023 = vrot.slane %v3021, 5
        %v3024 = vsel %vm909, %v3019, %v3023
        %v3026 = vshrl.u32 %v2704, 16
        %v3028 = vrot.slane %v3026, 4
        %v3029 = vshll.u32 %v2704, 16
        %v3031 = vrot.slane %v3029, 5
        %v3032 = vor.u32 %v3028, %v3031
        %v3033 = vrot.slane %v3032, 4
        %v3035 = vshll.u32 %v2705, 16
        %v3037 = vrot.slane %v3035, 5
        %v3038 = vsel %vm909, %v3033, %v3037
        %v3039 = vshrl.u32 %v2705, 16
        %v3041 = vrot.slane %v3039, 4
        %v3042 = vor.u32 %v3041, %v3037
        %v3043 = vrot.slane %v3042, 4
        %v3045 = vshll.u32 %v2706, 16
        %v3047 = vrot.slane %v3045, 5
        %v3048 = vsel %vm909, %v3043, %v3047
        %v3050 = vshrl.u32 %v2707, 16
        %v3052 = vrot.slane %v3050, 4
        %v3053 = vshll.u32 %v2707, 16
        %v3055 = vrot.slane %v3053, 5
        %v3056 = vor.u32 %v3052, %v3055
        %v3057 = vrot.slane %v3056, 4
        %v3059 = vshll.u32 %v2708, 16
        %v3061 = vrot.slane %v3059, 5
        %v3062 = vsel %vm909, %v3057, %v3061
        %v3063 = vshrl.u32 %v2708, 16
        %v3065 = vrot.slane %v3063, 4
        %v3066 = vor.u32 %v3065, %v3061
        %v3067 = vrot.slane %v3066, 4
        %v3069 = vshll.u32 %v2709, 16
        %v3071 = vrot.slane %v3069, 5
        %v3072 = vsel %vm909, %v3067, %v3071
        %v3074 = vshrl.u32 %v2710, 16
        %v3076 = vrot.slane %v3074, 4
        %v3077 = vshll.u32 %v2710, 16
        %v3079 = vrot.slane %v3077, 5
        %v3080 = vor.u32 %v3076, %v3079
        %v3081 = vrot.slane %v3080, 4
        %v3083 = vshll.u32 %v2711, 16
        %v3085 = vrot.slane %v3083, 5
        %v3086 = vsel %vm909, %v3081, %v3085
        %v3087 = vshrl.u32 %v2711, 16
        %v3089 = vrot.slane %v3087, 4
        %v3090 = vor.u32 %v3089, %v3085
        %v3091 = vrot.slane %v3090, 4
        %v3093 = vshll.u32 %v2712, 16
        %v3095 = vrot.slane %v3093, 5
        %v3096 = vsel %vm909, %v3091, %v3095
        %s3097 = scalar_lea.vmem %s1, 8
        %v3098 = vld [vmem:[%s3097] sm:$0x3]
        %v3099 = vunpack.c.l.b16 %v2726
        %v3100 = vunpack.c.l.b16 %v2736
        %v3101 = vunpack.c.l.b16 %v2750
        %v3102 = vunpack.c.l.b16 %v2760
        %v3103 = vunpack.c.l.b16 %v2774
        %v3104 = vunpack.c.l.b16 %v2784
        %v3105 = vunpack.c.l.b16 %v2798
        %v3106 = vunpack.c.l.b16 %v2808
        %v3107 = vunpack.c.l.b16 %v2822
        %v3108 = vunpack.c.l.b16 %v2832
        %v3109 = vunpack.c.l.b16 %v2846
        %v3110 = vunpack.c.l.b16 %v2856
        %v3111 = vunpack.c.l.b16 %v2870
        %v3112 = vunpack.c.l.b16 %v2880
        %v3113 = vunpack.c.l.b16 %v2894
        %v3114 = vunpack.c.l.b16 %v2904
        %v3115 = vunpack.c.l.b16 %v2918
        %v3116 = vunpack.c.l.b16 %v2928
        %v3117 = vunpack.c.l.b16 %v2942
        %v3118 = vunpack.c.l.b16 %v2952
        %v3119 = vunpack.c.l.b16 %v2966
        %v3120 = vunpack.c.l.b16 %v2976
        %v3121 = vunpack.c.l.b16 %v2990
        %v3122 = vunpack.c.l.b16 %v3000
        %v3123 = vunpack.c.l.b16 %v3014
        %v3124 = vunpack.c.l.b16 %v3024
        %v3125 = vunpack.c.l.b16 %v3038
        %v3126 = vunpack.c.l.b16 %v3048
        %v3127 = vunpack.c.l.b16 %v3062
        %v3128 = vunpack.c.l.b16 %v3072
        %v3129 = vunpack.c.l.b16 %v3086
        %v3130 = vunpack.c.l.b16 %v3096
        %v3131 = vpack.c.b16 %v3100, %v3099
        %v3132 = vpack.c.b16 %v3102, %v3101
        %v3133 = vpack.c.b16 %v3104, %v3103
        %v3134 = vpack.c.b16 %v3106, %v3105
        %v3135 = vpack.c.b16 %v3108, %v3107
        %v3136 = vpack.c.b16 %v3110, %v3109
        %v3137 = vpack.c.b16 %v3112, %v3111
        %v3138 = vpack.c.b16 %v3114, %v3113
        %v3139 = vpack.c.b16 %v3116, %v3115
        %v3140 = vpack.c.b16 %v3118, %v3117
        %v3141 = vpack.c.b16 %v3120, %v3119
        %v3142 = vpack.c.b16 %v3122, %v3121
        %v3143 = vpack.c.b16 %v3124, %v3123
        %v3144 = vpack.c.b16 %v3126, %v3125
        %v3145 = vpack.c.b16 %v3128, %v3127
        %v3146 = vpack.c.b16 %v3130, %v3129
        %v3148 = vsel %vm1344, %v3131, 0
        %v3151 = vsel %vm1344, %v3132, 0
        %v3154 = vsel %vm1344, %v3133, 0
        %v3157 = vsel %vm1344, %v3134, 0
        %v3160 = vsel %vm1344, %v3135, 0
        %v3163 = vsel %vm1344, %v3136, 0
        %v3166 = vsel %vm1344, %v3137, 0
        %v3169 = vsel %vm1344, %v3138, 0
        %v3172 = vsel %vm1344, %v3139, 0
        %v3175 = vsel %vm1344, %v3140, 0
        %v3178 = vsel %vm1344, %v3141, 0
        %v3181 = vsel %vm1344, %v3142, 0
        %v3184 = vsel %vm1344, %v3143, 0
        %v3187 = vsel %vm1344, %v3144, 0
        %v3190 = vsel %vm1344, %v3145, 0
        %v3193 = vsel %vm1344, %v3146, 0
        %v3196 = vsel %vm1393, %v3098, 0
        %3198 = vmatprep.subr.bf16.mxu0 0
        %3199 = vmatpush1.bf16.msra.mxu0 %v3196
        %3200 = vmatprep.subr.bf16.mxu0 0
        %3201 = vmatpush1.bf16.msra.mxu0 0
        %3202 = vmatprep.subr.bf16.mxu0 0
        %3203 = vmatpush1.bf16.msra.mxu0 0
        %3204 = vmatprep.subr.bf16.mxu0 0
        %3205 = vmatpush1.bf16.msra.mxu0 0
        %3206 = vmatprep.subr.bf16.mxu0 0
        %3207 = vmatpush1.bf16.msra.mxu0 0
        %3208 = vmatprep.subr.bf16.mxu0 0
        %3209 = vmatpush1.bf16.msra.mxu0 0
        %3210 = vmatprep.subr.bf16.mxu0 0
        %3211 = vmatpush1.bf16.msra.mxu0 0
        %3212 = vmatprep.subr.bf16.mxu0 0
        %3213 = vmatpush1.bf16.msra.mxu0 0
        %3214 = vmatprep.subr.bf16.mxu0 0
        %3215 = vmatpush1.bf16.msra.mxu0 0
        %3216 = vmatprep.subr.bf16.mxu0 0
        %3217 = vmatpush1.bf16.msra.mxu0 0
        %3218 = vmatprep.subr.bf16.mxu0 0
        %3219 = vmatpush1.bf16.msra.mxu0 0
        %3220 = vmatprep.subr.bf16.mxu0 0
        %3221 = vmatpush1.bf16.msra.mxu0 0
        %3222 = vmatprep.subr.bf16.mxu0 0
        %3223 = vmatpush1.bf16.msra.mxu0 0
        %3224 = vmatprep.subr.bf16.mxu0 0
        %3225 = vmatpush1.bf16.msra.mxu0 0
        %3226 = vmatprep.subr.bf16.mxu0 0
        %3227 = vmatpush1.bf16.msra.mxu0 0
        %3228 = vmatprep.subr.bf16.mxu0 0
        %3229 = vmatpush1.bf16.msra.mxu0 0
        %3230 = vmatprep.mubr.bf16.mxu0 0
        %3231 = vmatmul.mubr.bf16.gmra.mrb[0].mxu0 %v3148
        %v3232 = vpop.f32.mrb[0].mxu0
        %v3233 = vadd.f32 0.0, %v3232
        %v3234 = vpop.f32.mrb[0].mxu0
        %v3235 = vpop.f32.mrb[0].mxu0
        %v3236 = vadd.f32 0.0, %v3235
        %v3237 = vpop.f32.mrb[0].mxu0
        %3238 = vmatprep.mubr.bf16.mxu0 0
        %3239 = vmatmul.mubr.bf16.gmra.mrb[0].mxu0 %v3151
        %v3240 = vpop.f32.mrb[0].mxu0
        %v3241 = vadd.f32 0.0, %v3240
        %v3242 = vpop.f32.mrb[0].mxu0
        %v3243 = vpop.f32.mrb[0].mxu0
        %v3244 = vadd.f32 0.0, %v3243
        %v3245 = vpop.f32.mrb[0].mxu0
        %3246 = vmatprep.mubr.bf16.mxu0 0
        %3247 = vmatmul.mubr.bf16.gmra.mrb[0].mxu0 %v3154
        %v3248 = vpop.f32.mrb[0].mxu0
        %v3249 = vadd.f32 0.0, %v3248
        %v3250 = vpop.f32.mrb[0].mxu0
        %v3251 = vpop.f32.mrb[0].mxu0
        %v3252 = vadd.f32 0.0, %v3251
        %v3253 = vpop.f32.mrb[0].mxu0
        %3254 = vmatprep.mubr.bf16.mxu0 0
        %3255 = vmatmul.mubr.bf16.gmra.mrb[0].mxu0 %v3157
        %v3256 = vpop.f32.mrb[0].mxu0
        %v3257 = vadd.f32 0.0, %v3256
        %v3258 = vpop.f32.mrb[0].mxu0
        %v3259 = vpop.f32.mrb[0].mxu0
        %v3260 = vadd.f32 0.0, %v3259
        %v3261 = vpop.f32.mrb[0].mxu0
        %3262 = vmatprep.mubr.bf16.mxu0 0
        %3263 = vmatmul.mubr.bf16.gmra.mrb[0].mxu0 %v3160
        %v3264 = vpop.f32.mrb[0].mxu0
        %v3265 = vadd.f32 0.0, %v3264
        %v3266 = vpop.f32.mrb[0].mxu0
        %v3267 = vpop.f32.mrb[0].mxu0
        %v3268 = vadd.f32 0.0, %v3267
        %v3269 = vpop.f32.mrb[0].mxu0
        %3270 = vmatprep.mubr.bf16.mxu0 0
        %3271 = vmatmul.mubr.bf16.gmra.mrb[0].mxu0 %v3163
        %v3272 = vpop.f32.mrb[0].mxu0
        %v3273 = vadd.f32 0.0, %v3272
        %v3274 = vpop.f32.mrb[0].mxu0
        %v3275 = vpop.f32.mrb[0].mxu0
        %v3276 = vadd.f32 0.0, %v3275
        %v3277 = vpop.f32.mrb[0].mxu0
        %3278 = vmatprep.mubr.bf16.mxu0 0
        %3279 = vmatmul.mubr.bf16.gmra.mrb[0].mxu0 %v3166
        %v3280 = vpop.f32.mrb[0].mxu0
        %v3281 = vadd.f32 0.0, %v3280
        %v3282 = vpop.f32.mrb[0].mxu0
        %v3283 = vpop.f32.mrb[0].mxu0
        %v3284 = vadd.f32 0.0, %v3283
        %v3285 = vpop.f32.mrb[0].mxu0
        %3286 = vmatprep.mubr.bf16.mxu0 0
        %3287 = vmatmul.mubr.bf16.gmra.mrb[0].mxu0 %v3169
        %v3288 = vpop.f32.mrb[0].mxu0
        %v3289 = vadd.f32 0.0, %v3288
        %v3290 = vpop.f32.mrb[0].mxu0
        %v3291 = vpop.f32.mrb[0].mxu0
        %v3292 = vadd.f32 0.0, %v3291
        %v3293 = vpop.f32.mrb[0].mxu0
        %3294 = vmatprep.mubr.bf16.mxu0 0
        %3295 = vmatmul.mubr.bf16.gmra.mrb[0].mxu0 %v3172
        %v3296 = vpop.f32.mrb[0].mxu0
        %v3297 = vadd.f32 0.0, %v3296
        %v3298 = vpop.f32.mrb[0].mxu0
        %v3299 = vpop.f32.mrb[0].mxu0
        %v3300 = vadd.f32 0.0, %v3299
        %v3301 = vpop.f32.mrb[0].mxu0
        %3302 = vmatprep.mubr.bf16.mxu0 0
        %3303 = vmatmul.mubr.bf16.gmra.mrb[0].mxu0 %v3175
        %v3304 = vpop.f32.mrb[0].mxu0
        %v3305 = vadd.f32 0.0, %v3304
        %v3306 = vpop.f32.mrb[0].mxu0
        %v3307 = vpop.f32.mrb[0].mxu0
        %v3308 = vadd.f32 0.0, %v3307
        %v3309 = vpop.f32.mrb[0].mxu0
        %3310 = vmatprep.mubr.bf16.mxu0 0
        %3311 = vmatmul.mubr.bf16.gmra.mrb[0].mxu0 %v3178
        %v3312 = vpop.f32.mrb[0].mxu0
        %v3313 = vadd.f32 0.0, %v3312
        %v3314 = vpop.f32.mrb[0].mxu0
        %v3315 = vpop.f32.mrb[0].mxu0
        %v3316 = vadd.f32 0.0, %v3315
        %v3317 = vpop.f32.mrb[0].mxu0
        %3318 = vmatprep.mubr.bf16.mxu0 0
        %3319 = vmatmul.mubr.bf16.gmra.mrb[0].mxu0 %v3181
        %v3320 = vpop.f32.mrb[0].mxu0
        %v3321 = vadd.f32 0.0, %v3320
        %v3322 = vpop.f32.mrb[0].mxu0
        %v3323 = vpop.f32.mrb[0].mxu0
        %v3324 = vadd.f32 0.0, %v3323
        %v3325 = vpop.f32.mrb[0].mxu0
        %3326 = vmatprep.mubr.bf16.mxu0 0
        %3327 = vmatmul.mubr.bf16.gmra.mrb[0].mxu0 %v3184
        %v3328 = vpop.f32.mrb[0].mxu0
        %v3329 = vadd.f32 0.0, %v3328
        %v3330 = vpop.f32.mrb[0].mxu0
        %v3331 = vpop.f32.mrb[0].mxu0
        %v3332 = vadd.f32 0.0, %v3331
        %v3333 = vpop.f32.mrb[0].mxu0
        %3334 = vmatprep.mubr.bf16.mxu0 0
        %3335 = vmatmul.mubr.bf16.gmra.mrb[0].mxu0 %v3187
        %v3336 = vpop.f32.mrb[0].mxu0
        %v3337 = vadd.f32 0.0, %v3336
        %v3338 = vpop.f32.mrb[0].mxu0
        %v3339 = vpop.f32.mrb[0].mxu0
        %v3340 = vadd.f32 0.0, %v3339
        %v3341 = vpop.f32.mrb[0].mxu0
        %3342 = vmatprep.mubr.bf16.mxu0 0
        %3343 = vmatmul.mubr.bf16.gmra.mrb[0].mxu0 %v3190
        %v3344 = vpop.f32.mrb[0].mxu0
        %v3345 = vadd.f32 0.0, %v3344
        %v3346 = vpop.f32.mrb[0].mxu0
        %v3347 = vpop.f32.mrb[0].mxu0
        %v3348 = vadd.f32 0.0, %v3347
        %v3349 = vpop.f32.mrb[0].mxu0
        %3350 = vmatprep.mubr.bf16.mxu0 0
        %3351 = vmatmul.mubr.bf16.gmra.mrb[0].mxu0 %v3193
        %v3352 = vpop.f32.mrb[0].mxu0
        %v3353 = vadd.f32 0.0, %v3352
        %v3354 = vpop.f32.mrb[0].mxu0
        %v3355 = vpop.f32.mrb[0].mxu0
        %v3356 = vadd.f32 0.0, %v3355
        %v3357 = vpop.f32.mrb[0].mxu0
        %3358 = vdwg.mxu0
        %v3359 = vadd.f32 %v2633, %v3233
        %v3360 = vadd.f32 %v2634, %v3236
        %v3361 = vadd.f32 %v2635, %v3241
        %v3362 = vadd.f32 %v2636, %v3244
        %v3363 = vadd.f32 %v2637, %v3249
        %v3364 = vadd.f32 %v2638, %v3252
        %v3365 = vadd.f32 %v2639, %v3257
        %v3366 = vadd.f32 %v2640, %v3260
        %v3367 = vadd.f32 %v2641, %v3265
        %v3368 = vadd.f32 %v2642, %v3268
        %v3369 = vadd.f32 %v2643, %v3273
        %v3370 = vadd.f32 %v2644, %v3276
        %v3371 = vadd.f32 %v2645, %v3281
        %v3372 = vadd.f32 %v2646, %v3284
        %v3373 = vadd.f32 %v2647, %v3289
        %v3374 = vadd.f32 %v2648, %v3292
        %v3375 = vadd.f32 %v2649, %v3297
        %v3376 = vadd.f32 %v2650, %v3300
        %v3377 = vadd.f32 %v2651, %v3305
        %v3378 = vadd.f32 %v2652, %v3308
        %v3379 = vadd.f32 %v2653, %v3313
        %v3380 = vadd.f32 %v2654, %v3316
        %v3381 = vadd.f32 %v2655, %v3321
        %v3382 = vadd.f32 %v2656, %v3324
        %v3383 = vadd.f32 %v2657, %v3329
        %v3384 = vadd.f32 %v2658, %v3332
        %v3385 = vadd.f32 %v2659, %v3337
        %v3386 = vadd.f32 %v2660, %v3340
        %v3387 = vadd.f32 %v2661, %v3345
        %v3388 = vadd.f32 %v2662, %v3348
        %v3389 = vadd.f32 %v2663, %v3353
        %v3390 = vadd.f32 %v2664, %v3356
        %v3391 = vld [vmem:[%s192] sm:$0xe]
        %v3392 = vld [vmem:[%s192 + $0xc] sm:$0xe]
        %v3393 = vld [vmem:[%s192 + $0x18] sm:$0xe]
        %v3394 = vld [vmem:[%s192 + $0x24] sm:$0xe]
        %v3395 = vld [vmem:[%s192 + $0x30] sm:$0xe]
        %v3396 = vld [vmem:[%s192 + $0x3c] sm:$0xe]
        %v3397 = vld [vmem:[%s192 + $0x48] sm:$0xe]
        %v3398 = vld [vmem:[%s192 + $0x54] sm:$0xe]
        %v3399 = vld [vmem:[%s192 + $0x60] sm:$0xe]
        %v3400 = vld [vmem:[%s192 + $0x6c] sm:$0xe]
        %v3401 = vld [vmem:[%s192 + $0x78] sm:$0xe]
        %v3402 = vld [vmem:[%s192 + $0x84] sm:$0xe]
        %v3403 = vld [vmem:[%s192 + $0x90] sm:$0xe]
        %v3404 = vld [vmem:[%s192 + $0x9c] sm:$0xe]
        %v3405 = vld [vmem:[%s192 + $0xa8] sm:$0xe]
        %v3406 = vld [vmem:[%s192 + $0xb4] sm:$0xe]
        %v3455 = vrot.slane %v3391, 5
        %v3456 = vrot.slane %v3455, 4
        %v3457 = vrot.slane %v2666, 5
        %v3458 = vsel %vm1900, %v3456, %v3457
        %v3459 = vrot.slane %v3457, 4
        %v3460 = vrot.slane %v2667, 5
        %v3461 = vsel %vm1900, %v3459, %v3460
        %v3462 = vrot.slane %v3392, 5
        %v3463 = vrot.slane %v3462, 4
        %v3464 = vrot.slane %v2669, 5
        %v3465 = vsel %vm1900, %v3463, %v3464
        %v3466 = vrot.slane %v3464, 4
        %v3467 = vrot.slane %v2670, 5
        %v3468 = vsel %vm1900, %v3466, %v3467
        %v3469 = vrot.slane %v3393, 5
        %v3470 = vrot.slane %v3469, 4
        %v3471 = vrot.slane %v2672, 5
        %v3472 = vsel %vm1900, %v3470, %v3471
        %v3473 = vrot.slane %v3471, 4
        %v3474 = vrot.slane %v2673, 5
        %v3475 = vsel %vm1900, %v3473, %v3474
        %v3476 = vrot.slane %v3394, 5
        %v3477 = vrot.slane %v3476, 4
        %v3478 = vrot.slane %v2675, 5
        %v3479 = vsel %vm1900, %v3477, %v3478
        %v3480 = vrot.slane %v3478, 4
        %v3481 = vrot.slane %v2676, 5
        %v3482 = vsel %vm1900, %v3480, %v3481
        %v3483 = vrot.slane %v3395, 5
        %v3484 = vrot.slane %v3483, 4
        %v3485 = vrot.slane %v2678, 5
        %v3486 = vsel %vm1900, %v3484, %v3485
        %v3487 = vrot.slane %v3485, 4
        %v3488 = vrot.slane %v2679, 5
        %v3489 = vsel %vm1900, %v3487, %v3488
        %v3490 = vrot.slane %v3396, 5
        %v3491 = vrot.slane %v3490, 4
        %v3492 = vrot.slane %v2681, 5
        %v3493 = vsel %vm1900, %v3491, %v3492
        %v3494 = vrot.slane %v3492, 4
        %v3495 = vrot.slane %v2682, 5
        %v3496 = vsel %vm1900, %v3494, %v3495
        %v3497 = vrot.slane %v3397, 5
        %v3498 = vrot.slane %v3497, 4
        %v3499 = vrot.slane %v2684, 5
        %v3500 = vsel %vm1900, %v3498, %v3499
        %v3501 = vrot.slane %v3499, 4
        %v3502 = vrot.slane %v2685, 5
        %v3503 = vsel %vm1900, %v3501, %v3502
        %v3504 = vrot.slane %v3398, 5
        %v3505 = vrot.slane %v3504, 4
        %v3506 = vrot.slane %v2687, 5
        %v3507 = vsel %vm1900, %v3505, %v3506
        %v3508 = vrot.slane %v3506, 4
        %v3509 = vrot.slane %v2688, 5
        %v3510 = vsel %vm1900, %v3508, %v3509
        %v3511 = vrot.slane %v3399, 5
        %v3512 = vrot.slane %v3511, 4
        %v3513 = vrot.slane %v2690, 5
        %v3514 = vsel %vm1900, %v3512, %v3513
        %v3515 = vrot.slane %v3513, 4
        %v3516 = vrot.slane %v2691, 5
        %v3517 = vsel %vm1900, %v3515, %v3516
        %v3518 = vrot.slane %v3400, 5
        %v3519 = vrot.slane %v3518, 4
        %v3520 = vrot.slane %v2693, 5
        %v3521 = vsel %vm1900, %v3519, %v3520
        %v3522 = vrot.slane %v3520, 4
        %v3523 = vrot.slane %v2694, 5
        %v3524 = vsel %vm1900, %v3522, %v3523
        %v3525 = vrot.slane %v3401, 5
        %v3526 = vrot.slane %v3525, 4
        %v3527 = vrot.slane %v2696, 5
        %v3528 = vsel %vm1900, %v3526, %v3527
        %v3529 = vrot.slane %v3527, 4
        %v3530 = vrot.slane %v2697, 5
        %v3531 = vsel %vm1900, %v3529, %v3530
        %v3532 = vrot.slane %v3402, 5
        %v3533 = vrot.slane %v3532, 4
        %v3534 = vrot.slane %v2699, 5
        %v3535 = vsel %vm1900, %v3533, %v3534
        %v3536 = vrot.slane %v3534, 4
        %v3537 = vrot.slane %v2700, 5
        %v3538 = vsel %vm1900, %v3536, %v3537
        %v3539 = vrot.slane %v3403, 5
        %v3540 = vrot.slane %v3539, 4
        %v3541 = vrot.slane %v2702, 5
        %v3542 = vsel %vm1900, %v3540, %v3541
        %v3543 = vrot.slane %v3541, 4
        %v3544 = vrot.slane %v2703, 5
        %v3545 = vsel %vm1900, %v3543, %v3544
        %v3546 = vrot.slane %v3404, 5
        %v3547 = vrot.slane %v3546, 4
        %v3548 = vrot.slane %v2705, 5
        %v3549 = vsel %vm1900, %v3547, %v3548
        %v3550 = vrot.slane %v3548, 4
        %v3551 = vrot.slane %v2706, 5
        %v3552 = vsel %vm1900, %v3550, %v3551
        %v3553 = vrot.slane %v3405, 5
        %v3554 = vrot.slane %v3553, 4
        %v3555 = vrot.slane %v2708, 5
        %v3556 = vsel %vm1900, %v3554, %v3555
        %v3557 = vrot.slane %v3555, 4
        %v3558 = vrot.slane %v2709, 5
        %v3559 = vsel %vm1900, %v3557, %v3558
        %v3560 = vrot.slane %v3406, 5
        %v3561 = vrot.slane %v3560, 4
        %v3562 = vrot.slane %v2711, 5
        %v3563 = vsel %vm1900, %v3561, %v3562
        %v3564 = vrot.slane %v3562, 4
        %v3565 = vrot.slane %v2712, 5
        %v3566 = vsel %vm1900, %v3564, %v3565
        %s3567 = scalar_lea.vmem %s1, 10
        %v3568 = vld [vmem:[%s3567] sm:$0x3]
        %v3569 = vunpack.c.l.b16 %v3458
        %v3570 = vunpack.c.l.b16 %v3461
        %v3571 = vunpack.c.l.b16 %v3465
        %v3572 = vunpack.c.l.b16 %v3468
        %v3573 = vunpack.c.l.b16 %v3472
        %v3574 = vunpack.c.l.b16 %v3475
        %v3575 = vunpack.c.l.b16 %v3479
        %v3576 = vunpack.c.l.b16 %v3482
        %v3577 = vunpack.c.l.b16 %v3486
        %v3578 = vunpack.c.l.b16 %v3489
        %v3579 = vunpack.c.l.b16 %v3493
        %v3580 = vunpack.c.l.b16 %v3496
        %v3581 = vunpack.c.l.b16 %v3500
        %v3582 = vunpack.c.l.b16 %v3503
        %v3583 = vunpack.c.l.b16 %v3507
        %v3584 = vunpack.c.l.b16 %v3510
        %v3585 = vunpack.c.l.b16 %v3514
        %v3586 = vunpack.c.l.b16 %v3517
        %v3587 = vunpack.c.l.b16 %v3521
        %v3588 = vunpack.c.l.b16 %v3524
        %v3589 = vunpack.c.l.b16 %v3528
        %v3590 = vunpack.c.l.b16 %v3531
        %v3591 = vunpack.c.l.b16 %v3535
        %v3592 = vunpack.c.l.b16 %v3538
        %v3593 = vunpack.c.l.b16 %v3542
        %v3594 = vunpack.c.l.b16 %v3545
        %v3595 = vunpack.c.l.b16 %v3549
        %v3596 = vunpack.c.l.b16 %v3552
        %v3597 = vunpack.c.l.b16 %v3556
        %v3598 = vunpack.c.l.b16 %v3559
        %v3599 = vunpack.c.l.b16 %v3563
        %v3600 = vunpack.c.l.b16 %v3566
        %v3601 = vpack.c.b16 %v3570, %v3569
        %v3602 = vpack.c.b16 %v3572, %v3571
        %v3603 = vpack.c.b16 %v3574, %v3573
        %v3604 = vpack.c.b16 %v3576, %v3575
        %v3605 = vpack.c.b16 %v3578, %v3577
        %v3606 = vpack.c.b16 %v3580, %v3579
        %v3607 = vpack.c.b16 %v3582, %v3581
        %v3608 = vpack.c.b16 %v3584, %v3583
        %v3609 = vpack.c.b16 %v3586, %v3585
        %v3610 = vpack.c.b16 %v3588, %v3587
        %v3611 = vpack.c.b16 %v3590, %v3589
        %v3612 = vpack.c.b16 %v3592, %v3591
        %v3613 = vpack.c.b16 %v3594, %v3593
        %v3614 = vpack.c.b16 %v3596, %v3595
        %v3615 = vpack.c.b16 %v3598, %v3597
        %v3616 = vpack.c.b16 %v3600, %v3599
        %v3618 = vsel %vm1344, %v3601, 0
        %v3621 = vsel %vm1344, %v3602, 0
        %v3624 = vsel %vm1344, %v3603, 0
        %v3627 = vsel %vm1344, %v3604, 0
        %v3630 = vsel %vm1344, %v3605, 0
        %v3633 = vsel %vm1344, %v3606, 0
        %v3636 = vsel %vm1344, %v3607, 0
        %v3639 = vsel %vm1344, %v3608, 0
        %v3642 = vsel %vm1344, %v3609, 0
        %v3645 = vsel %vm1344, %v3610, 0
        %v3648 = vsel %vm1344, %v3611, 0
        %v3651 = vsel %vm1344, %v3612, 0
        %v3654 = vsel %vm1344, %v3613, 0
        %v3657 = vsel %vm1344, %v3614, 0
        %v3660 = vsel %vm1344, %v3615, 0
        %v3663 = vsel %vm1344, %v3616, 0
        %v3666 = vsel %vm1393, %v3568, 0
        %3668 = vmatprep.subr.bf16.mxu0 0
        %3669 = vmatpush1.bf16.msra.mxu0 %v3666
        %3670 = vmatprep.subr.bf16.mxu0 0
        %3671 = vmatpush1.bf16.msra.mxu0 0
        %3672 = vmatprep.subr.bf16.mxu0 0
        %3673 = vmatpush1.bf16.msra.mxu0 0
        %3674 = vmatprep.subr.bf16.mxu0 0
        %3675 = vmatpush1.bf16.msra.mxu0 0
        %3676 = vmatprep.subr.bf16.mxu0 0
        %3677 = vmatpush1.bf16.msra.mxu0 0
        %3678 = vmatprep.subr.bf16.mxu0 0
        %3679 = vmatpush1.bf16.msra.mxu0 0
        %3680 = vmatprep.subr.bf16.mxu0 0
        %3681 = vmatpush1.bf16.msra.mxu0 0
        %3682 = vmatprep.subr.bf16.mxu0 0
        %3683 = vmatpush1.bf16.msra.mxu0 0
        %3684 = vmatprep.subr.bf16.mxu0 0
        %3685 = vmatpush1.bf16.msra.mxu0 0
        %3686 = vmatprep.subr.bf16.mxu0 0
        %3687 = vmatpush1.bf16.msra.mxu0 0
        %3688 = vmatprep.subr.bf16.mxu0 0
        %3689 = vmatpush1.bf16.msra.mxu0 0
        %3690 = vmatprep.subr.bf16.mxu0 0
        %3691 = vmatpush1.bf16.msra.mxu0 0
        %3692 = vmatprep.subr.bf16.mxu0 0
        %3693 = vmatpush1.bf16.msra.mxu0 0
        %3694 = vmatprep.subr.bf16.mxu0 0
        %3695 = vmatpush1.bf16.msra.mxu0 0
        %3696 = vmatprep.subr.bf16.mxu0 0
        %3697 = vmatpush1.bf16.msra.mxu0 0
        %3698 = vmatprep.subr.bf16.mxu0 0
        %3699 = vmatpush1.bf16.msra.mxu0 0
        %3700 = vmatprep.mubr.bf16.mxu0 0
        %3701 = vmatmul.mubr.bf16.gmra.mrb[0].mxu0 %v3618
        %v3702 = vpop.f32.mrb[0].mxu0
        %v3703 = vadd.f32 0.0, %v3702
        %v3704 = vpop.f32.mrb[0].mxu0
        %v3705 = vpop.f32.mrb[0].mxu0
        %v3706 = vadd.f32 0.0, %v3705
        %v3707 = vpop.f32.mrb[0].mxu0
        %3708 = vmatprep.mubr.bf16.mxu0 0
        %3709 = vmatmul.mubr.bf16.gmra.mrb[0].mxu0 %v3621
        %v3710 = vpop.f32.mrb[0].mxu0
        %v3711 = vadd.f32 0.0, %v3710
        %v3712 = vpop.f32.mrb[0].mxu0
        %v3713 = vpop.f32.mrb[0].mxu0
        %v3714 = vadd.f32 0.0, %v3713
        %v3715 = vpop.f32.mrb[0].mxu0
        %3716 = vmatprep.mubr.bf16.mxu0 0
        %3717 = vmatmul.mubr.bf16.gmra.mrb[0].mxu0 %v3624
        %v3718 = vpop.f32.mrb[0].mxu0
        %v3719 = vadd.f32 0.0, %v3718
        %v3720 = vpop.f32.mrb[0].mxu0
        %v3721 = vpop.f32.mrb[0].mxu0
        %v3722 = vadd.f32 0.0, %v3721
        %v3723 = vpop.f32.mrb[0].mxu0
        %3724 = vmatprep.mubr.bf16.mxu0 0
        %3725 = vmatmul.mubr.bf16.gmra.mrb[0].mxu0 %v3627
        %v3726 = vpop.f32.mrb[0].mxu0
        %v3727 = vadd.f32 0.0, %v3726
        %v3728 = vpop.f32.mrb[0].mxu0
        %v3729 = vpop.f32.mrb[0].mxu0
        %v3730 = vadd.f32 0.0, %v3729
        %v3731 = vpop.f32.mrb[0].mxu0
        %3732 = vmatprep.mubr.bf16.mxu0 0
        %3733 = vmatmul.mubr.bf16.gmra.mrb[0].mxu0 %v3630
        %v3734 = vpop.f32.mrb[0].mxu0
        %v3735 = vadd.f32 0.0, %v3734
        %v3736 = vpop.f32.mrb[0].mxu0
        %v3737 = vpop.f32.mrb[0].mxu0
        %v3738 = vadd.f32 0.0, %v3737
        %v3739 = vpop.f32.mrb[0].mxu0
        %3740 = vmatprep.mubr.bf16.mxu0 0
        %3741 = vmatmul.mubr.bf16.gmra.mrb[0].mxu0 %v3633
        %v3742 = vpop.f32.mrb[0].mxu0
        %v3743 = vadd.f32 0.0, %v3742
        %v3744 = vpop.f32.mrb[0].mxu0
        %v3745 = vpop.f32.mrb[0].mxu0
        %v3746 = vadd.f32 0.0, %v3745
        %v3747 = vpop.f32.mrb[0].mxu0
        %3748 = vmatprep.mubr.bf16.mxu0 0
        %3749 = vmatmul.mubr.bf16.gmra.mrb[0].mxu0 %v3636
        %v3750 = vpop.f32.mrb[0].mxu0
        %v3751 = vadd.f32 0.0, %v3750
        %v3752 = vpop.f32.mrb[0].mxu0
        %v3753 = vpop.f32.mrb[0].mxu0
        %v3754 = vadd.f32 0.0, %v3753
        %v3755 = vpop.f32.mrb[0].mxu0
        %3756 = vmatprep.mubr.bf16.mxu0 0
        %3757 = vmatmul.mubr.bf16.gmra.mrb[0].mxu0 %v3639
        %v3758 = vpop.f32.mrb[0].mxu0
        %v3759 = vadd.f32 0.0, %v3758
        %v3760 = vpop.f32.mrb[0].mxu0
        %v3761 = vpop.f32.mrb[0].mxu0
        %v3762 = vadd.f32 0.0, %v3761
        %v3763 = vpop.f32.mrb[0].mxu0
        %3764 = vmatprep.mubr.bf16.mxu0 0
        %3765 = vmatmul.mubr.bf16.gmra.mrb[0].mxu0 %v3642
        %v3766 = vpop.f32.mrb[0].mxu0
        %v3767 = vadd.f32 0.0, %v3766
        %v3768 = vpop.f32.mrb[0].mxu0
        %v3769 = vpop.f32.mrb[0].mxu0
        %v3770 = vadd.f32 0.0, %v3769
        %v3771 = vpop.f32.mrb[0].mxu0
        %3772 = vmatprep.mubr.bf16.mxu0 0
        %3773 = vmatmul.mubr.bf16.gmra.mrb[0].mxu0 %v3645
        %v3774 = vpop.f32.mrb[0].mxu0
        %v3775 = vadd.f32 0.0, %v3774
        %v3776 = vpop.f32.mrb[0].mxu0
        %v3777 = vpop.f32.mrb[0].mxu0
        %v3778 = vadd.f32 0.0, %v3777
        %v3779 = vpop.f32.mrb[0].mxu0
        %3780 = vmatprep.mubr.bf16.mxu0 0
        %3781 = vmatmul.mubr.bf16.gmra.mrb[0].mxu0 %v3648
        %v3782 = vpop.f32.mrb[0].mxu0
        %v3783 = vadd.f32 0.0, %v3782
        %v3784 = vpop.f32.mrb[0].mxu0
        %v3785 = vpop.f32.mrb[0].mxu0
        %v3786 = vadd.f32 0.0, %v3785
        %v3787 = vpop.f32.mrb[0].mxu0
        %3788 = vmatprep.mubr.bf16.mxu0 0
        %3789 = vmatmul.mubr.bf16.gmra.mrb[0].mxu0 %v3651
        %v3790 = vpop.f32.mrb[0].mxu0
        %v3791 = vadd.f32 0.0, %v3790
        %v3792 = vpop.f32.mrb[0].mxu0
        %v3793 = vpop.f32.mrb[0].mxu0
        %v3794 = vadd.f32 0.0, %v3793
        %v3795 = vpop.f32.mrb[0].mxu0
        %3796 = vmatprep.mubr.bf16.mxu0 0
        %3797 = vmatmul.mubr.bf16.gmra.mrb[0].mxu0 %v3654
        %v3798 = vpop.f32.mrb[0].mxu0
        %v3799 = vadd.f32 0.0, %v3798
        %v3800 = vpop.f32.mrb[0].mxu0
        %v3801 = vpop.f32.mrb[0].mxu0
        %v3802 = vadd.f32 0.0, %v3801
        %v3803 = vpop.f32.mrb[0].mxu0
        %3804 = vmatprep.mubr.bf16.mxu0 0
        %3805 = vmatmul.mubr.bf16.gmra.mrb[0].mxu0 %v3657
        %v3806 = vpop.f32.mrb[0].mxu0
        %v3807 = vadd.f32 0.0, %v3806
        %v3808 = vpop.f32.mrb[0].mxu0
        %v3809 = vpop.f32.mrb[0].mxu0
        %v3810 = vadd.f32 0.0, %v3809
        %v3811 = vpop.f32.mrb[0].mxu0
        %3812 = vmatprep.mubr.bf16.mxu0 0
        %3813 = vmatmul.mubr.bf16.gmra.mrb[0].mxu0 %v3660
        %v3814 = vpop.f32.mrb[0].mxu0
        %v3815 = vadd.f32 0.0, %v3814
        %v3816 = vpop.f32.mrb[0].mxu0
        %v3817 = vpop.f32.mrb[0].mxu0
        %v3818 = vadd.f32 0.0, %v3817
        %v3819 = vpop.f32.mrb[0].mxu0
        %3820 = vmatprep.mubr.bf16.mxu0 0
        %3821 = vmatmul.mubr.bf16.gmra.mrb[0].mxu0 %v3663
        %v3822 = vpop.f32.mrb[0].mxu0
        %v3823 = vadd.f32 0.0, %v3822
        %v3824 = vpop.f32.mrb[0].mxu0
        %v3825 = vpop.f32.mrb[0].mxu0
        %v3826 = vadd.f32 0.0, %v3825
        %v3827 = vpop.f32.mrb[0].mxu0
        %3828 = vdwg.mxu0
        %v3829 = vadd.f32 %v3359, %v3703
        %v3830 = vadd.f32 %v3360, %v3706
        %v3831 = vadd.f32 %v3361, %v3711
        %v3832 = vadd.f32 %v3362, %v3714
        %v3833 = vadd.f32 %v3363, %v3719
        %v3834 = vadd.f32 %v3364, %v3722
        %v3835 = vadd.f32 %v3365, %v3727
        %v3836 = vadd.f32 %v3366, %v3730
        %v3837 = vadd.f32 %v3367, %v3735
        %v3838 = vadd.f32 %v3368, %v3738
        %v3839 = vadd.f32 %v3369, %v3743
        %v3840 = vadd.f32 %v3370, %v3746
        %v3841 = vadd.f32 %v3371, %v3751
        %v3842 = vadd.f32 %v3372, %v3754
        %v3843 = vadd.f32 %v3373, %v3759
        %v3844 = vadd.f32 %v3374, %v3762
        %v3845 = vadd.f32 %v3375, %v3767
        %v3846 = vadd.f32 %v3376, %v3770
        %v3847 = vadd.f32 %v3377, %v3775
        %v3848 = vadd.f32 %v3378, %v3778
        %v3849 = vadd.f32 %v3379, %v3783
        %v3850 = vadd.f32 %v3380, %v3786
        %v3851 = vadd.f32 %v3381, %v3791
        %v3852 = vadd.f32 %v3382, %v3794
        %v3853 = vadd.f32 %v3383, %v3799
        %v3854 = vadd.f32 %v3384, %v3802
        %v3855 = vadd.f32 %v3385, %v3807
        %v3856 = vadd.f32 %v3386, %v3810
        %v3857 = vadd.f32 %v3387, %v3815
        %v3858 = vadd.f32 %v3388, %v3818
        %v3859 = vadd.f32 %v3389, %v3823
        %v3860 = vadd.f32 %v3390, %v3826
        %s3861 = scalar_lea.vmem [#allocation2], 24
        %v3862 = vld [vmem:[%s3861] sm:$0xf]
        %v3863 = vld [vmem:[%s3861 + $0x4] sm:$0xf]
        %v3864 = vld [vmem:[%s3861 + $0xc] sm:$0xf]
        %v3865 = vld [vmem:[%s3861 + $0x10] sm:$0xf]
        %v3866 = vld [vmem:[%s3861 + $0x18] sm:$0xf]
        %v3867 = vld [vmem:[%s3861 + $0x1c] sm:$0xf]
        %v3868 = vld [vmem:[%s3861 + $0x24] sm:$0xf]
        %v3869 = vld [vmem:[%s3861 + $0x28] sm:$0xf]
        %v3870 = vld [vmem:[%s3861 + $0x30] sm:$0xf]
        %v3871 = vld [vmem:[%s3861 + $0x34] sm:$0xf]
        %v3872 = vld [vmem:[%s3861 + $0x3c] sm:$0xf]
        %v3873 = vld [vmem:[%s3861 + $0x40] sm:$0xf]
        %v3874 = vld [vmem:[%s3861 + $0x48] sm:$0xf]
        %v3875 = vld [vmem:[%s3861 + $0x4c] sm:$0xf]
        %v3876 = vld [vmem:[%s3861 + $0x54] sm:$0xf]
        %v3877 = vld [vmem:[%s3861 + $0x58] sm:$0xf]
        %v3878 = vld [vmem:[%s3861 + $0x60] sm:$0xf]
        %v3879 = vld [vmem:[%s3861 + $0x64] sm:$0xf]
        %v3880 = vld [vmem:[%s3861 + $0x6c] sm:$0xf]
        %v3881 = vld [vmem:[%s3861 + $0x70] sm:$0xf]
        %v3882 = vld [vmem:[%s3861 + $0x78] sm:$0xf]
        %v3883 = vld [vmem:[%s3861 + $0x7c] sm:$0xf]
        %v3884 = vld [vmem:[%s3861 + $0x84] sm:$0xf]
        %v3885 = vld [vmem:[%s3861 + $0x88] sm:$0xf]
        %v3886 = vld [vmem:[%s3861 + $0x90] sm:$0xf]
        %v3887 = vld [vmem:[%s3861 + $0x94] sm:$0xf]
        %v3888 = vld [vmem:[%s3861 + $0x9c] sm:$0xf]
        %v3889 = vld [vmem:[%s3861 + $0xa0] sm:$0xf]
        %v3890 = vld [vmem:[%s3861 + $0xa8] sm:$0xf]
        %v3891 = vld [vmem:[%s3861 + $0xac] sm:$0xf]
        %v3892 = vld [vmem:[%s3861 + $0xb4] sm:$0xf]
        %v3893 = vld [vmem:[%s3861 + $0xb8] sm:$0xf]
        %s3894 = scalar_lea.vmem %s1, 12
        %v3895 = vld [vmem:[%s3894] sm:$0x3]
        %v3928 = vunpack.c.l.b16 %v3862
        %v3929 = vunpack.c.l.b16 %v3863
        %v3930 = vunpack.c.l.b16 %v3864
        %v3931 = vunpack.c.l.b16 %v3865
        %v3932 = vunpack.c.l.b16 %v3866
        %v3933 = vunpack.c.l.b16 %v3867
        %v3934 = vunpack.c.l.b16 %v3868
        %v3935 = vunpack.c.l.b16 %v3869
        %v3936 = vunpack.c.l.b16 %v3870
        %v3937 = vunpack.c.l.b16 %v3871
        %v3938 = vunpack.c.l.b16 %v3872
        %v3939 = vunpack.c.l.b16 %v3873
        %v3940 = vunpack.c.l.b16 %v3874
        %v3941 = vunpack.c.l.b16 %v3875
        %v3942 = vunpack.c.l.b16 %v3876
        %v3943 = vunpack.c.l.b16 %v3877
        %v3944 = vunpack.c.l.b16 %v3878
        %v3945 = vunpack.c.l.b16 %v3879
        %v3946 = vunpack.c.l.b16 %v3880
        %v3947 = vunpack.c.l.b16 %v3881
        %v3948 = vunpack.c.l.b16 %v3882
        %v3949 = vunpack.c.l.b16 %v3883
        %v3950 = vunpack.c.l.b16 %v3884
        %v3951 = vunpack.c.l.b16 %v3885
        %v3952 = vunpack.c.l.b16 %v3886
        %v3953 = vunpack.c.l.b16 %v3887
        %v3954 = vunpack.c.l.b16 %v3888
        %v3955 = vunpack.c.l.b16 %v3889
        %v3956 = vunpack.c.l.b16 %v3890
        %v3957 = vunpack.c.l.b16 %v3891
        %v3958 = vunpack.c.l.b16 %v3892
        %v3959 = vunpack.c.l.b16 %v3893
        %v3960 = vpack.c.b16 %v3929, %v3928
        %v3961 = vpack.c.b16 %v3931, %v3930
        %v3962 = vpack.c.b16 %v3933, %v3932
        %v3963 = vpack.c.b16 %v3935, %v3934
        %v3964 = vpack.c.b16 %v3937, %v3936
        %v3965 = vpack.c.b16 %v3939, %v3938
        %v3966 = vpack.c.b16 %v3941, %v3940
        %v3967 = vpack.c.b16 %v3943, %v3942
        %v3968 = vpack.c.b16 %v3945, %v3944
        %v3969 = vpack.c.b16 %v3947, %v3946
        %v3970 = vpack.c.b16 %v3949, %v3948
        %v3971 = vpack.c.b16 %v3951, %v3950
        %v3972 = vpack.c.b16 %v3953, %v3952
        %v3973 = vpack.c.b16 %v3955, %v3954
        %v3974 = vpack.c.b16 %v3957, %v3956
        %v3975 = vpack.c.b16 %v3959, %v3958
        %v3977 = vsel %vm1344, %v3960, 0
        %v3980 = vsel %vm1344, %v3961, 0
        %v3983 = vsel %vm1344, %v3962, 0
        %v3986 = vsel %vm1344, %v3963, 0
        %v3989 = vsel %vm1344, %v3964, 0
        %v3992 = vsel %vm1344, %v3965, 0
        %v3995 = vsel %vm1344, %v3966, 0
        %v3998 = vsel %vm1344, %v3967, 0
        %v4001 = vsel %vm1344, %v3968, 0
        %v4004 = vsel %vm1344, %v3969, 0
        %v4007 = vsel %vm1344, %v3970, 0
        %v4010 = vsel %vm1344, %v3971, 0
        %v4013 = vsel %vm1344, %v3972, 0
        %v4016 = vsel %vm1344, %v3973, 0
        %v4019 = vsel %vm1344, %v3974, 0
        %v4022 = vsel %vm1344, %v3975, 0
        %v4025 = vsel %vm1393, %v3895, 0
        %4027 = vmatprep.subr.bf16.mxu0 0
        %4028 = vmatpush1.bf16.msra.mxu0 %v4025
        %4029 = vmatprep.subr.bf16.mxu0 0
        %4030 = vmatpush1.bf16.msra.mxu0 0
        %4031 = vmatprep.subr.bf16.mxu0 0
        %4032 = vmatpush1.bf16.msra.mxu0 0
        %4033 = vmatprep.subr.bf16.mxu0 0
        %4034 = vmatpush1.bf16.msra.mxu0 0
        %4035 = vmatprep.subr.bf16.mxu0 0
        %4036 = vmatpush1.bf16.msra.mxu0 0
        %4037 = vmatprep.subr.bf16.mxu0 0
        %4038 = vmatpush1.bf16.msra.mxu0 0
        %4039 = vmatprep.subr.bf16.mxu0 0
        %4040 = vmatpush1.bf16.msra.mxu0 0
        %4041 = vmatprep.subr.bf16.mxu0 0
        %4042 = vmatpush1.bf16.msra.mxu0 0
        %4043 = vmatprep.subr.bf16.mxu0 0
        %4044 = vmatpush1.bf16.msra.mxu0 0
        %4045 = vmatprep.subr.bf16.mxu0 0
        %4046 = vmatpush1.bf16.msra.mxu0 0
        %4047 = vmatprep.subr.bf16.mxu0 0
        %4048 = vmatpush1.bf16.msra.mxu0 0
        %4049 = vmatprep.subr.bf16.mxu0 0
        %4050 = vmatpush1.bf16.msra.mxu0 0
        %4051 = vmatprep.subr.bf16.mxu0 0
        %4052 = vmatpush1.bf16.msra.mxu0 0
        %4053 = vmatprep.subr.bf16.mxu0 0
        %4054 = vmatpush1.bf16.msra.mxu0 0
        %4055 = vmatprep.subr.bf16.mxu0 0
        %4056 = vmatpush1.bf16.msra.mxu0 0
        %4057 = vmatprep.subr.bf16.mxu0 0
        %4058 = vmatpush1.bf16.msra.mxu0 0
        %4059 = vmatprep.mubr.bf16.mxu0 0
        %4060 = vmatmul.mubr.bf16.gmra.mrb[0].mxu0 %v3977
        %v4061 = vpop.f32.mrb[0].mxu0
        %v4062 = vadd.f32 0.0, %v4061
        %v4063 = vpop.f32.mrb[0].mxu0
        %v4064 = vpop.f32.mrb[0].mxu0
        %v4065 = vadd.f32 0.0, %v4064
        %v4066 = vpop.f32.mrb[0].mxu0
        %4067 = vmatprep.mubr.bf16.mxu0 0
        %4068 = vmatmul.mubr.bf16.gmra.mrb[0].mxu0 %v3980
        %v4069 = vpop.f32.mrb[0].mxu0
        %v4070 = vadd.f32 0.0, %v4069
        %v4071 = vpop.f32.mrb[0].mxu0
        %v4072 = vpop.f32.mrb[0].mxu0
        %v4073 = vadd.f32 0.0, %v4072
        %v4074 = vpop.f32.mrb[0].mxu0
        %4075 = vmatprep.mubr.bf16.mxu0 0
        %4076 = vmatmul.mubr.bf16.gmra.mrb[0].mxu0 %v3983
        %v4077 = vpop.f32.mrb[0].mxu0
        %v4078 = vadd.f32 0.0, %v4077
        %v4079 = vpop.f32.mrb[0].mxu0
        %v4080 = vpop.f32.mrb[0].mxu0
        %v4081 = vadd.f32 0.0, %v4080
        %v4082 = vpop.f32.mrb[0].mxu0
        %4083 = vmatprep.mubr.bf16.mxu0 0
        %4084 = vmatmul.mubr.bf16.gmra.mrb[0].mxu0 %v3986
        %v4085 = vpop.f32.mrb[0].mxu0
        %v4086 = vadd.f32 0.0, %v4085
        %v4087 = vpop.f32.mrb[0].mxu0
        %v4088 = vpop.f32.mrb[0].mxu0
        %v4089 = vadd.f32 0.0, %v4088
        %v4090 = vpop.f32.mrb[0].mxu0
        %4091 = vmatprep.mubr.bf16.mxu0 0
        %4092 = vmatmul.mubr.bf16.gmra.mrb[0].mxu0 %v3989
        %v4093 = vpop.f32.mrb[0].mxu0
        %v4094 = vadd.f32 0.0, %v4093
        %v4095 = vpop.f32.mrb[0].mxu0
        %v4096 = vpop.f32.mrb[0].mxu0
        %v4097 = vadd.f32 0.0, %v4096
        %v4098 = vpop.f32.mrb[0].mxu0
        %4099 = vmatprep.mubr.bf16.mxu0 0
        %4100 = vmatmul.mubr.bf16.gmra.mrb[0].mxu0 %v3992
        %v4101 = vpop.f32.mrb[0].mxu0
        %v4102 = vadd.f32 0.0, %v4101
        %v4103 = vpop.f32.mrb[0].mxu0
        %v4104 = vpop.f32.mrb[0].mxu0
        %v4105 = vadd.f32 0.0, %v4104
        %v4106 = vpop.f32.mrb[0].mxu0
        %4107 = vmatprep.mubr.bf16.mxu0 0
        %4108 = vmatmul.mubr.bf16.gmra.mrb[0].mxu0 %v3995
        %v4109 = vpop.f32.mrb[0].mxu0
        %v4110 = vadd.f32 0.0, %v4109
        %v4111 = vpop.f32.mrb[0].mxu0
        %v4112 = vpop.f32.mrb[0].mxu0
        %v4113 = vadd.f32 0.0, %v4112
        %v4114 = vpop.f32.mrb[0].mxu0
        %4115 = vmatprep.mubr.bf16.mxu0 0
        %4116 = vmatmul.mubr.bf16.gmra.mrb[0].mxu0 %v3998
        %v4117 = vpop.f32.mrb[0].mxu0
        %v4118 = vadd.f32 0.0, %v4117
        %v4119 = vpop.f32.mrb[0].mxu0
        %v4120 = vpop.f32.mrb[0].mxu0
        %v4121 = vadd.f32 0.0, %v4120
        %v4122 = vpop.f32.mrb[0].mxu0
        %4123 = vmatprep.mubr.bf16.mxu0 0
        %4124 = vmatmul.mubr.bf16.gmra.mrb[0].mxu0 %v4001
        %v4125 = vpop.f32.mrb[0].mxu0
        %v4126 = vadd.f32 0.0, %v4125
        %v4127 = vpop.f32.mrb[0].mxu0
        %v4128 = vpop.f32.mrb[0].mxu0
        %v4129 = vadd.f32 0.0, %v4128
        %v4130 = vpop.f32.mrb[0].mxu0
        %4131 = vmatprep.mubr.bf16.mxu0 0
        %4132 = vmatmul.mubr.bf16.gmra.mrb[0].mxu0 %v4004
        %v4133 = vpop.f32.mrb[0].mxu0
        %v4134 = vadd.f32 0.0, %v4133
        %v4135 = vpop.f32.mrb[0].mxu0
        %v4136 = vpop.f32.mrb[0].mxu0
        %v4137 = vadd.f32 0.0, %v4136
        %v4138 = vpop.f32.mrb[0].mxu0
        %4139 = vmatprep.mubr.bf16.mxu0 0
        %4140 = vmatmul.mubr.bf16.gmra.mrb[0].mxu0 %v4007
        %v4141 = vpop.f32.mrb[0].mxu0
        %v4142 = vadd.f32 0.0, %v4141
        %v4143 = vpop.f32.mrb[0].mxu0
        %v4144 = vpop.f32.mrb[0].mxu0
        %v4145 = vadd.f32 0.0, %v4144
        %v4146 = vpop.f32.mrb[0].mxu0
        %4147 = vmatprep.mubr.bf16.mxu0 0
        %4148 = vmatmul.mubr.bf16.gmra.mrb[0].mxu0 %v4010
        %v4149 = vpop.f32.mrb[0].mxu0
        %v4150 = vadd.f32 0.0, %v4149
        %v4151 = vpop.f32.mrb[0].mxu0
        %v4152 = vpop.f32.mrb[0].mxu0
        %v4153 = vadd.f32 0.0, %v4152
        %v4154 = vpop.f32.mrb[0].mxu0
        %4155 = vmatprep.mubr.bf16.mxu0 0
        %4156 = vmatmul.mubr.bf16.gmra.mrb[0].mxu0 %v4013
        %v4157 = vpop.f32.mrb[0].mxu0
        %v4158 = vadd.f32 0.0, %v4157
        %v4159 = vpop.f32.mrb[0].mxu0
        %v4160 = vpop.f32.mrb[0].mxu0
        %v4161 = vadd.f32 0.0, %v4160
        %v4162 = vpop.f32.mrb[0].mxu0
        %4163 = vmatprep.mubr.bf16.mxu0 0
        %4164 = vmatmul.mubr.bf16.gmra.mrb[0].mxu0 %v4016
        %v4165 = vpop.f32.mrb[0].mxu0
        %v4166 = vadd.f32 0.0, %v4165
        %v4167 = vpop.f32.mrb[0].mxu0
        %v4168 = vpop.f32.mrb[0].mxu0
        %v4169 = vadd.f32 0.0, %v4168
        %v4170 = vpop.f32.mrb[0].mxu0
        %4171 = vmatprep.mubr.bf16.mxu0 0
        %4172 = vmatmul.mubr.bf16.gmra.mrb[0].mxu0 %v4019
        %v4173 = vpop.f32.mrb[0].mxu0
        %v4174 = vadd.f32 0.0, %v4173
        %v4175 = vpop.f32.mrb[0].mxu0
        %v4176 = vpop.f32.mrb[0].mxu0
        %v4177 = vadd.f32 0.0, %v4176
        %v4178 = vpop.f32.mrb[0].mxu0
        %4179 = vmatprep.mubr.bf16.mxu0 0
        %4180 = vmatmul.mubr.bf16.gmra.mrb[0].mxu0 %v4022
        %v4181 = vpop.f32.mrb[0].mxu0
        %v4182 = vadd.f32 0.0, %v4181
        %v4183 = vpop.f32.mrb[0].mxu0
        %v4184 = vpop.f32.mrb[0].mxu0
        %v4185 = vadd.f32 0.0, %v4184
        %v4186 = vpop.f32.mrb[0].mxu0
        %4187 = vdwg.mxu0
        %v4188 = vadd.f32 %v3829, %v4062
        %v4189 = vadd.f32 %v3830, %v4065
        %v4190 = vadd.f32 %v3831, %v4070
        %v4191 = vadd.f32 %v3832, %v4073
        %v4192 = vadd.f32 %v3833, %v4078
        %v4193 = vadd.f32 %v3834, %v4081
        %v4194 = vadd.f32 %v3835, %v4086
        %v4195 = vadd.f32 %v3836, %v4089
        %v4196 = vadd.f32 %v3837, %v4094
        %v4197 = vadd.f32 %v3838, %v4097
        %v4198 = vadd.f32 %v3839, %v4102
        %v4199 = vadd.f32 %v3840, %v4105
        %v4200 = vadd.f32 %v3841, %v4110
        %v4201 = vadd.f32 %v3842, %v4113
        %v4202 = vadd.f32 %v3843, %v4118
        %v4203 = vadd.f32 %v3844, %v4121
        %v4204 = vadd.f32 %v3845, %v4126
        %v4205 = vadd.f32 %v3846, %v4129
        %v4206 = vadd.f32 %v3847, %v4134
        %v4207 = vadd.f32 %v3848, %v4137
        %v4208 = vadd.f32 %v3849, %v4142
        %v4209 = vadd.f32 %v3850, %v4145
        %v4210 = vadd.f32 %v3851, %v4150
        %v4211 = vadd.f32 %v3852, %v4153
        %v4212 = vadd.f32 %v3853, %v4158
        %v4213 = vadd.f32 %v3854, %v4161
        %v4214 = vadd.f32 %v3855, %v4166
        %v4215 = vadd.f32 %v3856, %v4169
        %v4216 = vadd.f32 %v3857, %v4174
        %v4217 = vadd.f32 %v3858, %v4177
        %v4218 = vadd.f32 %v3859, %v4182
        %v4219 = vadd.f32 %v3860, %v4185
        %v4220 = vld [vmem:[%s3861] sm:$0xf]
        %v4221 = vld [vmem:[%s3861 + $0x4] sm:$0xf]
        %v4222 = vld [vmem:[%s3861 + $0x8] sm:$0x1]
        %v4223 = vld [vmem:[%s3861 + $0xc] sm:$0xf]
        %v4224 = vld [vmem:[%s3861 + $0x10] sm:$0xf]
        %v4225 = vld [vmem:[%s3861 + $0x14] sm:$0x1]
        %v4226 = vld [vmem:[%s3861 + $0x18] sm:$0xf]
        %v4227 = vld [vmem:[%s3861 + $0x1c] sm:$0xf]
        %v4228 = vld [vmem:[%s3861 + $0x20] sm:$0x1]
        %v4229 = vld [vmem:[%s3861 + $0x24] sm:$0xf]
        %v4230 = vld [vmem:[%s3861 + $0x28] sm:$0xf]
        %v4231 = vld [vmem:[%s3861 + $0x2c] sm:$0x1]
        %v4232 = vld [vmem:[%s3861 + $0x30] sm:$0xf]
        %v4233 = vld [vmem:[%s3861 + $0x34] sm:$0xf]
        %v4234 = vld [vmem:[%s3861 + $0x38] sm:$0x1]
        %v4235 = vld [vmem:[%s3861 + $0x3c] sm:$0xf]
        %v4236 = vld [vmem:[%s3861 + $0x40] sm:$0xf]
        %v4237 = vld [vmem:[%s3861 + $0x44] sm:$0x1]
        %v4238 = vld [vmem:[%s3861 + $0x48] sm:$0xf]
        %v4239 = vld [vmem:[%s3861 + $0x4c] sm:$0xf]
        %v4240 = vld [vmem:[%s3861 + $0x50] sm:$0x1]
        %v4241 = vld [vmem:[%s3861 + $0x54] sm:$0xf]
        %v4242 = vld [vmem:[%s3861 + $0x58] sm:$0xf]
        %v4243 = vld [vmem:[%s3861 + $0x5c] sm:$0x1]
        %v4244 = vld [vmem:[%s3861 + $0x60] sm:$0xf]
        %v4245 = vld [vmem:[%s3861 + $0x64] sm:$0xf]
        %v4246 = vld [vmem:[%s3861 + $0x68] sm:$0x1]
        %v4247 = vld [vmem:[%s3861 + $0x6c] sm:$0xf]
        %v4248 = vld [vmem:[%s3861 + $0x70] sm:$0xf]
        %v4249 = vld [vmem:[%s3861 + $0x74] sm:$0x1]
        %v4250 = vld [vmem:[%s3861 + $0x78] sm:$0xf]
        %v4251 = vld [vmem:[%s3861 + $0x7c] sm:$0xf]
        %v4252 = vld [vmem:[%s3861 + $0x80] sm:$0x1]
        %v4253 = vld [vmem:[%s3861 + $0x84] sm:$0xf]
        %v4254 = vld [vmem:[%s3861 + $0x88] sm:$0xf]
        %v4255 = vld [vmem:[%s3861 + $0x8c] sm:$0x1]
        %v4256 = vld [vmem:[%s3861 + $0x90] sm:$0xf]
        %v4257 = vld [vmem:[%s3861 + $0x94] sm:$0xf]
        %v4258 = vld [vmem:[%s3861 + $0x98] sm:$0x1]
        %v4259 = vld [vmem:[%s3861 + $0x9c] sm:$0xf]
        %v4260 = vld [vmem:[%s3861 + $0xa0] sm:$0xf]
        %v4261 = vld [vmem:[%s3861 + $0xa4] sm:$0x1]
        %v4262 = vld [vmem:[%s3861 + $0xa8] sm:$0xf]
        %v4263 = vld [vmem:[%s3861 + $0xac] sm:$0xf]
        %v4264 = vld [vmem:[%s3861 + $0xb0] sm:$0x1]
        %v4265 = vld [vmem:[%s3861 + $0xb4] sm:$0xf]
        %v4266 = vld [vmem:[%s3861 + $0xb8] sm:$0xf]
        %v4267 = vld [vmem:[%s3861 + $0xbc] sm:$0x1]
        %v4269 = vshrl.u32 %v4220, 16
        %v4271 = vrot.slane %v4269, 4
        %v4272 = vshll.u32 %v4220, 16
        %v4274 = vrot.slane %v4272, 5
        %v4275 = vor.u32 %v4271, %v4274
        %v4276 = vrot.slane %v4275, 4
        %v4278 = vshll.u32 %v4221, 16
        %v4280 = vrot.slane %v4278, 5
        %v4281 = vsel %vm909, %v4276, %v4280
        %v4282 = vshrl.u32 %v4221, 16
        %v4284 = vrot.slane %v4282, 4
        %v4285 = vor.u32 %v4284, %v4280
        %v4286 = vrot.slane %v4285, 4
        %v4288 = vshll.u32 %v4222, 16
        %v4290 = vrot.slane %v4288, 5
        %v4291 = vsel %vm909, %v4286, %v4290
        %v4293 = vshrl.u32 %v4223, 16
        %v4295 = vrot.slane %v4293, 4
        %v4296 = vshll.u32 %v4223, 16
        %v4298 = vrot.slane %v4296, 5
        %v4299 = vor.u32 %v4295, %v4298
        %v4300 = vrot.slane %v4299, 4
        %v4302 = vshll.u32 %v4224, 16
        %v4304 = vrot.slane %v4302, 5
        %v4305 = vsel %vm909, %v4300, %v4304
        %v4306 = vshrl.u32 %v4224, 16
        %v4308 = vrot.slane %v4306, 4
        %v4309 = vor.u32 %v4308, %v4304
        %v4310 = vrot.slane %v4309, 4
        %v4312 = vshll.u32 %v4225, 16
        %v4314 = vrot.slane %v4312, 5
        %v4315 = vsel %vm909, %v4310, %v4314
        %v4317 = vshrl.u32 %v4226, 16
        %v4319 = vrot.slane %v4317, 4
        %v4320 = vshll.u32 %v4226, 16
        %v4322 = vrot.slane %v4320, 5
        %v4323 = vor.u32 %v4319, %v4322
        %v4324 = vrot.slane %v4323, 4
        %v4326 = vshll.u32 %v4227, 16
        %v4328 = vrot.slane %v4326, 5
        %v4329 = vsel %vm909, %v4324, %v4328
        %v4330 = vshrl.u32 %v4227, 16
        %v4332 = vrot.slane %v4330, 4
        %v4333 = vor.u32 %v4332, %v4328
        %v4334 = vrot.slane %v4333, 4
        %v4336 = vshll.u32 %v4228, 16
        %v4338 = vrot.slane %v4336, 5
        %v4339 = vsel %vm909, %v4334, %v4338
        %v4341 = vshrl.u32 %v4229, 16
        %v4343 = vrot.slane %v4341, 4
        %v4344 = vshll.u32 %v4229, 16
        %v4346 = vrot.slane %v4344, 5
        %v4347 = vor.u32 %v4343, %v4346
        %v4348 = vrot.slane %v4347, 4
        %v4350 = vshll.u32 %v4230, 16
        %v4352 = vrot.slane %v4350, 5
        %v4353 = vsel %vm909, %v4348, %v4352
        %v4354 = vshrl.u32 %v4230, 16
        %v4356 = vrot.slane %v4354, 4
        %v4357 = vor.u32 %v4356, %v4352
        %v4358 = vrot.slane %v4357, 4
        %v4360 = vshll.u32 %v4231, 16
        %v4362 = vrot.slane %v4360, 5
        %v4363 = vsel %vm909, %v4358, %v4362
        %v4365 = vshrl.u32 %v4232, 16
        %v4367 = vrot.slane %v4365, 4
        %v4368 = vshll.u32 %v4232, 16
        %v4370 = vrot.slane %v4368, 5
        %v4371 = vor.u32 %v4367, %v4370
        %v4372 = vrot.slane %v4371, 4
        %v4374 = vshll.u32 %v4233, 16
        %v4376 = vrot.slane %v4374, 5
        %v4377 = vsel %vm909, %v4372, %v4376
        %v4378 = vshrl.u32 %v4233, 16
        %v4380 = vrot.slane %v4378, 4
        %v4381 = vor.u32 %v4380, %v4376
        %v4382 = vrot.slane %v4381, 4
        %v4384 = vshll.u32 %v4234, 16
        %v4386 = vrot.slane %v4384, 5
        %v4387 = vsel %vm909, %v4382, %v4386
        %v4389 = vshrl.u32 %v4235, 16
        %v4391 = vrot.slane %v4389, 4
        %v4392 = vshll.u32 %v4235, 16
        %v4394 = vrot.slane %v4392, 5
        %v4395 = vor.u32 %v4391, %v4394
        %v4396 = vrot.slane %v4395, 4
        %v4398 = vshll.u32 %v4236, 16
        %v4400 = vrot.slane %v4398, 5
        %v4401 = vsel %vm909, %v4396, %v4400
        %v4402 = vshrl.u32 %v4236, 16
        %v4404 = vrot.slane %v4402, 4
        %v4405 = vor.u32 %v4404, %v4400
        %v4406 = vrot.slane %v4405, 4
        %v4408 = vshll.u32 %v4237, 16
        %v4410 = vrot.slane %v4408, 5
        %v4411 = vsel %vm909, %v4406, %v4410
        %v4413 = vshrl.u32 %v4238, 16
        %v4415 = vrot.slane %v4413, 4
        %v4416 = vshll.u32 %v4238, 16
        %v4418 = vrot.slane %v4416, 5
        %v4419 = vor.u32 %v4415, %v4418
        %v4420 = vrot.slane %v4419, 4
        %v4422 = vshll.u32 %v4239, 16
        %v4424 = vrot.slane %v4422, 5
        %v4425 = vsel %vm909, %v4420, %v4424
        %v4426 = vshrl.u32 %v4239, 16
        %v4428 = vrot.slane %v4426, 4
        %v4429 = vor.u32 %v4428, %v4424
        %v4430 = vrot.slane %v4429, 4
        %v4432 = vshll.u32 %v4240, 16
        %v4434 = vrot.slane %v4432, 5
        %v4435 = vsel %vm909, %v4430, %v4434
        %v4437 = vshrl.u32 %v4241, 16
        %v4439 = vrot.slane %v4437, 4
        %v4440 = vshll.u32 %v4241, 16
        %v4442 = vrot.slane %v4440, 5
        %v4443 = vor.u32 %v4439, %v4442
        %v4444 = vrot.slane %v4443, 4
        %v4446 = vshll.u32 %v4242, 16
        %v4448 = vrot.slane %v4446, 5
        %v4449 = vsel %vm909, %v4444, %v4448
        %v4450 = vshrl.u32 %v4242, 16
        %v4452 = vrot.slane %v4450, 4
        %v4453 = vor.u32 %v4452, %v4448
        %v4454 = vrot.slane %v4453, 4
        %v4456 = vshll.u32 %v4243, 16
        %v4458 = vrot.slane %v4456, 5
        %v4459 = vsel %vm909, %v4454, %v4458
        %v4461 = vshrl.u32 %v4244, 16
        %v4463 = vrot.slane %v4461, 4
        %v4464 = vshll.u32 %v4244, 16
        %v4466 = vrot.slane %v4464, 5
        %v4467 = vor.u32 %v4463, %v4466
        %v4468 = vrot.slane %v4467, 4
        %v4470 = vshll.u32 %v4245, 16
        %v4472 = vrot.slane %v4470, 5
        %v4473 = vsel %vm909, %v4468, %v4472
        %v4474 = vshrl.u32 %v4245, 16
        %v4476 = vrot.slane %v4474, 4
        %v4477 = vor.u32 %v4476, %v4472
        %v4478 = vrot.slane %v4477, 4
        %v4480 = vshll.u32 %v4246, 16
        %v4482 = vrot.slane %v4480, 5
        %v4483 = vsel %vm909, %v4478, %v4482
        %v4485 = vshrl.u32 %v4247, 16
        %v4487 = vrot.slane %v4485, 4
        %v4488 = vshll.u32 %v4247, 16
        %v4490 = vrot.slane %v4488, 5
        %v4491 = vor.u32 %v4487, %v4490
        %v4492 = vrot.slane %v4491, 4
        %v4494 = vshll.u32 %v4248, 16
        %v4496 = vrot.slane %v4494, 5
        %v4497 = vsel %vm909, %v4492, %v4496
        %v4498 = vshrl.u32 %v4248, 16
        %v4500 = vrot.slane %v4498, 4
        %v4501 = vor.u32 %v4500, %v4496
        %v4502 = vrot.slane %v4501, 4
        %v4504 = vshll.u32 %v4249, 16
        %v4506 = vrot.slane %v4504, 5
        %v4507 = vsel %vm909, %v4502, %v4506
        %v4509 = vshrl.u32 %v4250, 16
        %v4511 = vrot.slane %v4509, 4
        %v4512 = vshll.u32 %v4250, 16
        %v4514 = vrot.slane %v4512, 5
        %v4515 = vor.u32 %v4511, %v4514
        %v4516 = vrot.slane %v4515, 4
        %v4518 = vshll.u32 %v4251, 16
        %v4520 = vrot.slane %v4518, 5
        %v4521 = vsel %vm909, %v4516, %v4520
        %v4522 = vshrl.u32 %v4251, 16
        %v4524 = vrot.slane %v4522, 4
        %v4525 = vor.u32 %v4524, %v4520
        %v4526 = vrot.slane %v4525, 4
        %v4528 = vshll.u32 %v4252, 16
        %v4530 = vrot.slane %v4528, 5
        %v4531 = vsel %vm909, %v4526, %v4530
        %v4533 = vshrl.u32 %v4253, 16
        %v4535 = vrot.slane %v4533, 4
        %v4536 = vshll.u32 %v4253, 16
        %v4538 = vrot.slane %v4536, 5
        %v4539 = vor.u32 %v4535, %v4538
        %v4540 = vrot.slane %v4539, 4
        %v4542 = vshll.u32 %v4254, 16
        %v4544 = vrot.slane %v4542, 5
        %v4545 = vsel %vm909, %v4540, %v4544
        %v4546 = vshrl.u32 %v4254, 16
        %v4548 = vrot.slane %v4546, 4
        %v4549 = vor.u32 %v4548, %v4544
        %v4550 = vrot.slane %v4549, 4
        %v4552 = vshll.u32 %v4255, 16
        %v4554 = vrot.slane %v4552, 5
        %v4555 = vsel %vm909, %v4550, %v4554
        %v4557 = vshrl.u32 %v4256, 16
        %v4559 = vrot.slane %v4557, 4
        %v4560 = vshll.u32 %v4256, 16
        %v4562 = vrot.slane %v4560, 5
        %v4563 = vor.u32 %v4559, %v4562
        %v4564 = vrot.slane %v4563, 4
        %v4566 = vshll.u32 %v4257, 16
        %v4568 = vrot.slane %v4566, 5
        %v4569 = vsel %vm909, %v4564, %v4568
        %v4570 = vshrl.u32 %v4257, 16
        %v4572 = vrot.slane %v4570, 4
        %v4573 = vor.u32 %v4572, %v4568
        %v4574 = vrot.slane %v4573, 4
        %v4576 = vshll.u32 %v4258, 16
        %v4578 = vrot.slane %v4576, 5
        %v4579 = vsel %vm909, %v4574, %v4578
        %v4581 = vshrl.u32 %v4259, 16
        %v4583 = vrot.slane %v4581, 4
        %v4584 = vshll.u32 %v4259, 16
        %v4586 = vrot.slane %v4584, 5
        %v4587 = vor.u32 %v4583, %v4586
        %v4588 = vrot.slane %v4587, 4
        %v4590 = vshll.u32 %v4260, 16
        %v4592 = vrot.slane %v4590, 5
        %v4593 = vsel %vm909, %v4588, %v4592
        %v4594 = vshrl.u32 %v4260, 16
        %v4596 = vrot.slane %v4594, 4
        %v4597 = vor.u32 %v4596, %v4592
        %v4598 = vrot.slane %v4597, 4
        %v4600 = vshll.u32 %v4261, 16
        %v4602 = vrot.slane %v4600, 5
        %v4603 = vsel %vm909, %v4598, %v4602
        %v4605 = vshrl.u32 %v4262, 16
        %v4607 = vrot.slane %v4605, 4
        %v4608 = vshll.u32 %v4262, 16
        %v4610 = vrot.slane %v4608, 5
        %v4611 = vor.u32 %v4607, %v4610
        %v4612 = vrot.slane %v4611, 4
        %v4614 = vshll.u32 %v4263, 16
        %v4616 = vrot.slane %v4614, 5
        %v4617 = vsel %vm909, %v4612, %v4616
        %v4618 = vshrl.u32 %v4263, 16
        %v4620 = vrot.slane %v4618, 4
        %v4621 = vor.u32 %v4620, %v4616
        %v4622 = vrot.slane %v4621, 4
        %v4624 = vshll.u32 %v4264, 16
        %v4626 = vrot.slane %v4624, 5
        %v4627 = vsel %vm909, %v4622, %v4626
        %v4629 = vshrl.u32 %v4265, 16
        %v4631 = vrot.slane %v4629, 4
        %v4632 = vshll.u32 %v4265, 16
        %v4634 = vrot.slane %v4632, 5
        %v4635 = vor.u32 %v4631, %v4634
        %v4636 = vrot.slane %v4635, 4
        %v4638 = vshll.u32 %v4266, 16
        %v4640 = vrot.slane %v4638, 5
        %v4641 = vsel %vm909, %v4636, %v4640
        %v4642 = vshrl.u32 %v4266, 16
        %v4644 = vrot.slane %v4642, 4
        %v4645 = vor.u32 %v4644, %v4640
        %v4646 = vrot.slane %v4645, 4
        %v4648 = vshll.u32 %v4267, 16
        %v4650 = vrot.slane %v4648, 5
        %v4651 = vsel %vm909, %v4646, %v4650
        %s4652 = scalar_lea.vmem %s1, 14
        %v4653 = vld [vmem:[%s4652] sm:$0x3]
        %v4654 = vunpack.c.l.b16 %v4281
        %v4655 = vunpack.c.l.b16 %v4291
        %v4656 = vunpack.c.l.b16 %v4305
        %v4657 = vunpack.c.l.b16 %v4315
        %v4658 = vunpack.c.l.b16 %v4329
        %v4659 = vunpack.c.l.b16 %v4339
        %v4660 = vunpack.c.l.b16 %v4353
        %v4661 = vunpack.c.l.b16 %v4363
        %v4662 = vunpack.c.l.b16 %v4377
        %v4663 = vunpack.c.l.b16 %v4387
        %v4664 = vunpack.c.l.b16 %v4401
        %v4665 = vunpack.c.l.b16 %v4411
        %v4666 = vunpack.c.l.b16 %v4425
        %v4667 = vunpack.c.l.b16 %v4435
        %v4668 = vunpack.c.l.b16 %v4449
        %v4669 = vunpack.c.l.b16 %v4459
        %v4670 = vunpack.c.l.b16 %v4473
        %v4671 = vunpack.c.l.b16 %v4483
        %v4672 = vunpack.c.l.b16 %v4497
        %v4673 = vunpack.c.l.b16 %v4507
        %v4674 = vunpack.c.l.b16 %v4521
        %v4675 = vunpack.c.l.b16 %v4531
        %v4676 = vunpack.c.l.b16 %v4545
        %v4677 = vunpack.c.l.b16 %v4555
        %v4678 = vunpack.c.l.b16 %v4569
        %v4679 = vunpack.c.l.b16 %v4579
        %v4680 = vunpack.c.l.b16 %v4593
        %v4681 = vunpack.c.l.b16 %v4603
        %v4682 = vunpack.c.l.b16 %v4617
        %v4683 = vunpack.c.l.b16 %v4627
        %v4684 = vunpack.c.l.b16 %v4641
        %v4685 = vunpack.c.l.b16 %v4651
        %v4686 = vpack.c.b16 %v4655, %v4654
        %v4687 = vpack.c.b16 %v4657, %v4656
        %v4688 = vpack.c.b16 %v4659, %v4658
        %v4689 = vpack.c.b16 %v4661, %v4660
        %v4690 = vpack.c.b16 %v4663, %v4662
        %v4691 = vpack.c.b16 %v4665, %v4664
        %v4692 = vpack.c.b16 %v4667, %v4666
        %v4693 = vpack.c.b16 %v4669, %v4668
        %v4694 = vpack.c.b16 %v4671, %v4670
        %v4695 = vpack.c.b16 %v4673, %v4672
        %v4696 = vpack.c.b16 %v4675, %v4674
        %v4697 = vpack.c.b16 %v4677, %v4676
        %v4698 = vpack.c.b16 %v4679, %v4678
        %v4699 = vpack.c.b16 %v4681, %v4680
        %v4700 = vpack.c.b16 %v4683, %v4682
        %v4701 = vpack.c.b16 %v4685, %v4684
        %v4703 = vsel %vm1344, %v4686, 0
        %v4706 = vsel %vm1344, %v4687, 0
        %v4709 = vsel %vm1344, %v4688, 0
        %v4712 = vsel %vm1344, %v4689, 0
        %v4715 = vsel %vm1344, %v4690, 0
        %v4718 = vsel %vm1344, %v4691, 0
        %v4721 = vsel %vm1344, %v4692, 0
        %v4724 = vsel %vm1344, %v4693, 0
        %v4727 = vsel %vm1344, %v4694, 0
        %v4730 = vsel %vm1344, %v4695, 0
        %v4733 = vsel %vm1344, %v4696, 0
        %v4736 = vsel %vm1344, %v4697, 0
        %v4739 = vsel %vm1344, %v4698, 0
        %v4742 = vsel %vm1344, %v4699, 0
        %v4745 = vsel %vm1344, %v4700, 0
        %v4748 = vsel %vm1344, %v4701, 0
        %v4751 = vsel %vm1393, %v4653, 0
        %4753 = vmatprep.subr.bf16.mxu0 0
        %4754 = vmatpush1.bf16.msra.mxu0 %v4751
        %4755 = vmatprep.subr.bf16.mxu0 0
        %4756 = vmatpush1.bf16.msra.mxu0 0
        %4757 = vmatprep.subr.bf16.mxu0 0
        %4758 = vmatpush1.bf16.msra.mxu0 0
        %4759 = vmatprep.subr.bf16.mxu0 0
        %4760 = vmatpush1.bf16.msra.mxu0 0
        %4761 = vmatprep.subr.bf16.mxu0 0
        %4762 = vmatpush1.bf16.msra.mxu0 0
        %4763 = vmatprep.subr.bf16.mxu0 0
        %4764 = vmatpush1.bf16.msra.mxu0 0
        %4765 = vmatprep.subr.bf16.mxu0 0
        %4766 = vmatpush1.bf16.msra.mxu0 0
        %4767 = vmatprep.subr.bf16.mxu0 0
        %4768 = vmatpush1.bf16.msra.mxu0 0
        %4769 = vmatprep.subr.bf16.mxu0 0
        %4770 = vmatpush1.bf16.msra.mxu0 0
        %4771 = vmatprep.subr.bf16.mxu0 0
        %4772 = vmatpush1.bf16.msra.mxu0 0
        %4773 = vmatprep.subr.bf16.mxu0 0
        %4774 = vmatpush1.bf16.msra.mxu0 0
        %4775 = vmatprep.subr.bf16.mxu0 0
        %4776 = vmatpush1.bf16.msra.mxu0 0
        %4777 = vmatprep.subr.bf16.mxu0 0
        %4778 = vmatpush1.bf16.msra.mxu0 0
        %4779 = vmatprep.subr.bf16.mxu0 0
        %4780 = vmatpush1.bf16.msra.mxu0 0
        %4781 = vmatprep.subr.bf16.mxu0 0
        %4782 = vmatpush1.bf16.msra.mxu0 0
        %4783 = vmatprep.subr.bf16.mxu0 0
        %4784 = vmatpush1.bf16.msra.mxu0 0
        %4785 = vmatprep.mubr.bf16.mxu0 0
        %4786 = vmatmul.mubr.bf16.gmra.mrb[0].mxu0 %v4703
        %v4787 = vpop.f32.mrb[0].mxu0
        %v4788 = vadd.f32 0.0, %v4787
        %v4789 = vpop.f32.mrb[0].mxu0
        %v4790 = vpop.f32.mrb[0].mxu0
        %v4791 = vadd.f32 0.0, %v4790
        %v4792 = vpop.f32.mrb[0].mxu0
        %4793 = vmatprep.mubr.bf16.mxu0 0
        %4794 = vmatmul.mubr.bf16.gmra.mrb[0].mxu0 %v4706
        %v4795 = vpop.f32.mrb[0].mxu0
        %v4796 = vadd.f32 0.0, %v4795
        %v4797 = vpop.f32.mrb[0].mxu0
        %v4798 = vpop.f32.mrb[0].mxu0
        %v4799 = vadd.f32 0.0, %v4798
        %v4800 = vpop.f32.mrb[0].mxu0
        %4801 = vmatprep.mubr.bf16.mxu0 0
        %4802 = vmatmul.mubr.bf16.gmra.mrb[0].mxu0 %v4709
        %v4803 = vpop.f32.mrb[0].mxu0
        %v4804 = vadd.f32 0.0, %v4803
        %v4805 = vpop.f32.mrb[0].mxu0
        %v4806 = vpop.f32.mrb[0].mxu0
        %v4807 = vadd.f32 0.0, %v4806
        %v4808 = vpop.f32.mrb[0].mxu0
        %4809 = vmatprep.mubr.bf16.mxu0 0
        %4810 = vmatmul.mubr.bf16.gmra.mrb[0].mxu0 %v4712
        %v4811 = vpop.f32.mrb[0].mxu0
        %v4812 = vadd.f32 0.0, %v4811
        %v4813 = vpop.f32.mrb[0].mxu0
        %v4814 = vpop.f32.mrb[0].mxu0
        %v4815 = vadd.f32 0.0, %v4814
        %v4816 = vpop.f32.mrb[0].mxu0
        %4817 = vmatprep.mubr.bf16.mxu0 0
        %4818 = vmatmul.mubr.bf16.gmra.mrb[0].mxu0 %v4715
        %v4819 = vpop.f32.mrb[0].mxu0
        %v4820 = vadd.f32 0.0, %v4819
        %v4821 = vpop.f32.mrb[0].mxu0
        %v4822 = vpop.f32.mrb[0].mxu0
        %v4823 = vadd.f32 0.0, %v4822
        %v4824 = vpop.f32.mrb[0].mxu0
        %4825 = vmatprep.mubr.bf16.mxu0 0
        %4826 = vmatmul.mubr.bf16.gmra.mrb[0].mxu0 %v4718
        %v4827 = vpop.f32.mrb[0].mxu0
        %v4828 = vadd.f32 0.0, %v4827
        %v4829 = vpop.f32.mrb[0].mxu0
        %v4830 = vpop.f32.mrb[0].mxu0
        %v4831 = vadd.f32 0.0, %v4830
        %v4832 = vpop.f32.mrb[0].mxu0
        %4833 = vmatprep.mubr.bf16.mxu0 0
        %4834 = vmatmul.mubr.bf16.gmra.mrb[0].mxu0 %v4721
        %v4835 = vpop.f32.mrb[0].mxu0
        %v4836 = vadd.f32 0.0, %v4835
        %v4837 = vpop.f32.mrb[0].mxu0
        %v4838 = vpop.f32.mrb[0].mxu0
        %v4839 = vadd.f32 0.0, %v4838
        %v4840 = vpop.f32.mrb[0].mxu0
        %4841 = vmatprep.mubr.bf16.mxu0 0
        %4842 = vmatmul.mubr.bf16.gmra.mrb[0].mxu0 %v4724
        %v4843 = vpop.f32.mrb[0].mxu0
        %v4844 = vadd.f32 0.0, %v4843
        %v4845 = vpop.f32.mrb[0].mxu0
        %v4846 = vpop.f32.mrb[0].mxu0
        %v4847 = vadd.f32 0.0, %v4846
        %v4848 = vpop.f32.mrb[0].mxu0
        %4849 = vmatprep.mubr.bf16.mxu0 0
        %4850 = vmatmul.mubr.bf16.gmra.mrb[0].mxu0 %v4727
        %v4851 = vpop.f32.mrb[0].mxu0
        %v4852 = vadd.f32 0.0, %v4851
        %v4853 = vpop.f32.mrb[0].mxu0
        %v4854 = vpop.f32.mrb[0].mxu0
        %v4855 = vadd.f32 0.0, %v4854
        %v4856 = vpop.f32.mrb[0].mxu0
        %4857 = vmatprep.mubr.bf16.mxu0 0
        %4858 = vmatmul.mubr.bf16.gmra.mrb[0].mxu0 %v4730
        %v4859 = vpop.f32.mrb[0].mxu0
        %v4860 = vadd.f32 0.0, %v4859
        %v4861 = vpop.f32.mrb[0].mxu0
        %v4862 = vpop.f32.mrb[0].mxu0
        %v4863 = vadd.f32 0.0, %v4862
        %v4864 = vpop.f32.mrb[0].mxu0
        %4865 = vmatprep.mubr.bf16.mxu0 0
        %4866 = vmatmul.mubr.bf16.gmra.mrb[0].mxu0 %v4733
        %v4867 = vpop.f32.mrb[0].mxu0
        %v4868 = vadd.f32 0.0, %v4867
        %v4869 = vpop.f32.mrb[0].mxu0
        %v4870 = vpop.f32.mrb[0].mxu0
        %v4871 = vadd.f32 0.0, %v4870
        %v4872 = vpop.f32.mrb[0].mxu0
        %4873 = vmatprep.mubr.bf16.mxu0 0
        %4874 = vmatmul.mubr.bf16.gmra.mrb[0].mxu0 %v4736
        %v4875 = vpop.f32.mrb[0].mxu0
        %v4876 = vadd.f32 0.0, %v4875
        %v4877 = vpop.f32.mrb[0].mxu0
        %v4878 = vpop.f32.mrb[0].mxu0
        %v4879 = vadd.f32 0.0, %v4878
        %v4880 = vpop.f32.mrb[0].mxu0
        %4881 = vmatprep.mubr.bf16.mxu0 0
        %4882 = vmatmul.mubr.bf16.gmra.mrb[0].mxu0 %v4739
        %v4883 = vpop.f32.mrb[0].mxu0
        %v4884 = vadd.f32 0.0, %v4883
        %v4885 = vpop.f32.mrb[0].mxu0
        %v4886 = vpop.f32.mrb[0].mxu0
        %v4887 = vadd.f32 0.0, %v4886
        %v4888 = vpop.f32.mrb[0].mxu0
        %4889 = vmatprep.mubr.bf16.mxu0 0
        %4890 = vmatmul.mubr.bf16.gmra.mrb[0].mxu0 %v4742
        %v4891 = vpop.f32.mrb[0].mxu0
        %v4892 = vadd.f32 0.0, %v4891
        %v4893 = vpop.f32.mrb[0].mxu0
        %v4894 = vpop.f32.mrb[0].mxu0
        %v4895 = vadd.f32 0.0, %v4894
        %v4896 = vpop.f32.mrb[0].mxu0
        %4897 = vmatprep.mubr.bf16.mxu0 0
        %4898 = vmatmul.mubr.bf16.gmra.mrb[0].mxu0 %v4745
        %v4899 = vpop.f32.mrb[0].mxu0
        %v4900 = vadd.f32 0.0, %v4899
        %v4901 = vpop.f32.mrb[0].mxu0
        %v4902 = vpop.f32.mrb[0].mxu0
        %v4903 = vadd.f32 0.0, %v4902
        %v4904 = vpop.f32.mrb[0].mxu0
        %4905 = vmatprep.mubr.bf16.mxu0 0
        %4906 = vmatmul.mubr.bf16.gmra.mrb[0].mxu0 %v4748
        %v4907 = vpop.f32.mrb[0].mxu0
        %v4908 = vadd.f32 0.0, %v4907
        %v4909 = vpop.f32.mrb[0].mxu0
        %v4910 = vpop.f32.mrb[0].mxu0
        %v4911 = vadd.f32 0.0, %v4910
        %v4912 = vpop.f32.mrb[0].mxu0
        %4913 = vdwg.mxu0
        %v4914 = vadd.f32 %v4188, %v4788
        %v4915 = vadd.f32 %v4189, %v4791
        %v4916 = vadd.f32 %v4190, %v4796
        %v4917 = vadd.f32 %v4191, %v4799
        %v4918 = vadd.f32 %v4192, %v4804
        %v4919 = vadd.f32 %v4193, %v4807
        %v4920 = vadd.f32 %v4194, %v4812
        %v4921 = vadd.f32 %v4195, %v4815
        %v4922 = vadd.f32 %v4196, %v4820
        %v4923 = vadd.f32 %v4197, %v4823
        %v4924 = vadd.f32 %v4198, %v4828
        %v4925 = vadd.f32 %v4199, %v4831
        %v4926 = vadd.f32 %v4200, %v4836
        %v4927 = vadd.f32 %v4201, %v4839
        %v4928 = vadd.f32 %v4202, %v4844
        %v4929 = vadd.f32 %v4203, %v4847
        %v4930 = vadd.f32 %v4204, %v4852
        %v4931 = vadd.f32 %v4205, %v4855
        %v4932 = vadd.f32 %v4206, %v4860
        %v4933 = vadd.f32 %v4207, %v4863
        %v4934 = vadd.f32 %v4208, %v4868
        %v4935 = vadd.f32 %v4209, %v4871
        %v4936 = vadd.f32 %v4210, %v4876
        %v4937 = vadd.f32 %v4211, %v4879
        %v4938 = vadd.f32 %v4212, %v4884
        %v4939 = vadd.f32 %v4213, %v4887
        %v4940 = vadd.f32 %v4214, %v4892
        %v4941 = vadd.f32 %v4215, %v4895
        %v4942 = vadd.f32 %v4216, %v4900
        %v4943 = vadd.f32 %v4217, %v4903
        %v4944 = vadd.f32 %v4218, %v4908
        %v4945 = vadd.f32 %v4219, %v4911
        %v4946 = vld [vmem:[%s3861] sm:$0xe]
        %v4947 = vld [vmem:[%s3861 + $0xc] sm:$0xe]
        %v4948 = vld [vmem:[%s3861 + $0x18] sm:$0xe]
        %v4949 = vld [vmem:[%s3861 + $0x24] sm:$0xe]
        %v4950 = vld [vmem:[%s3861 + $0x30] sm:$0xe]
        %v4951 = vld [vmem:[%s3861 + $0x3c] sm:$0xe]
        %v4952 = vld [vmem:[%s3861 + $0x48] sm:$0xe]
        %v4953 = vld [vmem:[%s3861 + $0x54] sm:$0xe]
        %v4954 = vld [vmem:[%s3861 + $0x60] sm:$0xe]
        %v4955 = vld [vmem:[%s3861 + $0x6c] sm:$0xe]
        %v4956 = vld [vmem:[%s3861 + $0x78] sm:$0xe]
        %v4957 = vld [vmem:[%s3861 + $0x84] sm:$0xe]
        %v4958 = vld [vmem:[%s3861 + $0x90] sm:$0xe]
        %v4959 = vld [vmem:[%s3861 + $0x9c] sm:$0xe]
        %v4960 = vld [vmem:[%s3861 + $0xa8] sm:$0xe]
        %v4961 = vld [vmem:[%s3861 + $0xb4] sm:$0xe]
        %v5010 = vrot.slane %v4946, 5
        %v5011 = vrot.slane %v5010, 4
        %v5012 = vrot.slane %v4221, 5
        %v5013 = vsel %vm1900, %v5011, %v5012
        %v5014 = vrot.slane %v5012, 4
        %v5015 = vrot.slane %v4222, 5
        %v5016 = vsel %vm1900, %v5014, %v5015
        %v5017 = vrot.slane %v4947, 5
        %v5018 = vrot.slane %v5017, 4
        %v5019 = vrot.slane %v4224, 5
        %v5020 = vsel %vm1900, %v5018, %v5019
        %v5021 = vrot.slane %v5019, 4
        %v5022 = vrot.slane %v4225, 5
        %v5023 = vsel %vm1900, %v5021, %v5022
        %v5024 = vrot.slane %v4948, 5
        %v5025 = vrot.slane %v5024, 4
        %v5026 = vrot.slane %v4227, 5
        %v5027 = vsel %vm1900, %v5025, %v5026
        %v5028 = vrot.slane %v5026, 4
        %v5029 = vrot.slane %v4228, 5
        %v5030 = vsel %vm1900, %v5028, %v5029
        %v5031 = vrot.slane %v4949, 5
        %v5032 = vrot.slane %v5031, 4
        %v5033 = vrot.slane %v4230, 5
        %v5034 = vsel %vm1900, %v5032, %v5033
        %v5035 = vrot.slane %v5033, 4
        %v5036 = vrot.slane %v4231, 5
        %v5037 = vsel %vm1900, %v5035, %v5036
        %v5038 = vrot.slane %v4950, 5
        %v5039 = vrot.slane %v5038, 4
        %v5040 = vrot.slane %v4233, 5
        %v5041 = vsel %vm1900, %v5039, %v5040
        %v5042 = vrot.slane %v5040, 4
        %v5043 = vrot.slane %v4234, 5
        %v5044 = vsel %vm1900, %v5042, %v5043
        %v5045 = vrot.slane %v4951, 5
        %v5046 = vrot.slane %v5045, 4
        %v5047 = vrot.slane %v4236, 5
        %v5048 = vsel %vm1900, %v5046, %v5047
        %v5049 = vrot.slane %v5047, 4
        %v5050 = vrot.slane %v4237, 5
        %v5051 = vsel %vm1900, %v5049, %v5050
        %v5052 = vrot.slane %v4952, 5
        %v5053 = vrot.slane %v5052, 4
        %v5054 = vrot.slane %v4239, 5
        %v5055 = vsel %vm1900, %v5053, %v5054
        %v5056 = vrot.slane %v5054, 4
        %v5057 = vrot.slane %v4240, 5
        %v5058 = vsel %vm1900, %v5056, %v5057
        %v5059 = vrot.slane %v4953, 5
        %v5060 = vrot.slane %v5059, 4
        %v5061 = vrot.slane %v4242, 5
        %v5062 = vsel %vm1900, %v5060, %v5061
        %v5063 = vrot.slane %v5061, 4
        %v5064 = vrot.slane %v4243, 5
        %v5065 = vsel %vm1900, %v5063, %v5064
        %v5066 = vrot.slane %v4954, 5
        %v5067 = vrot.slane %v5066, 4
        %v5068 = vrot.slane %v4245, 5
        %v5069 = vsel %vm1900, %v5067, %v5068
        %v5070 = vrot.slane %v5068, 4
        %v5071 = vrot.slane %v4246, 5
        %v5072 = vsel %vm1900, %v5070, %v5071
        %v5073 = vrot.slane %v4955, 5
        %v5074 = vrot.slane %v5073, 4
        %v5075 = vrot.slane %v4248, 5
        %v5076 = vsel %vm1900, %v5074, %v5075
        %v5077 = vrot.slane %v5075, 4
        %v5078 = vrot.slane %v4249, 5
        %v5079 = vsel %vm1900, %v5077, %v5078
        %v5080 = vrot.slane %v4956, 5
        %v5081 = vrot.slane %v5080, 4
        %v5082 = vrot.slane %v4251, 5
        %v5083 = vsel %vm1900, %v5081, %v5082
        %v5084 = vrot.slane %v5082, 4
        %v5085 = vrot.slane %v4252, 5
        %v5086 = vsel %vm1900, %v5084, %v5085
        %v5087 = vrot.slane %v4957, 5
        %v5088 = vrot.slane %v5087, 4
        %v5089 = vrot.slane %v4254, 5
        %v5090 = vsel %vm1900, %v5088, %v5089
        %v5091 = vrot.slane %v5089, 4
        %v5092 = vrot.slane %v4255, 5
        %v5093 = vsel %vm1900, %v5091, %v5092
        %v5094 = vrot.slane %v4958, 5
        %v5095 = vrot.slane %v5094, 4
        %v5096 = vrot.slane %v4257, 5
        %v5097 = vsel %vm1900, %v5095, %v5096
        %v5098 = vrot.slane %v5096, 4
        %v5099 = vrot.slane %v4258, 5
        %v5100 = vsel %vm1900, %v5098, %v5099
        %v5101 = vrot.slane %v4959, 5
        %v5102 = vrot.slane %v5101, 4
        %v5103 = vrot.slane %v4260, 5
        %v5104 = vsel %vm1900, %v5102, %v5103
        %v5105 = vrot.slane %v5103, 4
        %v5106 = vrot.slane %v4261, 5
        %v5107 = vsel %vm1900, %v5105, %v5106
        %v5108 = vrot.slane %v4960, 5
        %v5109 = vrot.slane %v5108, 4
        %v5110 = vrot.slane %v4263, 5
        %v5111 = vsel %vm1900, %v5109, %v5110
        %v5112 = vrot.slane %v5110, 4
        %v5113 = vrot.slane %v4264, 5
        %v5114 = vsel %vm1900, %v5112, %v5113
        %v5115 = vrot.slane %v4961, 5
        %v5116 = vrot.slane %v5115, 4
        %v5117 = vrot.slane %v4266, 5
        %v5118 = vsel %vm1900, %v5116, %v5117
        %v5119 = vrot.slane %v5117, 4
        %v5120 = vrot.slane %v4267, 5
        %v5121 = vsel %vm1900, %v5119, %v5120
        %s5122 = scalar_lea.vmem %s1, 16
        %v5123 = vld [vmem:[%s5122] sm:$0x3]
        %v5124 = vunpack.c.l.b16 %v5013
        %v5125 = vunpack.c.l.b16 %v5016
        %v5126 = vunpack.c.l.b16 %v5020
        %v5127 = vunpack.c.l.b16 %v5023
        %v5128 = vunpack.c.l.b16 %v5027
        %v5129 = vunpack.c.l.b16 %v5030
        %v5130 = vunpack.c.l.b16 %v5034
        %v5131 = vunpack.c.l.b16 %v5037
        %v5132 = vunpack.c.l.b16 %v5041
        %v5133 = vunpack.c.l.b16 %v5044
        %v5134 = vunpack.c.l.b16 %v5048
        %v5135 = vunpack.c.l.b16 %v5051
        %v5136 = vunpack.c.l.b16 %v5055
        %v5137 = vunpack.c.l.b16 %v5058
        %v5138 = vunpack.c.l.b16 %v5062
        %v5139 = vunpack.c.l.b16 %v5065
        %v5140 = vunpack.c.l.b16 %v5069
        %v5141 = vunpack.c.l.b16 %v5072
        %v5142 = vunpack.c.l.b16 %v5076
        %v5143 = vunpack.c.l.b16 %v5079
        %v5144 = vunpack.c.l.b16 %v5083
        %v5145 = vunpack.c.l.b16 %v5086
        %v5146 = vunpack.c.l.b16 %v5090
        %v5147 = vunpack.c.l.b16 %v5093
        %v5148 = vunpack.c.l.b16 %v5097
        %v5149 = vunpack.c.l.b16 %v5100
        %v5150 = vunpack.c.l.b16 %v5104
        %v5151 = vunpack.c.l.b16 %v5107
        %v5152 = vunpack.c.l.b16 %v5111
        %v5153 = vunpack.c.l.b16 %v5114
        %v5154 = vunpack.c.l.b16 %v5118
        %v5155 = vunpack.c.l.b16 %v5121
        %v5156 = vpack.c.b16 %v5125, %v5124
        %v5157 = vpack.c.b16 %v5127, %v5126
        %v5158 = vpack.c.b16 %v5129, %v5128
        %v5159 = vpack.c.b16 %v5131, %v5130
        %v5160 = vpack.c.b16 %v5133, %v5132
        %v5161 = vpack.c.b16 %v5135, %v5134
        %v5162 = vpack.c.b16 %v5137, %v5136
        %v5163 = vpack.c.b16 %v5139, %v5138
        %v5164 = vpack.c.b16 %v5141, %v5140
        %v5165 = vpack.c.b16 %v5143, %v5142
        %v5166 = vpack.c.b16 %v5145, %v5144
        %v5167 = vpack.c.b16 %v5147, %v5146
        %v5168 = vpack.c.b16 %v5149, %v5148
        %v5169 = vpack.c.b16 %v5151, %v5150
        %v5170 = vpack.c.b16 %v5153, %v5152
        %v5171 = vpack.c.b16 %v5155, %v5154
        %v5173 = vsel %vm1344, %v5156, 0
        %v5176 = vsel %vm1344, %v5157, 0
        %v5179 = vsel %vm1344, %v5158, 0
        %v5182 = vsel %vm1344, %v5159, 0
        %v5185 = vsel %vm1344, %v5160, 0
        %v5188 = vsel %vm1344, %v5161, 0
        %v5191 = vsel %vm1344, %v5162, 0
        %v5194 = vsel %vm1344, %v5163, 0
        %v5197 = vsel %vm1344, %v5164, 0
        %v5200 = vsel %vm1344, %v5165, 0
        %v5203 = vsel %vm1344, %v5166, 0
        %v5206 = vsel %vm1344, %v5167, 0
        %v5209 = vsel %vm1344, %v5168, 0
        %v5212 = vsel %vm1344, %v5169, 0
        %v5215 = vsel %vm1344, %v5170, 0
        %v5218 = vsel %vm1344, %v5171, 0
        %v5221 = vsel %vm1393, %v5123, 0
        %5223 = vmatprep.subr.bf16.mxu0 0
        %5224 = vmatpush1.bf16.msra.mxu0 %v5221
        %5225 = vmatprep.subr.bf16.mxu0 0
        %5226 = vmatpush1.bf16.msra.mxu0 0
        %5227 = vmatprep.subr.bf16.mxu0 0
        %5228 = vmatpush1.bf16.msra.mxu0 0
        %5229 = vmatprep.subr.bf16.mxu0 0
        %5230 = vmatpush1.bf16.msra.mxu0 0
        %5231 = vmatprep.subr.bf16.mxu0 0
        %5232 = vmatpush1.bf16.msra.mxu0 0
        %5233 = vmatprep.subr.bf16.mxu0 0
        %5234 = vmatpush1.bf16.msra.mxu0 0
        %5235 = vmatprep.subr.bf16.mxu0 0
        %5236 = vmatpush1.bf16.msra.mxu0 0
        %5237 = vmatprep.subr.bf16.mxu0 0
        %5238 = vmatpush1.bf16.msra.mxu0 0
        %5239 = vmatprep.subr.bf16.mxu0 0
        %5240 = vmatpush1.bf16.msra.mxu0 0
        %5241 = vmatprep.subr.bf16.mxu0 0
        %5242 = vmatpush1.bf16.msra.mxu0 0
        %5243 = vmatprep.subr.bf16.mxu0 0
        %5244 = vmatpush1.bf16.msra.mxu0 0
        %5245 = vmatprep.subr.bf16.mxu0 0
        %5246 = vmatpush1.bf16.msra.mxu0 0
        %5247 = vmatprep.subr.bf16.mxu0 0
        %5248 = vmatpush1.bf16.msra.mxu0 0
        %5249 = vmatprep.subr.bf16.mxu0 0
        %5250 = vmatpush1.bf16.msra.mxu0 0
        %5251 = vmatprep.subr.bf16.mxu0 0
        %5252 = vmatpush1.bf16.msra.mxu0 0
        %5253 = vmatprep.subr.bf16.mxu0 0
        %5254 = vmatpush1.bf16.msra.mxu0 0
        %5255 = vmatprep.mubr.bf16.mxu0 0
        %5256 = vmatmul.mubr.bf16.gmra.mrb[0].mxu0 %v5173
        %v5257 = vpop.f32.mrb[0].mxu0
        %v5258 = vadd.f32 0.0, %v5257
        %v5259 = vpop.f32.mrb[0].mxu0
        %v5260 = vpop.f32.mrb[0].mxu0
        %v5261 = vadd.f32 0.0, %v5260
        %v5262 = vpop.f32.mrb[0].mxu0
        %5263 = vmatprep.mubr.bf16.mxu0 0
        %5264 = vmatmul.mubr.bf16.gmra.mrb[0].mxu0 %v5176
        %v5265 = vpop.f32.mrb[0].mxu0
        %v5266 = vadd.f32 0.0, %v5265
        %v5267 = vpop.f32.mrb[0].mxu0
        %v5268 = vpop.f32.mrb[0].mxu0
        %v5269 = vadd.f32 0.0, %v5268
        %v5270 = vpop.f32.mrb[0].mxu0
        %5271 = vmatprep.mubr.bf16.mxu0 0
        %5272 = vmatmul.mubr.bf16.gmra.mrb[0].mxu0 %v5179
        %v5273 = vpop.f32.mrb[0].mxu0
        %v5274 = vadd.f32 0.0, %v5273
        %v5275 = vpop.f32.mrb[0].mxu0
        %v5276 = vpop.f32.mrb[0].mxu0
        %v5277 = vadd.f32 0.0, %v5276
        %v5278 = vpop.f32.mrb[0].mxu0
        %5279 = vmatprep.mubr.bf16.mxu0 0
        %5280 = vmatmul.mubr.bf16.gmra.mrb[0].mxu0 %v5182
        %v5281 = vpop.f32.mrb[0].mxu0
        %v5282 = vadd.f32 0.0, %v5281
        %v5283 = vpop.f32.mrb[0].mxu0
        %v5284 = vpop.f32.mrb[0].mxu0
        %v5285 = vadd.f32 0.0, %v5284
        %v5286 = vpop.f32.mrb[0].mxu0
        %5287 = vmatprep.mubr.bf16.mxu0 0
        %5288 = vmatmul.mubr.bf16.gmra.mrb[0].mxu0 %v5185
        %v5289 = vpop.f32.mrb[0].mxu0
        %v5290 = vadd.f32 0.0, %v5289
        %v5291 = vpop.f32.mrb[0].mxu0
        %v5292 = vpop.f32.mrb[0].mxu0
        %v5293 = vadd.f32 0.0, %v5292
        %v5294 = vpop.f32.mrb[0].mxu0
        %5295 = vmatprep.mubr.bf16.mxu0 0
        %5296 = vmatmul.mubr.bf16.gmra.mrb[0].mxu0 %v5188
        %v5297 = vpop.f32.mrb[0].mxu0
        %v5298 = vadd.f32 0.0, %v5297
        %v5299 = vpop.f32.mrb[0].mxu0
        %v5300 = vpop.f32.mrb[0].mxu0
        %v5301 = vadd.f32 0.0, %v5300
        %v5302 = vpop.f32.mrb[0].mxu0
        %5303 = vmatprep.mubr.bf16.mxu0 0
        %5304 = vmatmul.mubr.bf16.gmra.mrb[0].mxu0 %v5191
        %v5305 = vpop.f32.mrb[0].mxu0
        %v5306 = vadd.f32 0.0, %v5305
        %v5307 = vpop.f32.mrb[0].mxu0
        %v5308 = vpop.f32.mrb[0].mxu0
        %v5309 = vadd.f32 0.0, %v5308
        %v5310 = vpop.f32.mrb[0].mxu0
        %5311 = vmatprep.mubr.bf16.mxu0 0
        %5312 = vmatmul.mubr.bf16.gmra.mrb[0].mxu0 %v5194
        %v5313 = vpop.f32.mrb[0].mxu0
        %v5314 = vadd.f32 0.0, %v5313
        %v5315 = vpop.f32.mrb[0].mxu0
        %v5316 = vpop.f32.mrb[0].mxu0
        %v5317 = vadd.f32 0.0, %v5316
        %v5318 = vpop.f32.mrb[0].mxu0
        %5319 = vmatprep.mubr.bf16.mxu0 0
        %5320 = vmatmul.mubr.bf16.gmra.mrb[0].mxu0 %v5197
        %v5321 = vpop.f32.mrb[0].mxu0
        %v5322 = vadd.f32 0.0, %v5321
        %v5323 = vpop.f32.mrb[0].mxu0
        %v5324 = vpop.f32.mrb[0].mxu0
        %v5325 = vadd.f32 0.0, %v5324
        %v5326 = vpop.f32.mrb[0].mxu0
        %5327 = vmatprep.mubr.bf16.mxu0 0
        %5328 = vmatmul.mubr.bf16.gmra.mrb[0].mxu0 %v5200
        %v5329 = vpop.f32.mrb[0].mxu0
        %v5330 = vadd.f32 0.0, %v5329
        %v5331 = vpop.f32.mrb[0].mxu0
        %v5332 = vpop.f32.mrb[0].mxu0
        %v5333 = vadd.f32 0.0, %v5332
        %v5334 = vpop.f32.mrb[0].mxu0
        %5335 = vmatprep.mubr.bf16.mxu0 0
        %5336 = vmatmul.mubr.bf16.gmra.mrb[0].mxu0 %v5203
        %v5337 = vpop.f32.mrb[0].mxu0
        %v5338 = vadd.f32 0.0, %v5337
        %v5339 = vpop.f32.mrb[0].mxu0
        %v5340 = vpop.f32.mrb[0].mxu0
        %v5341 = vadd.f32 0.0, %v5340
        %v5342 = vpop.f32.mrb[0].mxu0
        %5343 = vmatprep.mubr.bf16.mxu0 0
        %5344 = vmatmul.mubr.bf16.gmra.mrb[0].mxu0 %v5206
        %v5345 = vpop.f32.mrb[0].mxu0
        %v5346 = vadd.f32 0.0, %v5345
        %v5347 = vpop.f32.mrb[0].mxu0
        %v5348 = vpop.f32.mrb[0].mxu0
        %v5349 = vadd.f32 0.0, %v5348
        %v5350 = vpop.f32.mrb[0].mxu0
        %5351 = vmatprep.mubr.bf16.mxu0 0
        %5352 = vmatmul.mubr.bf16.gmra.mrb[0].mxu0 %v5209
        %v5353 = vpop.f32.mrb[0].mxu0
        %v5354 = vadd.f32 0.0, %v5353
        %v5355 = vpop.f32.mrb[0].mxu0
        %v5356 = vpop.f32.mrb[0].mxu0
        %v5357 = vadd.f32 0.0, %v5356
        %v5358 = vpop.f32.mrb[0].mxu0
        %5359 = vmatprep.mubr.bf16.mxu0 0
        %5360 = vmatmul.mubr.bf16.gmra.mrb[0].mxu0 %v5212
        %v5361 = vpop.f32.mrb[0].mxu0
        %v5362 = vadd.f32 0.0, %v5361
        %v5363 = vpop.f32.mrb[0].mxu0
        %v5364 = vpop.f32.mrb[0].mxu0
        %v5365 = vadd.f32 0.0, %v5364
        %v5366 = vpop.f32.mrb[0].mxu0
        %5367 = vmatprep.mubr.bf16.mxu0 0
        %5368 = vmatmul.mubr.bf16.gmra.mrb[0].mxu0 %v5215
        %v5369 = vpop.f32.mrb[0].mxu0
        %v5370 = vadd.f32 0.0, %v5369
        %v5371 = vpop.f32.mrb[0].mxu0
        %v5372 = vpop.f32.mrb[0].mxu0
        %v5373 = vadd.f32 0.0, %v5372
        %v5374 = vpop.f32.mrb[0].mxu0
        %5375 = vmatprep.mubr.bf16.mxu0 0
        %5376 = vmatmul.mubr.bf16.gmra.mrb[0].mxu0 %v5218
        %v5377 = vpop.f32.mrb[0].mxu0
        %v5378 = vadd.f32 0.0, %v5377
        %v5379 = vpop.f32.mrb[0].mxu0
        %v5380 = vpop.f32.mrb[0].mxu0
        %v5381 = vadd.f32 0.0, %v5380
        %v5382 = vpop.f32.mrb[0].mxu0
        %5383 = vdwg.mxu0
        %v5384 = vadd.f32 %v4914, %v5258
        %v5385 = vadd.f32 %v4915, %v5261
        %v5386 = vadd.f32 %v4916, %v5266
        %v5387 = vadd.f32 %v4917, %v5269
        %v5388 = vadd.f32 %v4918, %v5274
        %v5389 = vadd.f32 %v4919, %v5277
        %v5390 = vadd.f32 %v4920, %v5282
        %v5391 = vadd.f32 %v4921, %v5285
        %v5392 = vadd.f32 %v4922, %v5290
        %v5393 = vadd.f32 %v4923, %v5293
        %v5394 = vadd.f32 %v4924, %v5298
        %v5395 = vadd.f32 %v4925, %v5301
        %v5396 = vadd.f32 %v4926, %v5306
        %v5397 = vadd.f32 %v4927, %v5309
        %v5398 = vadd.f32 %v4928, %v5314
        %v5399 = vadd.f32 %v4929, %v5317
        %v5400 = vadd.f32 %v4930, %v5322
        %v5401 = vadd.f32 %v4931, %v5325
        %v5402 = vadd.f32 %v4932, %v5330
        %v5403 = vadd.f32 %v4933, %v5333
        %v5404 = vadd.f32 %v4934, %v5338
        %v5405 = vadd.f32 %v4935, %v5341
        %v5406 = vadd.f32 %v4936, %v5346
        %v5407 = vadd.f32 %v4937, %v5349
        %v5408 = vadd.f32 %v4938, %v5354
        %v5409 = vadd.f32 %v4939, %v5357
        %v5410 = vadd.f32 %v4940, %v5362
        %v5411 = vadd.f32 %v4941, %v5365
        %v5412 = vadd.f32 %v4942, %v5370
        %v5413 = vadd.f32 %v4943, %v5373
        %v5414 = vadd.f32 %v4944, %v5378
        %v5415 = vadd.f32 %v4945, %v5381
        %v5416 = vpack.c.bf16 %v5385, %v5384
        %v5417 = vpack.c.bf16 %v5387, %v5386
        %v5418 = vpack.c.bf16 %v5389, %v5388
        %v5419 = vpack.c.bf16 %v5391, %v5390
        %v5420 = vpack.c.bf16 %v5393, %v5392
        %v5421 = vpack.c.bf16 %v5395, %v5394
        %v5422 = vpack.c.bf16 %v5397, %v5396
        %v5423 = vpack.c.bf16 %v5399, %v5398
        %v5424 = vpack.c.bf16 %v5401, %v5400
        %v5425 = vpack.c.bf16 %v5403, %v5402
        %v5426 = vpack.c.bf16 %v5405, %v5404
        %v5427 = vpack.c.bf16 %v5407, %v5406
        %v5428 = vpack.c.bf16 %v5409, %v5408
        %v5429 = vpack.c.bf16 %v5411, %v5410
        %v5430 = vpack.c.bf16 %v5413, %v5412
        %v5431 = vpack.c.bf16 %v5415, %v5414
        %v5448 = vunpack.c.l.b16 %v5416
        %v5449 = vunpack.c.h.b16 %v5416
        %v5450 = vunpack.c.l.b16 %v5417
        %v5451 = vunpack.c.h.b16 %v5417
        %v5452 = vunpack.c.l.b16 %v5418
        %v5453 = vunpack.c.h.b16 %v5418
        %v5454 = vunpack.c.l.b16 %v5419
        %v5455 = vunpack.c.h.b16 %v5419
        %v5456 = vunpack.c.l.b16 %v5420
        %v5457 = vunpack.c.h.b16 %v5420
        %v5458 = vunpack.c.l.b16 %v5421
        %v5459 = vunpack.c.h.b16 %v5421
        %v5460 = vunpack.c.l.b16 %v5422
        %v5461 = vunpack.c.h.b16 %v5422
        %v5462 = vunpack.c.l.b16 %v5423
        %v5463 = vunpack.c.h.b16 %v5423
        %v5464 = vunpack.c.l.b16 %v5424
        %v5465 = vunpack.c.h.b16 %v5424
        %v5466 = vunpack.c.l.b16 %v5425
        %v5467 = vunpack.c.h.b16 %v5425
        %v5468 = vunpack.c.l.b16 %v5426
        %v5469 = vunpack.c.h.b16 %v5426
        %v5470 = vunpack.c.l.b16 %v5427
        %v5471 = vunpack.c.h.b16 %v5427
        %v5472 = vunpack.c.l.b16 %v5428
        %v5473 = vunpack.c.h.b16 %v5428
        %v5474 = vunpack.c.l.b16 %v5429
        %v5475 = vunpack.c.h.b16 %v5429
        %v5476 = vunpack.c.l.b16 %v5430
        %v5477 = vunpack.c.h.b16 %v5430
        %v5478 = vunpack.c.l.b16 %v5431
        %v5479 = vunpack.c.h.b16 %v5431
        %v5480 = vpack.c.b16 %v5448, %v5448
        %v5481 = vpack.c.b16 %v5449, %v5449
        %v5482 = vpack.c.b16 %v5450, %v5450
        %v5483 = vpack.c.b16 %v5451, %v5451
        %v5484 = vpack.c.b16 %v5452, %v5452
        %v5485 = vpack.c.b16 %v5453, %v5453
        %v5486 = vpack.c.b16 %v5454, %v5454
        %v5487 = vpack.c.b16 %v5455, %v5455
        %v5488 = vpack.c.b16 %v5456, %v5456
        %v5489 = vpack.c.b16 %v5457, %v5457
        %v5490 = vpack.c.b16 %v5458, %v5458
        %v5491 = vpack.c.b16 %v5459, %v5459
        %v5492 = vpack.c.b16 %v5460, %v5460
        %v5493 = vpack.c.b16 %v5461, %v5461
        %v5494 = vpack.c.b16 %v5462, %v5462
        %v5495 = vpack.c.b16 %v5463, %v5463
        %v5496 = vpack.c.b16 %v5464, %v5464
        %v5497 = vpack.c.b16 %v5465, %v5465
        %v5498 = vpack.c.b16 %v5466, %v5466
        %v5499 = vpack.c.b16 %v5467, %v5467
        %v5500 = vpack.c.b16 %v5468, %v5468
        %v5501 = vpack.c.b16 %v5469, %v5469
        %v5502 = vpack.c.b16 %v5470, %v5470
        %v5503 = vpack.c.b16 %v5471, %v5471
        %v5504 = vpack.c.b16 %v5472, %v5472
        %v5505 = vpack.c.b16 %v5473, %v5473
        %v5506 = vpack.c.b16 %v5474, %v5474
        %v5507 = vpack.c.b16 %v5475, %v5475
        %v5508 = vpack.c.b16 %v5476, %v5476
        %v5509 = vpack.c.b16 %v5477, %v5477
        %v5510 = vpack.c.b16 %v5478, %v5478
        %v5511 = vpack.c.b16 %v5479, %v5479
        %5544 = vst.msk [vmem:[%s181] sm:$0xf] %vm183, %v5480
        %5545 = vst.msk [vmem:[%s181 + $0x4] sm:$0xf] %vm183, %v5481
        %5546 = vst.msk [vmem:[%s181 + $0x8] sm:$0xf] %vm183, %v5482
        %5547 = vst.msk [vmem:[%s181 + $0xc] sm:$0xf] %vm183, %v5483
        %5548 = vst.msk [vmem:[%s181 + $0x10] sm:$0xf] %vm183, %v5484
        %5549 = vst.msk [vmem:[%s181 + $0x14] sm:$0xf] %vm183, %v5485
        %5550 = vst.msk [vmem:[%s181 + $0x18] sm:$0xf] %vm183, %v5486
        %5551 = vst.msk [vmem:[%s181 + $0x1c] sm:$0xf] %vm183, %v5487
        %5552 = vst.msk [vmem:[%s181 + $0x20] sm:$0xf] %vm183, %v5488
        %5553 = vst.msk [vmem:[%s181 + $0x24] sm:$0xf] %vm183, %v5489
        %5554 = vst.msk [vmem:[%s181 + $0x28] sm:$0xf] %vm183, %v5490
        %5555 = vst.msk [vmem:[%s181 + $0x2c] sm:$0xf] %vm183, %v5491
        %5556 = vst.msk [vmem:[%s181 + $0x30] sm:$0xf] %vm183, %v5492
        %5557 = vst.msk [vmem:[%s181 + $0x34] sm:$0xf] %vm183, %v5493
        %5558 = vst.msk [vmem:[%s181 + $0x38] sm:$0xf] %vm183, %v5494
        %5559 = vst.msk [vmem:[%s181 + $0x3c] sm:$0xf] %vm183, %v5495
        %5560 = vst.msk [vmem:[%s181 + $0x40] sm:$0xf] %vm183, %v5496
        %5561 = vst.msk [vmem:[%s181 + $0x44] sm:$0xf] %vm183, %v5497
        %5562 = vst.msk [vmem:[%s181 + $0x48] sm:$0xf] %vm183, %v5498
        %5563 = vst.msk [vmem:[%s181 + $0x4c] sm:$0xf] %vm183, %v5499
        %5564 = vst.msk [vmem:[%s181 + $0x50] sm:$0xf] %vm183, %v5500
        %5565 = vst.msk [vmem:[%s181 + $0x54] sm:$0xf] %vm183, %v5501
        %5566 = vst.msk [vmem:[%s181 + $0x58] sm:$0xf] %vm183, %v5502
        %5567 = vst.msk [vmem:[%s181 + $0x5c] sm:$0xf] %vm183, %v5503
        %5568 = vst.msk [vmem:[%s181 + $0x60] sm:$0xf] %vm183, %v5504
        %5569 = vst.msk [vmem:[%s181 + $0x64] sm:$0xf] %vm183, %v5505
        %5570 = vst.msk [vmem:[%s181 + $0x68] sm:$0xf] %vm183, %v5506
        %5571 = vst.msk [vmem:[%s181 + $0x6c] sm:$0xf] %vm183, %v5507
        %5572 = vst.msk [vmem:[%s181 + $0x70] sm:$0xf] %vm183, %v5508
        %5573 = vst.msk [vmem:[%s181 + $0x74] sm:$0xf] %vm183, %v5509
        %5574 = vst.msk [vmem:[%s181 + $0x78] sm:$0xf] %vm183, %v5510
        %5575 = vst.msk [vmem:[%s181 + $0x7c] sm:$0xf] %vm183, %v5511
        %v5576 = vsel %vm1344, %v5384, 0.0
        %v5577 = vsel %vm1344, %v5385, 0.0
        %v5578 = vadd.f32 %v5576, %v5577
        %v5579 = vsel %vm1344, %v5386, 0.0
        %v5580 = vadd.f32 %v5578, %v5579
        %v5581 = vsel %vm1344, %v5387, 0.0
        %v5582 = vadd.f32 %v5580, %v5581
        %v5583 = vsel %vm1344, %v5388, 0.0
        %v5584 = vadd.f32 %v5582, %v5583
        %v5585 = vsel %vm1344, %v5389, 0.0
        %v5586 = vadd.f32 %v5584, %v5585
        %v5587 = vsel %vm1344, %v5390, 0.0
        %v5588 = vadd.f32 %v5586, %v5587
        %v5589 = vsel %vm1344, %v5391, 0.0
        %v5590 = vadd.f32 %v5588, %v5589
        %v5591 = vsel %vm1344, %v5392, 0.0
        %v5592 = vadd.f32 %v5590, %v5591
        %v5593 = vsel %vm1344, %v5393, 0.0
        %v5594 = vadd.f32 %v5592, %v5593
        %v5595 = vsel %vm1344, %v5394, 0.0
        %v5596 = vadd.f32 %v5594, %v5595
        %v5597 = vsel %vm1344, %v5395, 0.0
        %v5598 = vadd.f32 %v5596, %v5597
        %v5599 = vsel %vm1344, %v5396, 0.0
        %v5600 = vadd.f32 %v5598, %v5599
        %v5601 = vsel %vm1344, %v5397, 0.0
        %v5602 = vadd.f32 %v5600, %v5601
        %v5603 = vsel %vm1344, %v5398, 0.0
        %v5604 = vadd.f32 %v5602, %v5603
        %v5605 = vsel %vm1344, %v5399, 0.0
        %v5606 = vadd.f32 %v5604, %v5605
        %v5607 = vsel %vm1344, %v5400, 0.0
        %v5608 = vadd.f32 %v5606, %v5607
        %v5609 = vsel %vm1344, %v5401, 0.0
        %v5610 = vadd.f32 %v5608, %v5609
        %v5611 = vsel %vm1344, %v5402, 0.0
        %v5612 = vadd.f32 %v5610, %v5611
        %v5613 = vsel %vm1344, %v5403, 0.0
        %v5614 = vadd.f32 %v5612, %v5613
        %v5615 = vsel %vm1344, %v5404, 0.0
        %v5616 = vadd.f32 %v5614, %v5615
        %v5617 = vsel %vm1344, %v5405, 0.0
        %v5618 = vadd.f32 %v5616, %v5617
        %v5619 = vsel %vm1344, %v5406, 0.0
        %v5620 = vadd.f32 %v5618, %v5619
        %v5621 = vsel %vm1344, %v5407, 0.0
        %v5622 = vadd.f32 %v5620, %v5621
        %v5623 = vsel %vm1344, %v5408, 0.0
        %v5624 = vadd.f32 %v5622, %v5623
        %v5625 = vsel %vm1344, %v5409, 0.0
        %v5626 = vadd.f32 %v5624, %v5625
        %v5627 = vsel %vm1344, %v5410, 0.0
        %v5628 = vadd.f32 %v5626, %v5627
        %v5629 = vsel %vm1344, %v5411, 0.0
        %v5630 = vadd.f32 %v5628, %v5629
        %v5631 = vsel %vm1344, %v5412, 0.0
        %v5632 = vadd.f32 %v5630, %v5631
        %v5633 = vsel %vm1344, %v5413, 0.0
        %v5634 = vadd.f32 %v5632, %v5633
        %v5635 = vsel %vm1344, %v5414, 0.0
        %v5636 = vadd.f32 %v5634, %v5635
        %v5637 = vsel %vm1344, %v5415, 0.0
        %v5638 = vadd.f32 %v5636, %v5637
        %v5639 = vrot.slane %v5638, 4
        %v5640 = vadd.f32 %v5638, %v5639
        %v5641 = vrot.slane %v5640, 2
        %v5642 = vadd.f32 %v5640, %v5641
        %v5643 = vrot.slane %v5642, 1
        %v5644 = vadd.f32 %v5642, %v5643
        %v5645 = vmul.f32 %v5384, %v5384
        %v5646 = vmul.f32 %v5385, %v5385
        %v5647 = vmul.f32 %v5386, %v5386
        %v5648 = vmul.f32 %v5387, %v5387
        %v5649 = vmul.f32 %v5388, %v5388
        %v5650 = vmul.f32 %v5389, %v5389
        %v5651 = vmul.f32 %v5390, %v5390
        %v5652 = vmul.f32 %v5391, %v5391
        %v5653 = vmul.f32 %v5392, %v5392
        %v5654 = vmul.f32 %v5393, %v5393
        %v5655 = vmul.f32 %v5394, %v5394
        %v5656 = vmul.f32 %v5395, %v5395
        %v5657 = vmul.f32 %v5396, %v5396
        %v5658 = vmul.f32 %v5397, %v5397
        %v5659 = vmul.f32 %v5398, %v5398
        %v5660 = vmul.f32 %v5399, %v5399
        %v5661 = vmul.f32 %v5400, %v5400
        %v5662 = vmul.f32 %v5401, %v5401
        %v5663 = vmul.f32 %v5402, %v5402
        %v5664 = vmul.f32 %v5403, %v5403
        %v5665 = vmul.f32 %v5404, %v5404
        %v5666 = vmul.f32 %v5405, %v5405
        %v5667 = vmul.f32 %v5406, %v5406
        %v5668 = vmul.f32 %v5407, %v5407
        %v5669 = vmul.f32 %v5408, %v5408
        %v5670 = vmul.f32 %v5409, %v5409
        %v5671 = vmul.f32 %v5410, %v5410
        %v5672 = vmul.f32 %v5411, %v5411
        %v5673 = vmul.f32 %v5412, %v5412
        %v5674 = vmul.f32 %v5413, %v5413
        %v5675 = vmul.f32 %v5414, %v5414
        %v5676 = vmul.f32 %v5415, %v5415
        %v5677 = vsel %vm1344, %v5645, 0.0
        %v5678 = vsel %vm1344, %v5646, 0.0
        %v5679 = vadd.f32 %v5677, %v5678
        %v5680 = vsel %vm1344, %v5647, 0.0
        %v5681 = vadd.f32 %v5679, %v5680
        %v5682 = vsel %vm1344, %v5648, 0.0
        %v5683 = vadd.f32 %v5681, %v5682
        %v5684 = vsel %vm1344, %v5649, 0.0
        %v5685 = vadd.f32 %v5683, %v5684
        %v5686 = vsel %vm1344, %v5650, 0.0
        %v5687 = vadd.f32 %v5685, %v5686
        %v5688 = vsel %vm1344, %v5651, 0.0
        %v5689 = vadd.f32 %v5687, %v5688
        %v5690 = vsel %vm1344, %v5652, 0.0
        %v5691 = vadd.f32 %v5689, %v5690
        %v5692 = vsel %vm1344, %v5653, 0.0
        %v5693 = vadd.f32 %v5691, %v5692
        %v5694 = vsel %vm1344, %v5654, 0.0
        %v5695 = vadd.f32 %v5693, %v5694
        %v5696 = vsel %vm1344, %v5655, 0.0
        %v5697 = vadd.f32 %v5695, %v5696
        %v5698 = vsel %vm1344, %v5656, 0.0
        %v5699 = vadd.f32 %v5697, %v5698
        %v5700 = vsel %vm1344, %v5657, 0.0
        %v5701 = vadd.f32 %v5699, %v5700
        %v5702 = vsel %vm1344, %v5658, 0.0
        %v5703 = vadd.f32 %v5701, %v5702
        %v5704 = vsel %vm1344, %v5659, 0.0
        %v5705 = vadd.f32 %v5703, %v5704
        %v5706 = vsel %vm1344, %v5660, 0.0
        %v5707 = vadd.f32 %v5705, %v5706
        %v5708 = vsel %vm1344, %v5661, 0.0
        %v5709 = vadd.f32 %v5707, %v5708
        %v5710 = vsel %vm1344, %v5662, 0.0
        %v5711 = vadd.f32 %v5709, %v5710
        %v5712 = vsel %vm1344, %v5663, 0.0
        %v5713 = vadd.f32 %v5711, %v5712
        %v5714 = vsel %vm1344, %v5664, 0.0
        %v5715 = vadd.f32 %v5713, %v5714
        %v5716 = vsel %vm1344, %v5665, 0.0
        %v5717 = vadd.f32 %v5715, %v5716
        %v5718 = vsel %vm1344, %v5666, 0.0
        %v5719 = vadd.f32 %v5717, %v5718
        %v5720 = vsel %vm1344, %v5667, 0.0
        %v5721 = vadd.f32 %v5719, %v5720
        %v5722 = vsel %vm1344, %v5668, 0.0
        %v5723 = vadd.f32 %v5721, %v5722
        %v5724 = vsel %vm1344, %v5669, 0.0
        %v5725 = vadd.f32 %v5723, %v5724
        %v5726 = vsel %vm1344, %v5670, 0.0
        %v5727 = vadd.f32 %v5725, %v5726
        %v5728 = vsel %vm1344, %v5671, 0.0
        %v5729 = vadd.f32 %v5727, %v5728
        %v5730 = vsel %vm1344, %v5672, 0.0
        %v5731 = vadd.f32 %v5729, %v5730
        %v5732 = vsel %vm1344, %v5673, 0.0
        %v5733 = vadd.f32 %v5731, %v5732
        %v5734 = vsel %vm1344, %v5674, 0.0
        %v5735 = vadd.f32 %v5733, %v5734
        %v5736 = vsel %vm1344, %v5675, 0.0
        %v5737 = vadd.f32 %v5735, %v5736
        %v5738 = vsel %vm1344, %v5676, 0.0
        %v5739 = vadd.f32 %v5737, %v5738
        %v5740 = vrot.slane %v5739, 4
        %v5741 = vadd.f32 %v5739, %v5740
        %v5742 = vrot.slane %v5741, 2
        %v5743 = vadd.f32 %v5741, %v5742
        %v5744 = vrot.slane %v5743, 1
        %v5745 = vadd.f32 %v5743, %v5744
        %vm5746 = vcmask 1040384
        %v5747 = vsel %vm5746, %v5644, %v5745
        %vm5748 = vcmask 25600
        %5749 = vst.msk [vmem:[%s171] sm:$0x3] %vm5748, %v5747
        %p5750 = scmp.lt.s32.totalorder %s18, 1
        %s5751 = scalar_select %p5750, %s18, 1
        %s5752 = smul.addr %s5751, 32
        %s5753 = smul.addr %s5752, 4
        %s5754 = scalar_lea.vmem %s2, %s5753
        %s5755 = sand.u32 %s99, 1
        %s5756 = scalar_lea.sflag [#allocation4], %s5755
        %s5757 = sand.u32 %s99, 1
        %s5758 = smul.addr %s5757, 2
        %s5759 = scalar_lea.vmem [#allocation3], %s5758
        // Predicated region
        $region29: #{tpu_custom_call.1} parent=27 // pred_check
          %p5760 = pneg %p83
        $region30: #{tpu_custom_call.1} parent=27 // pred_check_branch
          %5762 = sbr.rel (%p5760) target = $region32
        $region31: #{tpu_custom_call.1} parent=27 // pred_region
          _
        $region32: #{tpu_custom_call.1} parent=27 // pred_fallthru
          _
        // Predicated region
        $region33: #{tpu_custom_call.1} parent=27 // pred_check
          %p5763 = pneg %p109
        $region34: #{tpu_custom_call.1} parent=27 // pred_check_branch
          %5765 = sbr.rel (%p5763) target = $region36
        $region35: #{tpu_custom_call.1} parent=27 // pred_region
          %s5767 = ssub.s32 32, 32
          %5768 = vsyncadd %s5756, %s5767
          %s5769 = smul.addr %s18, 32
          %s5770 = scalar_lea.hbm %s3, %s5769
          %s5772 = sshll.u32 %s5759, 4
          %s5773 = int_to_ptr.vmem [resolvable:$true] %s5772
          %5775 = dma.vmem_to_hbm [thread:$0]  %s5773, 32, %s5770, %s5756
        $region36: #{tpu_custom_call.1} parent=27 // pred_fallthru
          _
      $region28: #{tpu_custom_call.1} parent=5 // pred_fallthru
        _
      %p5776 = scmp.le.s32.totalorder 2, %s13
      // Predicated region
      $region37: #{tpu_custom_call.1} parent=5 // pred_check
        %p5777 = pneg %p5776
      $region38: #{tpu_custom_call.1} parent=5 // pred_check_branch
        %5779 = sbr.rel (%p5777) target = $region40
      $region39: #{tpu_custom_call.1} parent=5 // pred_region
        %s5780 = ssub.s32 %s13, 2
        // Predicated region
        $region41: #{tpu_custom_call.1} parent=39 // pred_check
          %p5781 = pneg %p89
        $region42: #{tpu_custom_call.1} parent=39 // pred_check_branch
          %5783 = sbr.rel (%p5781) target = $region44
        $region43: #{tpu_custom_call.1} parent=39 // pred_region
          %p5784 = scmp.lt.s32.totalorder %s19, 1
          %s5785 = scalar_select %p5784, %s19, 1
          %s5786 = smul.addr %s5785, 32
          %s5787 = smul.addr %s5786, 4
          %s5788 = scalar_lea.vmem %s2, %s5787
        $region44: #{tpu_custom_call.1} parent=39 // pred_fallthru
          _
        // Predicated region
        $region45: #{tpu_custom_call.1} parent=39 // pred_check
          %p5789 = pneg %p115
        $region46: #{tpu_custom_call.1} parent=39 // pred_check_branch
          %5791 = sbr.rel (%p5789) target = $region48
        $region47: #{tpu_custom_call.1} parent=39 // pred_region
          %s5792 = sand.u32 %s100, 1
          %s5793 = scalar_lea.sflag [#allocation4], %s5792
          %s5794 = sand.u32 %s100, 1
          %s5795 = smul.addr %s5794, 2
          %s5796 = scalar_lea.vmem [#allocation3], %s5795
          %5797 = dma.done %s5793, 32
        $region48: #{tpu_custom_call.1} parent=39 // pred_fallthru
          _
      $region40: #{tpu_custom_call.1} parent=5 // pred_fallthru
        _
    $region6: #{tpu_custom_call.1} parent=1 // loop_footer
      %s17 = sadd.s32 1, %s13
    $region7: #{tpu_custom_call.1} parent=1 // loop_footer_branch
      %12 = sbr.rel target = $region3
    $region8: #{tpu_custom_call.1} parent=1 // loop_exit
      _
    %5798 = vsyncpa [#allocation4], 1
    %s5799 = scalar_lea.sflag [#allocation4], 1
    %5800 = vsyncpa %s5799, 1

</llo_original>
